<compile_context>
chip_gen: v7x
topology: tpu7x:2x2x1
jax: 0.10.0
libtpu: 0.0.40
codegen_flags: <defaults>
</compile_context>

<pallas_src>
import math
from functools import partial

import jax
import jax.numpy as jnp
import numpy as np
from jax.experimental import pallas as pl
from jax.experimental.pallas import tpu as pltpu


def _attention_pool_kernel(x_ref, pos0_ref, posr_ref,
                           wq_ref, bq_ref,
                           wk_ref, bk_ref,
                           wvt_ref, bv_ref,
                           wc_ref, bc_ref,
                           seg_ref, segt_ref,
                           out_ref, *, approx_recip):
    """One batch tile: channel-major tokens (B, C, S) -> (B, Dout_padded)."""
    cd = wq_ref.dtype                                   # MXU compute dtype (f32 / bf16)
    x = x_ref[...]                                      # (B, C, S), streaming dtype
    B, C, S = x.shape
    H = seg_ref.shape[1]
    segt = segt_ref[...]                                # (H, C) head-membership^T

    xf = x.astype(jnp.float32)
    # Mean token is built from the raw tokens; pos[0] goes on the mean token,
    # pos[1:] on the spatial tokens (matches torch.cat([mean, x]) + pos).
    mean_tok = jnp.mean(xf, axis=2) + pos0_ref[...]     # (B, C) f32
    xt = (xf + posr_ref[...][None]).astype(cd)          # (B, C, S)

    # --- single-query projection (1/sqrt(hd) folded into wq/bq on the host) ---
    q0 = jnp.dot(mean_tok.astype(cd), wq_ref[...],
                 preferred_element_type=jnp.float32) + bq_ref[...]            # (B, C)

    # --- fold q into Wk per head: K is never materialized ---------------------
    # qk_w[b,h,c] = sum_{c'} q0[b,c'] * seg[c',h] * Wk[c',c]
    qs = (q0[:, None, :] * segt[None]).reshape(B * H, C)                      # (B*H, C)
    qk_w = jnp.dot(qs.astype(cd), wk_ref[...],
                   preferred_element_type=jnp.float32).reshape(B, H, C)       # (B, H, C)
    sb = jnp.dot(q0 * bk_ref[...], seg_ref[...],
                 preferred_element_type=jnp.float32)                          # (B, H), q.bk term

    # --- scores for the mean token and the S spatial tokens -------------------
    s_m = jnp.sum(mean_tok[:, None, :] * qk_w, axis=2) + sb                   # (B, H)
    s_x = jnp.einsum('bhc,bcs->bhs', qk_w.astype(cd), xt,
                     preferred_element_type=jnp.float32) + sb[:, :, None]     # (B, H, S)

    # --- softmax over the L = S + 1 tokens (all f32) --------------------------
    m = jnp.maximum(jnp.max(s_x, axis=2), s_m)                                # (B, H)
    p_m = jnp.exp(s_m - m)
    p_x = jnp.exp(s_x - m[:, :, None])
    denom = p_m + jnp.sum(p_x, axis=2)                                        # (B, H)
    inv = pl.reciprocal(denom, approx=approx_recip)
    a_m = p_m * inv                                                           # (B, H)
    a_x = p_x * inv[:, :, None]                                               # (B, H, S)
    a_tot = denom * inv                                                       # (B, H) (== 1 up to recip error)

    # --- attn @ V without materializing V: contract attention with tokens -----
    # A[b,h,c] = a_m[b,h]*mean_tok[b,c] + sum_s a_x[b,h,s]*xt[b,c,s]
    A = a_m[:, :, None] * mean_tok[:, None, :] + jnp.einsum(
        'bhs,bcs->bhc', a_x.astype(cd), xt, preferred_element_type=jnp.float32)
    Mh = jnp.dot(A.reshape(B * H, C).astype(cd), wvt_ref[...],
                 preferred_element_type=jnp.float32).reshape(B, H, C)         # (B, H, C')
    ctx = (jnp.sum(Mh * segt[None], axis=1)
           + bv_ref[...] * jnp.dot(a_tot, segt,
                                   preferred_element_type=jnp.float32))       # (B, C)

    # --- output projection, lane-dense (B, Dout_padded) store -----------------
    out = jnp.dot(ctx.astype(cd), wc_ref[...],
                  preferred_element_type=jnp.float32) + bc_ref[...]
    out_ref[...] = out.astype(out_ref.dtype)


@partial(jax.jit, static_argnames=("num_heads", "compute_dtype", "batch_tile"))
def attention_pool2d(x_nchw, params, *, num_heads,
                     compute_dtype=jnp.bfloat16, batch_tile=8):
    N, C, Hsp, Wsp = x_nchw.shape
    S = Hsp * Wsp
    Dout = params["wc"].shape[0]
    assert C % num_heads == 0
    assert batch_tile % 8 == 0
    hd = C // num_heads
    scale = 1.0 / math.sqrt(hd)
    cd = jnp.dtype(compute_dtype)
    approx_recip = bool(cd != jnp.dtype(jnp.float32))

    # NCHW -> (N, C, S) is a pure reshape (no HBM transpose pass).  The
    # activation is streamed in the compute dtype; in a real model the producer
    # emits bf16 directly, so the cast fuses away.
    x_cs = x_nchw.reshape(N, C, S).astype(compute_dtype)
    bt = batch_tile
    n_pad = (-N) % bt
    if n_pad:
        x_cs = jnp.pad(x_cs, ((0, n_pad), (0, 0), (0, 0)))
    Np = N + n_pad

    # Lane-dense output: pad Dout to a multiple of 128 (avoids masked stores).
    Dp = max(128, ((Dout + 127) // 128) * 128)

    # Weight prep (PyTorch Linear stores (out, in)).
    wq = (params["wq"] * scale).T.astype(compute_dtype)             # (C, C)
    bq = (params["bq"] * scale).reshape(1, C).astype(jnp.float32)
    wk = params["wk"].astype(compute_dtype)                         # (C', C): contracted over rows
    bk = params["bk"].reshape(1, C).astype(jnp.float32)
    wvt = params["wv"].T.astype(compute_dtype)                      # (C, C')
    bv = params["bv"].reshape(1, C).astype(jnp.float32)
    wc = jnp.pad(params["wc"].T, ((0, 0), (0, Dp - Dout))).astype(compute_dtype)   # (C, Dp)
    bc = jnp.pad(params["bc"], (0, Dp - Dout)).reshape(1, Dp).astype(jnp.float32)
    pos0 = params["pos"][0:1].astype(jnp.float32)                   # (1, C)
    posr = params["pos"][1:].T.astype(jnp.float32)                  # (C, S) channel-major

    # Head-membership matrix: seg[c, h] = 1 iff channel c belongs to head h.
    seg_np = (np.arange(C)[:, None] // hd == np.arange(num_heads)[None, :])
    seg = jnp.asarray(seg_np, jnp.float32)                          # (C, H)
    segt = jnp.asarray(seg_np.T, jnp.float32)                       # (H, C)

    # Generation-aware scoped-VMEM budget (v5e/v6e: 128 MiB, v7x: 64 MiB/TC).
    try:
        vmem_cap = int(pltpu.get_tpu_info().vmem_capacity_bytes)
    except Exception:
        vmem_cap = 64 << 20
    wbytes = (wq.size + wk.size + wvt.size + wc.size) * cd.itemsize
    cbytes = (pos0.size + posr.size + seg.size + segt.size
              + bq.size + bk.size + bv.size + bc.size) * 4
    x_tile = bt * C * S * cd.itemsize
    out_tile = bt * Dp * 4
    interm = (bt * num_heads * C * 4 * 6          # qs/qk_w/A/Mh and friends
              + bt * C * S * (4 + cd.itemsize)    # xf / xt
              + bt * (C + Dp) * 4 * 4)            # per-image vectors
    budget = 2 * (wbytes + cbytes) + 2 * x_tile + 2 * out_tile + interm + (8 << 20)
    vmem_limit = int(min(max(budget, 32 << 20), int(0.85 * vmem_cap)))

    const2 = lambda b: (0, 0)
    kernel = partial(_attention_pool_kernel, approx_recip=approx_recip)
    out = pl.pallas_call(
        kernel,
        out_shape=jax.ShapeDtypeStruct((Np, Dp), jnp.float32),
        grid=(Np // bt,),
        in_specs=[
            pl.BlockSpec((bt, C, S), lambda b: (b, 0, 0)),   # x tokens (channel-major)
            pl.BlockSpec((1, C), const2),                    # pos[0]
            pl.BlockSpec((C, S), const2),                    # pos[1:] (channel-major)
            pl.BlockSpec((C, C), const2),                    # wq^T (scale folded)
            pl.BlockSpec((1, C), const2),                    # bq (scale folded)
            pl.BlockSpec((C, C), const2),                    # wk (out,in)
            pl.BlockSpec((1, C), const2),                    # bk
            pl.BlockSpec((C, C), const2),                    # wv^T
            pl.BlockSpec((1, C), const2),                    # bv
            pl.BlockSpec((C, Dp), const2),                   # wc^T (lane padded)
            pl.BlockSpec((1, Dp), const2),                   # bc (lane padded)
            pl.BlockSpec((C, num_heads), const2),            # seg
            pl.BlockSpec((num_heads, C), const2),            # seg^T
        ],
        out_specs=pl.BlockSpec((bt, Dp), lambda b: (b, 0)),
        compiler_params=pltpu.CompilerParams(
            dimension_semantics=("parallel",),
            vmem_limit_bytes=vmem_limit),
    )(x_cs, pos0, posr, wq, bq, wk, bk, wvt, bv, wc, bc, seg, segt)

    # (Np, Dp) -> (N, Dout, 1, 1), matching t.unsqueeze(-1).unsqueeze(-1)
    return out[:N, :Dout].reshape(N, Dout, 1, 1)


def attention_pool2d_reference(x_nchw, params, num_heads):
    """Pure-JAX reference mirroring F.multi_head_attention_forward semantics."""
    N, C, H, W = x_nchw.shape
    S = H * W
    L = S + 1
    hd = C // num_heads
    scale = 1.0 / math.sqrt(hd)
    Dout = params["wc"].shape[0]

    xs = jnp.transpose(x_nchw.reshape(N, C, S), (0, 2, 1))            # (N, S, C)
    tok = jnp.concatenate([xs.mean(axis=1, keepdims=True), xs], axis=1)
    tok = tok + params["pos"][None]

    q = (tok @ params["wq"].T + params["bq"]) * scale
    k = tok @ params["wk"].T + params["bk"]
    v = tok @ params["wv"].T + params["bv"]
    qh = q.reshape(N, L, num_heads, hd)
    kh = k.reshape(N, L, num_heads, hd)
    vh = v.reshape(N, L, num_heads, hd)
    s = jnp.einsum("blhd,bmhd->bhlm", qh, kh)
    attn = jax.nn.softmax(s, axis=-1)
    ctx = jnp.einsum("bhlm,bmhd->blhd", attn, vh).reshape(N, L, C)
    out = ctx @ params["wc"].T + params["bc"]
    return out[:, 0].reshape(N, Dout, 1, 1)


if __name__ == "__main__":
    # Small shapes consistent with the module: dims=(4,4), embed_dim=32,
    # num_heads=4, output_dim=16, batch=2.
    N, C, Hsp, Wsp = 2, 32, 4, 4
    num_heads = 4
    output_dim = 16
    S = Hsp * Wsp

    key = jax.random.PRNGKey(0)
    keys = jax.random.split(key, 10)

    params = {
        # nn.Parameter(torch.randn(H*W+1, C) / C**0.5)
        "pos": jax.random.normal(keys[0], (S + 1, C), jnp.float32) / math.sqrt(C),
        # nn.Linear weights are (out, in)
        "wq": jax.random.normal(keys[1], (C, C), jnp.float32) * 0.05,
        "bq": jax.random.normal(keys[2], (C,), jnp.float32) * 0.05,
        "wk": jax.random.normal(keys[3], (C, C), jnp.float32) * 0.05,
        "bk": jax.random.normal(keys[4], (C,), jnp.float32) * 0.05,
        "wv": jax.random.normal(keys[5], (C, C), jnp.float32) * 0.05,
        "bv": jax.random.normal(keys[6], (C,), jnp.float32) * 0.05,
        "wc": jax.random.normal(keys[7], (output_dim, C), jnp.float32) * 0.05,
        "bc": jax.random.normal(keys[8], (output_dim,), jnp.float32) * 0.05,
    }
    x = jax.random.normal(keys[9], (N, C, Hsp, Wsp), jnp.float32)

    ref = jax.block_until_ready(attention_pool2d_reference(x, params, num_heads))

    # f32 path (tight tolerance; exact reciprocal).
    out_f32 = jax.block_until_ready(
        attention_pool2d(x, params, num_heads=num_heads,
                         compute_dtype=jnp.float32))
    assert out_f32.shape == (N, output_dim, 1, 1), out_f32.shape
    np.testing.assert_allclose(np.asarray(out_f32), np.asarray(ref),
                               rtol=1e-5, atol=1e-5)

    # Default production path: bf16 streaming + bf16 MXU dots, f32 softmax/accum.
    out_bf16 = jax.block_until_ready(
        attention_pool2d(x, params, num_heads=num_heads))
    np.testing.assert_allclose(np.asarray(out_bf16), np.asarray(ref),
                               rtol=2e-2, atol=2e-2)

    print("KERNEL_OK")
</pallas_src>

<mosaic_0001>
module attributes {stable_mosaic.version = 11 : i64} {
  func.func @_attention_pool_kernel(%arg0: i32, %arg1: memref<8x32x16xf32, #tpu.memory_space<vmem>>, %arg2: memref<1x32xf32, #tpu.memory_space<vmem>>, %arg3: memref<32x16xf32, #tpu.memory_space<vmem>>, %arg4: memref<32x32xf32, #tpu.memory_space<vmem>>, %arg5: memref<1x32xf32, #tpu.memory_space<vmem>>, %arg6: memref<32x32xf32, #tpu.memory_space<vmem>>, %arg7: memref<1x32xf32, #tpu.memory_space<vmem>>, %arg8: memref<32x32xf32, #tpu.memory_space<vmem>>, %arg9: memref<1x32xf32, #tpu.memory_space<vmem>>, %arg10: memref<32x128xf32, #tpu.memory_space<vmem>>, %arg11: memref<1x128xf32, #tpu.memory_space<vmem>>, %arg12: memref<32x4xf32, #tpu.memory_space<vmem>>, %arg13: memref<4x32xf32, #tpu.memory_space<vmem>>, %arg14: memref<8x128xf32, #tpu.memory_space<vmem>>) attributes {dimension_semantics = [#tpu.dimension_semantics<parallel>], iteration_bounds = array<i64: 1>, scalar_prefetch = 0 : i64, scratch_operands = 0 : i64, tpu.core_type = #tpu.core_type<tc>, window_params = [{transform_indices = @transform_0, window_bounds = array<i64: 8, 32, 16>}, {pipeline_mode = #tpu.pipeline_mode<synchronous>, transform_indices = @transform_1, window_bounds = array<i64: 1, 32>}, {pipeline_mode = #tpu.pipeline_mode<synchronous>, transform_indices = @transform_2, window_bounds = array<i64: 32, 16>}, {pipeline_mode = #tpu.pipeline_mode<synchronous>, transform_indices = @transform_3, window_bounds = array<i64: 32, 32>}, {pipeline_mode = #tpu.pipeline_mode<synchronous>, transform_indices = @transform_4, window_bounds = array<i64: 1, 32>}, {pipeline_mode = #tpu.pipeline_mode<synchronous>, transform_indices = @transform_5, window_bounds = array<i64: 32, 32>}, {pipeline_mode = #tpu.pipeline_mode<synchronous>, transform_indices = @transform_6, window_bounds = array<i64: 1, 32>}, {pipeline_mode = #tpu.pipeline_mode<synchronous>, transform_indices = @transform_7, window_bounds = array<i64: 32, 32>}, {pipeline_mode = #tpu.pipeline_mode<synchronous>, transform_indices = @transform_8, window_bounds = array<i64: 1, 32>}, {pipeline_mode = #tpu.pipeline_mode<synchronous>, transform_indices = @transform_9, window_bounds = array<i64: 32, 128>}, {pipeline_mode = #tpu.pipeline_mode<synchronous>, transform_indices = @transform_10, window_bounds = array<i64: 1, 128>}, {pipeline_mode = #tpu.pipeline_mode<synchronous>, transform_indices = @transform_11, window_bounds = array<i64: 32, 4>}, {pipeline_mode = #tpu.pipeline_mode<synchronous>, transform_indices = @transform_12, window_bounds = array<i64: 4, 32>}, {transform_indices = @transform_13, window_bounds = array<i64: 8, 128>}]} {
    %c0 = arith.constant 0 : index
    %c0_0 = arith.constant 0 : index
    %c0_1 = arith.constant 0 : index
    %0 = vector.load %arg1[%c0, %c0_0, %c0_1] : memref<8x32x16xf32, #tpu.memory_space<vmem>>, vector<8x32x16xf32>
    %c0_2 = arith.constant 0 : index
    %c0_3 = arith.constant 0 : index
    %1 = vector.load %arg13[%c0_2, %c0_3] : memref<4x32xf32, #tpu.memory_space<vmem>>, vector<4x32xf32>
    %cst = arith.constant dense<0.000000e+00> : vector<8x32xf32>
    %2 = vector.multi_reduction <add>, %0, %cst [2] : vector<8x32x16xf32> to vector<8x32xf32>
    %cst_4 = arith.constant 1.600000e+01 : f32
    %3 = vector.broadcast %cst_4 : f32 to vector<8x32xf32>
    %4 = arith.divf %2, %3 : vector<8x32xf32>
    %c0_5 = arith.constant 0 : index
    %c0_6 = arith.constant 0 : index
    %5 = vector.load %arg2[%c0_5, %c0_6] : memref<1x32xf32, #tpu.memory_space<vmem>>, vector<1x32xf32>
    %6 = vector.broadcast %5 : vector<1x32xf32> to vector<8x32xf32>
    %7 = arith.addf %4, %6 : vector<8x32xf32>
    %c0_7 = arith.constant 0 : index
    %c0_8 = arith.constant 0 : index
    %8 = vector.load %arg3[%c0_7, %c0_8] : memref<32x16xf32, #tpu.memory_space<vmem>>, vector<32x16xf32>
    %9 = vector.shape_cast %8 : vector<32x16xf32> to vector<1x32x16xf32>
    %10 = vector.broadcast %9 : vector<1x32x16xf32> to vector<8x32x16xf32>
    %11 = arith.addf %0, %10 : vector<8x32x16xf32>
    %c0_9 = arith.constant 0 : index
    %c0_10 = arith.constant 0 : index
    %12 = vector.load %arg4[%c0_9, %c0_10] : memref<32x32xf32, #tpu.memory_space<vmem>>, vector<32x32xf32>
    %cst_11 = arith.constant dense<0.000000e+00> : vector<8x32xf32>
    %13 = tpu.matmul %7, %12, %cst_11 {dimension_numbers = #tpu.dot_dimension_numbers<[1], [0], [0], [1], [0, 0, 1, 1], [], []>} : vector<8x32xf32>, vector<32x32xf32>, vector<8x32xf32> -> vector<8x32xf32>
    %c0_12 = arith.constant 0 : index
    %c0_13 = arith.constant 0 : index
    %14 = vector.load %arg5[%c0_12, %c0_13] : memref<1x32xf32, #tpu.memory_space<vmem>>, vector<1x32xf32>
    %15 = vector.broadcast %14 : vector<1x32xf32> to vector<8x32xf32>
    %16 = arith.addf %13, %15 : vector<8x32xf32>
    %17 = vector.shape_cast %16 : vector<8x32xf32> to vector<8x1x32xf32>
    %18 = vector.shape_cast %1 : vector<4x32xf32> to vector<1x4x32xf32>
    %19 = vector.broadcast %17 : vector<8x1x32xf32> to vector<8x4x32xf32>
    %20 = vector.broadcast %18 : vector<1x4x32xf32> to vector<8x4x32xf32>
    %21 = arith.mulf %19, %20 : vector<8x4x32xf32>
    %22 = vector.shape_cast %21 : vector<8x4x32xf32> to vector<32x32xf32>
    %c0_14 = arith.constant 0 : index
    %c0_15 = arith.constant 0 : index
    %23 = vector.load %arg6[%c0_14, %c0_15] : memref<32x32xf32, #tpu.memory_space<vmem>>, vector<32x32xf32>
    %cst_16 = arith.constant dense<0.000000e+00> : vector<32x32xf32>
    %24 = tpu.matmul %22, %23, %cst_16 {dimension_numbers = #tpu.dot_dimension_numbers<[1], [0], [0], [1], [0, 0, 1, 1], [], []>} : vector<32x32xf32>, vector<32x32xf32>, vector<32x32xf32> -> vector<32x32xf32>
    %25 = vector.shape_cast %24 : vector<32x32xf32> to vector<8x4x32xf32>
    %c0_17 = arith.constant 0 : index
    %c0_18 = arith.constant 0 : index
    %26 = vector.load %arg7[%c0_17, %c0_18] : memref<1x32xf32, #tpu.memory_space<vmem>>, vector<1x32xf32>
    %27 = vector.broadcast %26 : vector<1x32xf32> to vector<8x32xf32>
    %28 = arith.mulf %16, %27 : vector<8x32xf32>
    %c0_19 = arith.constant 0 : index
    %c0_20 = arith.constant 0 : index
    %29 = vector.load %arg12[%c0_19, %c0_20] : memref<32x4xf32, #tpu.memory_space<vmem>>, vector<32x4xf32>
    %cst_21 = arith.constant dense<0.000000e+00> : vector<8x4xf32>
    %30 = tpu.matmul %28, %29, %cst_21 {dimension_numbers = #tpu.dot_dimension_numbers<[1], [0], [0], [1], [0, 0, 1, 1], [], []>} : vector<8x32xf32>, vector<32x4xf32>, vector<8x4xf32> -> vector<8x4xf32>
    %31 = vector.shape_cast %7 : vector<8x32xf32> to vector<8x1x32xf32>
    %32 = vector.broadcast %31 : vector<8x1x32xf32> to vector<8x4x32xf32>
    %33 = arith.mulf %32, %25 : vector<8x4x32xf32>
    %cst_22 = arith.constant dense<0.000000e+00> : vector<8x4xf32>
    %34 = vector.multi_reduction <add>, %33, %cst_22 [2] : vector<8x4x32xf32> to vector<8x4xf32>
    %35 = arith.addf %34, %30 : vector<8x4xf32>
    "tpu.trace_start"() <{level = 10 : i32, message = "bhc,bcs->bhs"}> : () -> ()
    %cst_23 = arith.constant dense<0.000000e+00> : vector<8x4x16xf32>
    %36 = tpu.matmul %25, %11, %cst_23 {dimension_numbers = #tpu.dot_dimension_numbers<[2], [1], [1], [2], [0, 0, 0, 1, 1, 2], [0], [0]>} : vector<8x4x32xf32>, vector<8x32x16xf32>, vector<8x4x16xf32> -> vector<8x4x16xf32>
    "tpu.trace_stop"() : () -> ()
    %37 = vector.shape_cast %30 : vector<8x4xf32> to vector<8x4x1xf32>
    %38 = vector.broadcast %37 : vector<8x4x1xf32> to vector<8x4x16xf32>
    %39 = arith.addf %36, %38 : vector<8x4x16xf32>
    %cst_24 = arith.constant dense<0xFF800000> : vector<8x4xf32>
    %40 = vector.multi_reduction <maximumf>, %39, %cst_24 [2] : vector<8x4x16xf32> to vector<8x4xf32>
    %41 = arith.maximumf %40, %35 : vector<8x4xf32>
    %42 = arith.subf %35, %41 : vector<8x4xf32>
    %43 = math.exp %42 : vector<8x4xf32>
    %44 = vector.shape_cast %41 : vector<8x4xf32> to vector<8x4x1xf32>
    %45 = vector.broadcast %44 : vector<8x4x1xf32> to vector<8x4x16xf32>
    %46 = arith.subf %39, %45 : vector<8x4x16xf32>
    %47 = math.exp %46 : vector<8x4x16xf32>
    %cst_25 = arith.constant dense<0.000000e+00> : vector<8x4xf32>
    %48 = vector.multi_reduction <add>, %47, %cst_25 [2] : vector<8x4x16xf32> to vector<8x4xf32>
    %49 = arith.addf %43, %48 : vector<8x4xf32>
    %50 = tpu.reciprocal %49 : vector<8x4xf32> -> vector<8x4xf32>
    %51 = arith.mulf %43, %50 : vector<8x4xf32>
    %52 = vector.shape_cast %50 : vector<8x4xf32> to vector<8x4x1xf32>
    %53 = vector.broadcast %52 : vector<8x4x1xf32> to vector<8x4x16xf32>
    %54 = arith.mulf %47, %53 : vector<8x4x16xf32>
    %55 = arith.mulf %49, %50 : vector<8x4xf32>
    %56 = vector.shape_cast %51 : vector<8x4xf32> to vector<8x4x1xf32>
    %57 = vector.shape_cast %7 : vector<8x32xf32> to vector<8x1x32xf32>
    %58 = vector.broadcast %56 : vector<8x4x1xf32> to vector<8x4x32xf32>
    %59 = vector.broadcast %57 : vector<8x1x32xf32> to vector<8x4x32xf32>
    %60 = arith.mulf %58, %59 : vector<8x4x32xf32>
    "tpu.trace_start"() <{level = 10 : i32, message = "bhs,bcs->bhc"}> : () -> ()
    %cst_26 = arith.constant dense<0.000000e+00> : vector<8x4x32xf32>
    %61 = tpu.matmul %54, %11, %cst_26 {dimension_numbers = #tpu.dot_dimension_numbers<[2], [2], [1], [1], [0, 0, 0, 1, 1, 1], [0], [0]>} : vector<8x4x16xf32>, vector<8x32x16xf32>, vector<8x4x32xf32> -> vector<8x4x32xf32>
    "tpu.trace_stop"() : () -> ()
    %62 = arith.addf %60, %61 : vector<8x4x32xf32>
    %63 = vector.shape_cast %62 : vector<8x4x32xf32> to vector<32x32xf32>
    %c0_27 = arith.constant 0 : index
    %c0_28 = arith.constant 0 : index
    %64 = vector.load %arg8[%c0_27, %c0_28] : memref<32x32xf32, #tpu.memory_space<vmem>>, vector<32x32xf32>
    %cst_29 = arith.constant dense<0.000000e+00> : vector<32x32xf32>
    %65 = tpu.matmul %63, %64, %cst_29 {dimension_numbers = #tpu.dot_dimension_numbers<[1], [0], [0], [1], [0, 0, 1, 1], [], []>} : vector<32x32xf32>, vector<32x32xf32>, vector<32x32xf32> -> vector<32x32xf32>
    %66 = vector.shape_cast %65 : vector<32x32xf32> to vector<8x4x32xf32>
    %67 = vector.shape_cast %1 : vector<4x32xf32> to vector<1x4x32xf32>
    %68 = vector.broadcast %67 : vector<1x4x32xf32> to vector<8x4x32xf32>
    %69 = arith.mulf %66, %68 : vector<8x4x32xf32>
    %cst_30 = arith.constant dense<0.000000e+00> : vector<8x32xf32>
    %70 = vector.multi_reduction <add>, %69, %cst_30 [1] : vector<8x4x32xf32> to vector<8x32xf32>
    %c0_31 = arith.constant 0 : index
    %c0_32 = arith.constant 0 : index
    %71 = vector.load %arg9[%c0_31, %c0_32] : memref<1x32xf32, #tpu.memory_space<vmem>>, vector<1x32xf32>
    %cst_33 = arith.constant dense<0.000000e+00> : vector<8x32xf32>
    %72 = tpu.matmul %55, %1, %cst_33 {dimension_numbers = #tpu.dot_dimension_numbers<[1], [0], [0], [1], [0, 0, 1, 1], [], []>} : vector<8x4xf32>, vector<4x32xf32>, vector<8x32xf32> -> vector<8x32xf32>
    %73 = vector.broadcast %71 : vector<1x32xf32> to vector<8x32xf32>
    %74 = arith.mulf %73, %72 : vector<8x32xf32>
    %75 = arith.addf %70, %74 : vector<8x32xf32>
    %c0_34 = arith.constant 0 : index
    %c0_35 = arith.constant 0 : index
    %76 = vector.load %arg10[%c0_34, %c0_35] : memref<32x128xf32, #tpu.memory_space<vmem>>, vector<32x128xf32>
    %cst_36 = arith.constant dense<0.000000e+00> : vector<8x128xf32>
    %77 = tpu.matmul %75, %76, %cst_36 {dimension_numbers = #tpu.dot_dimension_numbers<[1], [0], [0], [1], [0, 0, 1, 1], [], []>} : vector<8x32xf32>, vector<32x128xf32>, vector<8x128xf32> -> vector<8x128xf32>
    %c0_37 = arith.constant 0 : index
    %c0_38 = arith.constant 0 : index
    %78 = vector.load %arg11[%c0_37, %c0_38] : memref<1x128xf32, #tpu.memory_space<vmem>>, vector<1x128xf32>
    %79 = vector.broadcast %78 : vector<1x128xf32> to vector<8x128xf32>
    %80 = arith.addf %77, %79 : vector<8x128xf32>
    %c0_39 = arith.constant 0 : index
    %c0_40 = arith.constant 0 : index
    %81 = vector.load %arg14[%c0_39, %c0_40] : memref<8x128xf32, #tpu.memory_space<vmem>>, vector<8x128xf32>
    tpu.vector_store %arg14[%c0_39, %c0_40], %80 {strides = array<i32>} : memref<8x128xf32, #tpu.memory_space<vmem>>, vector<8x128xf32>,
    return
  }
  func.func @transform_0(%arg0: i32) -> (i32, i32, i32) {
    %c0_i32 = arith.constant 0 : i32
    %c0_i32_0 = arith.constant 0 : i32
    %c0_i32_1 = arith.constant 0 : i32
    return %arg0, %c0_i32, %c0_i32_0 : i32, i32, i32
  }
  func.func @transform_1(%arg0: i32) -> (i32, i32) {
    %c0_i32 = arith.constant 0 : i32
    %c0_i32_0 = arith.constant 0 : i32
    %c0_i32_1 = arith.constant 0 : i32
    return %c0_i32, %c0_i32_0 : i32, i32
  }
  func.func @transform_2(%arg0: i32) -> (i32, i32) {
    %c0_i32 = arith.constant 0 : i32
    %c0_i32_0 = arith.constant 0 : i32
    %c0_i32_1 = arith.constant 0 : i32
    return %c0_i32, %c0_i32_0 : i32, i32
  }
  func.func @transform_3(%arg0: i32) -> (i32, i32) {
    %c0_i32 = arith.constant 0 : i32
    %c0_i32_0 = arith.constant 0 : i32
    %c0_i32_1 = arith.constant 0 : i32
    return %c0_i32, %c0_i32_0 : i32, i32
  }
  func.func @transform_4(%arg0: i32) -> (i32, i32) {
    %c0_i32 = arith.constant 0 : i32
    %c0_i32_0 = arith.constant 0 : i32
    %c0_i32_1 = arith.constant 0 : i32
    return %c0_i32, %c0_i32_0 : i32, i32
  }
  func.func @transform_5(%arg0: i32) -> (i32, i32) {
    %c0_i32 = arith.constant 0 : i32
    %c0_i32_0 = arith.constant 0 : i32
    %c0_i32_1 = arith.constant 0 : i32
    return %c0_i32, %c0_i32_0 : i32, i32
  }
  func.func @transform_6(%arg0: i32) -> (i32, i32) {
    %c0_i32 = arith.constant 0 : i32
    %c0_i32_0 = arith.constant 0 : i32
    %c0_i32_1 = arith.constant 0 : i32
    return %c0_i32, %c0_i32_0 : i32, i32
  }
  func.func @transform_7(%arg0: i32) -> (i32, i32) {
    %c0_i32 = arith.constant 0 : i32
    %c0_i32_0 = arith.constant 0 : i32
    %c0_i32_1 = arith.constant 0 : i32
    return %c0_i32, %c0_i32_0 : i32, i32
  }
  func.func @transform_8(%arg0: i32) -> (i32, i32) {
    %c0_i32 = arith.constant 0 : i32
    %c0_i32_0 = arith.constant 0 : i32
    %c0_i32_1 = arith.constant 0 : i32
    return %c0_i32, %c0_i32_0 : i32, i32
  }
  func.func @transform_9(%arg0: i32) -> (i32, i32) {
    %c0_i32 = arith.constant 0 : i32
    %c0_i32_0 = arith.constant 0 : i32
    %c0_i32_1 = arith.constant 0 : i32
    return %c0_i32, %c0_i32_0 : i32, i32
  }
  func.func @transform_10(%arg0: i32) -> (i32, i32) {
    %c0_i32 = arith.constant 0 : i32
    %c0_i32_0 = arith.constant 0 : i32
    %c0_i32_1 = arith.constant 0 : i32
    return %c0_i32, %c0_i32_0 : i32, i32
  }
  func.func @transform_11(%arg0: i32) -> (i32, i32) {
    %c0_i32 = arith.constant 0 : i32
    %c0_i32_0 = arith.constant 0 : i32
    %c0_i32_1 = arith.constant 0 : i32
    return %c0_i32, %c0_i32_0 : i32, i32
  }
  func.func @transform_12(%arg0: i32) -> (i32, i32) {
    %c0_i32 = arith.constant 0 : i32
    %c0_i32_0 = arith.constant 0 : i32
    %c0_i32_1 = arith.constant 0 : i32
    return %c0_i32, %c0_i32_0 : i32, i32
  }
  func.func @transform_13(%arg0: i32) -> (i32, i32) {
    %c0_i32 = arith.constant 0 : i32
    %c0_i32_0 = arith.constant 0 : i32
    return %arg0, %c0_i32 : i32, i32
  }
}

</mosaic_0001>

<llo_original>
// kernel: attention_pool2d.1
$region0: #{attention_pool2d.1}
  #allocation0 [shape = 'u32[]', space=smem, size = 0x4, offset = 0x4, fixed_abs, tag = 'smem constant byte address 0x4 - core index']
  #allocation1 [shape = 'u32[144,128]{1,0:T(1,128)}', space=vmem, size = 0x12000, scoped, tag = 'internal scratch']
  %s0 = inlined_call_operand.vmem [shape: f32[8,32,16], index: 0, kind: input, shape index: {}]
  %s1 = inlined_call_operand.vmem [shape: f32[1,32], index: 1, kind: input, shape index: {}]
  %s2 = inlined_call_operand.vmem [shape: f32[32,16], index: 2, kind: input, shape index: {}]
  %s3 = inlined_call_operand.vmem [shape: f32[32,32], index: 3, kind: input, shape index: {}]
  %s4 = inlined_call_operand.vmem [shape: f32[1,32], index: 4, kind: input, shape index: {}]
  %s5 = inlined_call_operand.vmem [shape: f32[32,32], index: 5, kind: input, shape index: {}]
  %s6 = inlined_call_operand.vmem [shape: f32[1,32], index: 6, kind: input, shape index: {}]
  %s7 = inlined_call_operand.vmem [shape: f32[32,32], index: 7, kind: input, shape index: {}]
  %s8 = inlined_call_operand.vmem [shape: f32[1,32], index: 8, kind: input, shape index: {}]
  %s9 = inlined_call_operand.vmem [shape: f32[32,128], index: 9, kind: input, shape index: {}]
  %s10 = inlined_call_operand.vmem [shape: f32[1,128], index: 10, kind: input, shape index: {}]
  %s11 = inlined_call_operand.vmem [shape: f32[32,4], index: 11, kind: input, shape index: {}]
  %s12 = inlined_call_operand.vmem [shape: f32[4,32], index: 12, kind: input, shape index: {}]
  %s13 = inlined_call_operand.vmem [shape: f32[8,128], index: 13, kind: output, shape index: {}]
  %s14 = sld [smem:[#allocation0]]
  $region62: #{attention_pool2d.1} parent=0
    _
  %s16 = ssub.s32 1, %s14
  %s17 = scalar_select 0, %s16, %s14
  // Predicated region
  $region2: #{attention_pool2d.1} parent=0 // pred_check
    _
  $region3: #{attention_pool2d.1} parent=0 // pred_check_branch
    %19 = sbr.rel (0) target = $region5
  $region4: #{attention_pool2d.1} parent=0 // pred_region
    _
  $region5: #{attention_pool2d.1} parent=0 // pred_fallthru
    _
  // Predicated region
  $region6: #{attention_pool2d.1} parent=0 // pred_check
    _
  $region7: #{attention_pool2d.1} parent=0 // pred_check_branch
    %21 = sbr.rel (0) target = $region9
  $region8: #{attention_pool2d.1} parent=0 // pred_region
    _
  $region9: #{attention_pool2d.1} parent=0 // pred_fallthru
    _
  // Predicated region
  $region10: #{attention_pool2d.1} parent=0 // pred_check
    _
  $region11: #{attention_pool2d.1} parent=0 // pred_check_branch
    %23 = sbr.rel (0) target = $region13
  $region12: #{attention_pool2d.1} parent=0 // pred_region
    _
  $region13: #{attention_pool2d.1} parent=0 // pred_fallthru
    _
  // Predicated region
  $region14: #{attention_pool2d.1} parent=0 // pred_check
    _
  $region15: #{attention_pool2d.1} parent=0 // pred_check_branch
    %25 = sbr.rel (0) target = $region17
  $region16: #{attention_pool2d.1} parent=0 // pred_region
    _
  $region17: #{attention_pool2d.1} parent=0 // pred_fallthru
    _
  // Predicated region
  $region18: #{attention_pool2d.1} parent=0 // pred_check
    _
  $region19: #{attention_pool2d.1} parent=0 // pred_check_branch
    %27 = sbr.rel (0) target = $region21
  $region20: #{attention_pool2d.1} parent=0 // pred_region
    _
  $region21: #{attention_pool2d.1} parent=0 // pred_fallthru
    _
  // Predicated region
  $region22: #{attention_pool2d.1} parent=0 // pred_check
    _
  $region23: #{attention_pool2d.1} parent=0 // pred_check_branch
    %29 = sbr.rel (0) target = $region25
  $region24: #{attention_pool2d.1} parent=0 // pred_region
    _
  $region25: #{attention_pool2d.1} parent=0 // pred_fallthru
    _
  // Predicated region
  $region26: #{attention_pool2d.1} parent=0 // pred_check
    _
  $region27: #{attention_pool2d.1} parent=0 // pred_check_branch
    %31 = sbr.rel (0) target = $region29
  $region28: #{attention_pool2d.1} parent=0 // pred_region
    _
  $region29: #{attention_pool2d.1} parent=0 // pred_fallthru
    _
  // Predicated region
  $region30: #{attention_pool2d.1} parent=0 // pred_check
    _
  $region31: #{attention_pool2d.1} parent=0 // pred_check_branch
    %33 = sbr.rel (0) target = $region33
  $region32: #{attention_pool2d.1} parent=0 // pred_region
    _
  $region33: #{attention_pool2d.1} parent=0 // pred_fallthru
    _
  // Predicated region
  $region34: #{attention_pool2d.1} parent=0 // pred_check
    _
  $region35: #{attention_pool2d.1} parent=0 // pred_check_branch
    %35 = sbr.rel (0) target = $region37
  $region36: #{attention_pool2d.1} parent=0 // pred_region
    _
  $region37: #{attention_pool2d.1} parent=0 // pred_fallthru
    _
  // Predicated region
  $region38: #{attention_pool2d.1} parent=0 // pred_check
    _
  $region39: #{attention_pool2d.1} parent=0 // pred_check_branch
    %37 = sbr.rel (0) target = $region41
  $region40: #{attention_pool2d.1} parent=0 // pred_region
    _
  $region41: #{attention_pool2d.1} parent=0 // pred_fallthru
    _
  // Predicated region
  $region42: #{attention_pool2d.1} parent=0 // pred_check
    _
  $region43: #{attention_pool2d.1} parent=0 // pred_check_branch
    %39 = sbr.rel (0) target = $region45
  $region44: #{attention_pool2d.1} parent=0 // pred_region
    _
  $region45: #{attention_pool2d.1} parent=0 // pred_fallthru
    _
  // Predicated region
  $region46: #{attention_pool2d.1} parent=0 // pred_check
    _
  $region47: #{attention_pool2d.1} parent=0 // pred_check_branch
    %41 = sbr.rel (0) target = $region49
  $region48: #{attention_pool2d.1} parent=0 // pred_region
    _
  $region49: #{attention_pool2d.1} parent=0 // pred_fallthru
    _
  // Predicated region
  $region50: #{attention_pool2d.1} parent=0 // pred_check
    _
  $region51: #{attention_pool2d.1} parent=0 // pred_check_branch
    %43 = sbr.rel (0) target = $region53
  $region52: #{attention_pool2d.1} parent=0 // pred_region
    _
  $region53: #{attention_pool2d.1} parent=0 // pred_fallthru
    _
  %v44 = vld [vmem:[%s0] sm:$0xff]
  %v45 = vld [vmem:[%s0 + $0x8] sm:$0xff]
  %v46 = vld [vmem:[%s0 + $0x10] sm:$0xff]
  %v47 = vld [vmem:[%s0 + $0x18] sm:$0xff]
  %v48 = vld [vmem:[%s0 + $0x20] sm:$0xff]
  %v49 = vld [vmem:[%s0 + $0x28] sm:$0xff]
  %v50 = vld [vmem:[%s0 + $0x30] sm:$0xff]
  %v51 = vld [vmem:[%s0 + $0x38] sm:$0xff]
  %v52 = vld [vmem:[%s0 + $0x40] sm:$0xff]
  %v53 = vld [vmem:[%s0 + $0x48] sm:$0xff]
  %v54 = vld [vmem:[%s0 + $0x50] sm:$0xff]
  %v55 = vld [vmem:[%s0 + $0x58] sm:$0xff]
  %v56 = vld [vmem:[%s0 + $0x60] sm:$0xff]
  %v57 = vld [vmem:[%s0 + $0x68] sm:$0xff]
  %v58 = vld [vmem:[%s0 + $0x70] sm:$0xff]
  %v59 = vld [vmem:[%s0 + $0x78] sm:$0xff]
  %v60 = vld [vmem:[%s0 + $0x80] sm:$0xff]
  %v61 = vld [vmem:[%s0 + $0x88] sm:$0xff]
  %v62 = vld [vmem:[%s0 + $0x90] sm:$0xff]
  %v63 = vld [vmem:[%s0 + $0x98] sm:$0xff]
  %v64 = vld [vmem:[%s0 + $0xa0] sm:$0xff]
  %v65 = vld [vmem:[%s0 + $0xa8] sm:$0xff]
  %v66 = vld [vmem:[%s0 + $0xb0] sm:$0xff]
  %v67 = vld [vmem:[%s0 + $0xb8] sm:$0xff]
  %v68 = vld [vmem:[%s0 + $0xc0] sm:$0xff]
  %v69 = vld [vmem:[%s0 + $0xc8] sm:$0xff]
  %v70 = vld [vmem:[%s0 + $0xd0] sm:$0xff]
  %v71 = vld [vmem:[%s0 + $0xd8] sm:$0xff]
  %v72 = vld [vmem:[%s0 + $0xe0] sm:$0xff]
  %v73 = vld [vmem:[%s0 + $0xe8] sm:$0xff]
  %v74 = vld [vmem:[%s0 + $0xf0] sm:$0xff]
  %v75 = vld [vmem:[%s0 + $0xf8] sm:$0xff]
  %v76 = vld [vmem:[%s12] sm:$0xf]
  %vm77 = vcmask 130048
  %v78 = vsel %vm77, %v44, 0.0
  %79 = vadd.xlane.f32.xlu0 %v78
  %v80 = vpop.xlane.xlu0 %79
  %v81 = vsel %vm77, %v45, 0.0
  %82 = vadd.xlane.f32.xlu0 %v81
  %v83 = vpop.xlane.xlu0 %82
  %v84 = vsel %vm77, %v46, 0.0
  %85 = vadd.xlane.f32.xlu0 %v84
  %v86 = vpop.xlane.xlu0 %85
  %v87 = vsel %vm77, %v47, 0.0
  %88 = vadd.xlane.f32.xlu0 %v87
  %v89 = vpop.xlane.xlu0 %88
  %v90 = vsel %vm77, %v48, 0.0
  %91 = vadd.xlane.f32.xlu0 %v90
  %v92 = vpop.xlane.xlu0 %91
  %v93 = vsel %vm77, %v49, 0.0
  %94 = vadd.xlane.f32.xlu0 %v93
  %v95 = vpop.xlane.xlu0 %94
  %v96 = vsel %vm77, %v50, 0.0
  %97 = vadd.xlane.f32.xlu0 %v96
  %v98 = vpop.xlane.xlu0 %97
  %v99 = vsel %vm77, %v51, 0.0
  %100 = vadd.xlane.f32.xlu0 %v99
  %v101 = vpop.xlane.xlu0 %100
  %v102 = vsel %vm77, %v52, 0.0
  %103 = vadd.xlane.f32.xlu0 %v102
  %v104 = vpop.xlane.xlu0 %103
  %v105 = vsel %vm77, %v53, 0.0
  %106 = vadd.xlane.f32.xlu0 %v105
  %v107 = vpop.xlane.xlu0 %106
  %v108 = vsel %vm77, %v54, 0.0
  %109 = vadd.xlane.f32.xlu0 %v108
  %v110 = vpop.xlane.xlu0 %109
  %v111 = vsel %vm77, %v55, 0.0
  %112 = vadd.xlane.f32.xlu0 %v111
  %v113 = vpop.xlane.xlu0 %112
  %v114 = vsel %vm77, %v56, 0.0
  %115 = vadd.xlane.f32.xlu0 %v114
  %v116 = vpop.xlane.xlu0 %115
  %v117 = vsel %vm77, %v57, 0.0
  %118 = vadd.xlane.f32.xlu0 %v117
  %v119 = vpop.xlane.xlu0 %118
  %v120 = vsel %vm77, %v58, 0.0
  %121 = vadd.xlane.f32.xlu0 %v120
  %v122 = vpop.xlane.xlu0 %121
  %v123 = vsel %vm77, %v59, 0.0
  %124 = vadd.xlane.f32.xlu0 %v123
  %v125 = vpop.xlane.xlu0 %124
  %v126 = vsel %vm77, %v60, 0.0
  %127 = vadd.xlane.f32.xlu0 %v126
  %v128 = vpop.xlane.xlu0 %127
  %v129 = vsel %vm77, %v61, 0.0
  %130 = vadd.xlane.f32.xlu0 %v129
  %v131 = vpop.xlane.xlu0 %130
  %v132 = vsel %vm77, %v62, 0.0
  %133 = vadd.xlane.f32.xlu0 %v132
  %v134 = vpop.xlane.xlu0 %133
  %v135 = vsel %vm77, %v63, 0.0
  %136 = vadd.xlane.f32.xlu0 %v135
  %v137 = vpop.xlane.xlu0 %136
  %v138 = vsel %vm77, %v64, 0.0
  %139 = vadd.xlane.f32.xlu0 %v138
  %v140 = vpop.xlane.xlu0 %139
  %v141 = vsel %vm77, %v65, 0.0
  %142 = vadd.xlane.f32.xlu0 %v141
  %v143 = vpop.xlane.xlu0 %142
  %v144 = vsel %vm77, %v66, 0.0
  %145 = vadd.xlane.f32.xlu0 %v144
  %v146 = vpop.xlane.xlu0 %145
  %v147 = vsel %vm77, %v67, 0.0
  %148 = vadd.xlane.f32.xlu0 %v147
  %v149 = vpop.xlane.xlu0 %148
  %v150 = vsel %vm77, %v68, 0.0
  %151 = vadd.xlane.f32.xlu0 %v150
  %v152 = vpop.xlane.xlu0 %151
  %v153 = vsel %vm77, %v69, 0.0
  %154 = vadd.xlane.f32.xlu0 %v153
  %v155 = vpop.xlane.xlu0 %154
  %v156 = vsel %vm77, %v70, 0.0
  %157 = vadd.xlane.f32.xlu0 %v156
  %v158 = vpop.xlane.xlu0 %157
  %v159 = vsel %vm77, %v71, 0.0
  %160 = vadd.xlane.f32.xlu0 %v159
  %v161 = vpop.xlane.xlu0 %160
  %v162 = vsel %vm77, %v72, 0.0
  %163 = vadd.xlane.f32.xlu0 %v162
  %v164 = vpop.xlane.xlu0 %163
  %v165 = vsel %vm77, %v73, 0.0
  %166 = vadd.xlane.f32.xlu0 %v165
  %v167 = vpop.xlane.xlu0 %166
  %v168 = vsel %vm77, %v74, 0.0
  %169 = vadd.xlane.f32.xlu0 %v168
  %v170 = vpop.xlane.xlu0 %169
  %v171 = vsel %vm77, %v75, 0.0
  %172 = vadd.xlane.f32.xlu0 %v171
  %v173 = vpop.xlane.xlu0 %172
  %v174 = vrcp.pop 16.0
  %v175 = vmul.f32 %v80, %v174
  %v176 = vmul.f32 %v83, %v174
  %v177 = vmul.f32 %v86, %v174
  %v178 = vmul.f32 %v89, %v174
  %v179 = vmul.f32 %v92, %v174
  %v180 = vmul.f32 %v95, %v174
  %v181 = vmul.f32 %v98, %v174
  %v182 = vmul.f32 %v101, %v174
  %v183 = vmul.f32 %v104, %v174
  %v184 = vmul.f32 %v107, %v174
  %v185 = vmul.f32 %v110, %v174
  %v186 = vmul.f32 %v113, %v174
  %v187 = vmul.f32 %v116, %v174
  %v188 = vmul.f32 %v119, %v174
  %v189 = vmul.f32 %v122, %v174
  %v190 = vmul.f32 %v125, %v174
  %v191 = vmul.f32 %v128, %v174
  %v192 = vmul.f32 %v131, %v174
  %v193 = vmul.f32 %v134, %v174
  %v194 = vmul.f32 %v137, %v174
  %v195 = vmul.f32 %v140, %v174
  %v196 = vmul.f32 %v143, %v174
  %v197 = vmul.f32 %v146, %v174
  %v198 = vmul.f32 %v149, %v174
  %v199 = vmul.f32 %v152, %v174
  %v200 = vmul.f32 %v155, %v174
  %v201 = vmul.f32 %v158, %v174
  %v202 = vmul.f32 %v161, %v174
  %v203 = vmul.f32 %v164, %v174
  %v204 = vmul.f32 %v167, %v174
  %v205 = vmul.f32 %v170, %v174
  %v206 = vmul.f32 %v173, %v174
  %v207 = vld [vmem:[%s1] sm:$0x1]
  %v209 = vlaneseq
  %v210 = vshrl.u32 %v209, 7
  %v211 = vsub.s32 0, %v210
  %v212 = vrot.slane %v207, %v211
  %214 = vbcast.lane.b32.xlu0 %v212, 256
  %v215 = vpop.permute.xlu0 %214
  %s217 = sor.u32 256, 8
  %218 = vbcast.lane.b32.xlu0 %v212, %s217
  %v219 = vpop.permute.xlu0 %218
  %s221 = sor.u32 256, 16
  %222 = vbcast.lane.b32.xlu0 %v212, %s221
  %v223 = vpop.permute.xlu0 %222
  %s225 = sor.u32 256, 24
  %226 = vbcast.lane.b32.xlu0 %v212, %s225
  %v227 = vpop.permute.xlu0 %226
  %v232 = vadd.f32 %v175, %v215
  %v233 = vadd.f32 %v176, %v219
  %v234 = vadd.f32 %v177, %v223
  %v235 = vadd.f32 %v178, %v227
  %v236 = vadd.f32 %v179, %v215
  %v237 = vadd.f32 %v180, %v219
  %v238 = vadd.f32 %v181, %v223
  %v239 = vadd.f32 %v182, %v227
  %v240 = vadd.f32 %v183, %v215
  %v241 = vadd.f32 %v184, %v219
  %v242 = vadd.f32 %v185, %v223
  %v243 = vadd.f32 %v186, %v227
  %v244 = vadd.f32 %v187, %v215
  %v245 = vadd.f32 %v188, %v219
  %v246 = vadd.f32 %v189, %v223
  %v247 = vadd.f32 %v190, %v227
  %v248 = vadd.f32 %v191, %v215
  %v249 = vadd.f32 %v192, %v219
  %v250 = vadd.f32 %v193, %v223
  %v251 = vadd.f32 %v194, %v227
  %v252 = vadd.f32 %v195, %v215
  %v253 = vadd.f32 %v196, %v219
  %v254 = vadd.f32 %v197, %v223
  %v255 = vadd.f32 %v198, %v227
  %v256 = vadd.f32 %v199, %v215
  %v257 = vadd.f32 %v200, %v219
  %v258 = vadd.f32 %v201, %v223
  %v259 = vadd.f32 %v202, %v227
  %v260 = vadd.f32 %v203, %v215
  %v261 = vadd.f32 %v204, %v219
  %v262 = vadd.f32 %v205, %v223
  %v263 = vadd.f32 %v206, %v227
  %v264 = vld [vmem:[%s2] sm:$0xff]
  %v265 = vld [vmem:[%s2 + $0x8] sm:$0xff]
  %v266 = vld [vmem:[%s2 + $0x10] sm:$0xff]
  %v267 = vld [vmem:[%s2 + $0x18] sm:$0xff]
  %v268 = vadd.f32 %v44, %v264
  %v269 = vadd.f32 %v45, %v265
  %v270 = vadd.f32 %v46, %v266
  %v271 = vadd.f32 %v47, %v267
  %v272 = vadd.f32 %v48, %v264
  %v273 = vadd.f32 %v49, %v265
  %v274 = vadd.f32 %v50, %v266
  %v275 = vadd.f32 %v51, %v267
  %v276 = vadd.f32 %v52, %v264
  %v277 = vadd.f32 %v53, %v265
  %v278 = vadd.f32 %v54, %v266
  %v279 = vadd.f32 %v55, %v267
  %v280 = vadd.f32 %v56, %v264
  %v281 = vadd.f32 %v57, %v265
  %v282 = vadd.f32 %v58, %v266
  %v283 = vadd.f32 %v59, %v267
  %v284 = vadd.f32 %v60, %v264
  %v285 = vadd.f32 %v61, %v265
  %v286 = vadd.f32 %v62, %v266
  %v287 = vadd.f32 %v63, %v267
  %v288 = vadd.f32 %v64, %v264
  %v289 = vadd.f32 %v65, %v265
  %v290 = vadd.f32 %v66, %v266
  %v291 = vadd.f32 %v67, %v267
  %v292 = vadd.f32 %v68, %v264
  %v293 = vadd.f32 %v69, %v265
  %v294 = vadd.f32 %v70, %v266
  %v295 = vadd.f32 %v71, %v267
  %v296 = vadd.f32 %v72, %v264
  %v297 = vadd.f32 %v73, %v265
  %v298 = vadd.f32 %v74, %v266
  %v299 = vadd.f32 %v75, %v267
  %v300 = vld [vmem:[%s3] sm:$0xff]
  %v301 = vld [vmem:[%s3 + $0x8] sm:$0xff]
  %v302 = vld [vmem:[%s3 + $0x10] sm:$0xff]
  %v303 = vld [vmem:[%s3 + $0x18] sm:$0xff]
  %v304 = vld [vmem:[%s4] sm:$0x1]
  %v306 = vlaneseq
  %v307 = vshrl.u32 %v306, 7
  %v308 = vsub.s32 0, %v307
  %v309 = vrot.slane %v304, %v308
  %343 = vset.pattern.permute.xlu0 0
  %344 = vperm.xlu0 %343, %v232
  %v345 = vpop.permute.xlu0 %344
  %346 = vset.pattern.permute.xlu0 0
  %347 = vperm.xlu0 %346, %v233
  %v348 = vpop.permute.xlu0 %347
  %349 = vset.pattern.permute.xlu0 0
  %350 = vperm.xlu0 %349, %v234
  %v351 = vpop.permute.xlu0 %350
  %352 = vset.pattern.permute.xlu0 0
  %353 = vperm.xlu0 %352, %v235
  %v354 = vpop.permute.xlu0 %353
  %355 = vset.pattern.permute.xlu0 0
  %356 = vperm.xlu0 %355, %v236
  %v357 = vpop.permute.xlu0 %356
  %358 = vset.pattern.permute.xlu0 0
  %359 = vperm.xlu0 %358, %v237
  %v360 = vpop.permute.xlu0 %359
  %361 = vset.pattern.permute.xlu0 0
  %362 = vperm.xlu0 %361, %v238
  %v363 = vpop.permute.xlu0 %362
  %364 = vset.pattern.permute.xlu0 0
  %365 = vperm.xlu0 %364, %v239
  %v366 = vpop.permute.xlu0 %365
  %367 = vset.pattern.permute.xlu0 0
  %368 = vperm.xlu0 %367, %v240
  %v369 = vpop.permute.xlu0 %368
  %370 = vset.pattern.permute.xlu0 0
  %371 = vperm.xlu0 %370, %v241
  %v372 = vpop.permute.xlu0 %371
  %373 = vset.pattern.permute.xlu0 0
  %374 = vperm.xlu0 %373, %v242
  %v375 = vpop.permute.xlu0 %374
  %376 = vset.pattern.permute.xlu0 0
  %377 = vperm.xlu0 %376, %v243
  %v378 = vpop.permute.xlu0 %377
  %379 = vset.pattern.permute.xlu0 0
  %380 = vperm.xlu0 %379, %v244
  %v381 = vpop.permute.xlu0 %380
  %382 = vset.pattern.permute.xlu0 0
  %383 = vperm.xlu0 %382, %v245
  %v384 = vpop.permute.xlu0 %383
  %385 = vset.pattern.permute.xlu0 0
  %386 = vperm.xlu0 %385, %v246
  %v387 = vpop.permute.xlu0 %386
  %388 = vset.pattern.permute.xlu0 0
  %389 = vperm.xlu0 %388, %v247
  %v390 = vpop.permute.xlu0 %389
  %391 = vset.pattern.permute.xlu0 0
  %392 = vperm.xlu0 %391, %v248
  %v393 = vpop.permute.xlu0 %392
  %394 = vset.pattern.permute.xlu0 0
  %395 = vperm.xlu0 %394, %v249
  %v396 = vpop.permute.xlu0 %395
  %397 = vset.pattern.permute.xlu0 0
  %398 = vperm.xlu0 %397, %v250
  %v399 = vpop.permute.xlu0 %398
  %400 = vset.pattern.permute.xlu0 0
  %401 = vperm.xlu0 %400, %v251
  %v402 = vpop.permute.xlu0 %401
  %403 = vset.pattern.permute.xlu0 0
  %404 = vperm.xlu0 %403, %v252
  %v405 = vpop.permute.xlu0 %404
  %406 = vset.pattern.permute.xlu0 0
  %407 = vperm.xlu0 %406, %v253
  %v408 = vpop.permute.xlu0 %407
  %409 = vset.pattern.permute.xlu0 0
  %410 = vperm.xlu0 %409, %v254
  %v411 = vpop.permute.xlu0 %410
  %412 = vset.pattern.permute.xlu0 0
  %413 = vperm.xlu0 %412, %v255
  %v414 = vpop.permute.xlu0 %413
  %415 = vset.pattern.permute.xlu0 0
  %416 = vperm.xlu0 %415, %v256
  %v417 = vpop.permute.xlu0 %416
  %418 = vset.pattern.permute.xlu0 0
  %419 = vperm.xlu0 %418, %v257
  %v420 = vpop.permute.xlu0 %419
  %421 = vset.pattern.permute.xlu0 0
  %422 = vperm.xlu0 %421, %v258
  %v423 = vpop.permute.xlu0 %422
  %424 = vset.pattern.permute.xlu0 0
  %425 = vperm.xlu0 %424, %v259
  %v426 = vpop.permute.xlu0 %425
  %427 = vset.pattern.permute.xlu0 0
  %428 = vperm.xlu0 %427, %v260
  %v429 = vpop.permute.xlu0 %428
  %430 = vset.pattern.permute.xlu0 0
  %431 = vperm.xlu0 %430, %v261
  %v432 = vpop.permute.xlu0 %431
  %433 = vset.pattern.permute.xlu0 0
  %434 = vperm.xlu0 %433, %v262
  %v435 = vpop.permute.xlu0 %434
  %436 = vset.pattern.permute.xlu0 0
  %437 = vperm.xlu0 %436, %v263
  %v438 = vpop.permute.xlu0 %437
  %v439 = vlaneseq
  %v440 = vand.u32 %v439, 127
  %v441 = vlaneseq
  %v442 = vshrl.u32 %v441, 7
  %v443 = vsub.s32 %v440, %v442
  %v444 = vrot.slane %v345, %v443
  %v445 = vadd.s32 %v440, 4294967288
  %v446 = vlaneseq
  %v447 = vshrl.u32 %v446, 7
  %v448 = vsub.s32 %v445, %v447
  %v449 = vrot.slane %v348, %v448
  %vm450 = vcmask 130112
  %v451 = vsel %vm450, %v449, %v444
  %v452 = vadd.s32 %v440, 4294967280
  %v453 = vlaneseq
  %v454 = vshrl.u32 %v453, 7
  %v455 = vsub.s32 %v452, %v454
  %v456 = vrot.slane %v351, %v455
  %vm457 = vcmask 195712
  %v458 = vsel %vm457, %v456, %v451
  %v459 = vadd.s32 %v440, 4294967272
  %v460 = vlaneseq
  %v461 = vshrl.u32 %v460, 7
  %v462 = vsub.s32 %v459, %v461
  %v463 = vrot.slane %v354, %v462
  %vm464 = vcmask 261312
  %v465 = vsel %vm464, %v463, %v458
  %v466 = vlaneseq
  %v467 = vshrl.u32 %v466, 7
  %v468 = vsub.s32 %v440, %v467
  %v469 = vrot.slane %v357, %v468
  %v470 = vlaneseq
  %v471 = vshrl.u32 %v470, 7
  %v472 = vsub.s32 %v445, %v471
  %v473 = vrot.slane %v360, %v472
  %v474 = vsel %vm450, %v473, %v469
  %v475 = vlaneseq
  %v476 = vshrl.u32 %v475, 7
  %v477 = vsub.s32 %v452, %v476
  %v478 = vrot.slane %v363, %v477
  %v479 = vsel %vm457, %v478, %v474
  %v480 = vlaneseq
  %v481 = vshrl.u32 %v480, 7
  %v482 = vsub.s32 %v459, %v481
  %v483 = vrot.slane %v366, %v482
  %v484 = vsel %vm464, %v483, %v479
  %v485 = vlaneseq
  %v486 = vshrl.u32 %v485, 7
  %v487 = vsub.s32 %v440, %v486
  %v488 = vrot.slane %v369, %v487
  %v489 = vlaneseq
  %v490 = vshrl.u32 %v489, 7
  %v491 = vsub.s32 %v445, %v490
  %v492 = vrot.slane %v372, %v491
  %v493 = vsel %vm450, %v492, %v488
  %v494 = vlaneseq
  %v495 = vshrl.u32 %v494, 7
  %v496 = vsub.s32 %v452, %v495
  %v497 = vrot.slane %v375, %v496
  %v498 = vsel %vm457, %v497, %v493
  %v499 = vlaneseq
  %v500 = vshrl.u32 %v499, 7
  %v501 = vsub.s32 %v459, %v500
  %v502 = vrot.slane %v378, %v501
  %v503 = vsel %vm464, %v502, %v498
  %v504 = vlaneseq
  %v505 = vshrl.u32 %v504, 7
  %v506 = vsub.s32 %v440, %v505
  %v507 = vrot.slane %v381, %v506
  %v508 = vlaneseq
  %v509 = vshrl.u32 %v508, 7
  %v510 = vsub.s32 %v445, %v509
  %v511 = vrot.slane %v384, %v510
  %v512 = vsel %vm450, %v511, %v507
  %v513 = vlaneseq
  %v514 = vshrl.u32 %v513, 7
  %v515 = vsub.s32 %v452, %v514
  %v516 = vrot.slane %v387, %v515
  %v517 = vsel %vm457, %v516, %v512
  %v518 = vlaneseq
  %v519 = vshrl.u32 %v518, 7
  %v520 = vsub.s32 %v459, %v519
  %v521 = vrot.slane %v390, %v520
  %v522 = vsel %vm464, %v521, %v517
  %v523 = vlaneseq
  %v524 = vshrl.u32 %v523, 7
  %v525 = vsub.s32 %v440, %v524
  %v526 = vrot.slane %v393, %v525
  %v527 = vlaneseq
  %v528 = vshrl.u32 %v527, 7
  %v529 = vsub.s32 %v445, %v528
  %v530 = vrot.slane %v396, %v529
  %v531 = vsel %vm450, %v530, %v526
  %v532 = vlaneseq
  %v533 = vshrl.u32 %v532, 7
  %v534 = vsub.s32 %v452, %v533
  %v535 = vrot.slane %v399, %v534
  %v536 = vsel %vm457, %v535, %v531
  %v537 = vlaneseq
  %v538 = vshrl.u32 %v537, 7
  %v539 = vsub.s32 %v459, %v538
  %v540 = vrot.slane %v402, %v539
  %v541 = vsel %vm464, %v540, %v536
  %v542 = vlaneseq
  %v543 = vshrl.u32 %v542, 7
  %v544 = vsub.s32 %v440, %v543
  %v545 = vrot.slane %v405, %v544
  %v546 = vlaneseq
  %v547 = vshrl.u32 %v546, 7
  %v548 = vsub.s32 %v445, %v547
  %v549 = vrot.slane %v408, %v548
  %v550 = vsel %vm450, %v549, %v545
  %v551 = vlaneseq
  %v552 = vshrl.u32 %v551, 7
  %v553 = vsub.s32 %v452, %v552
  %v554 = vrot.slane %v411, %v553
  %v555 = vsel %vm457, %v554, %v550
  %v556 = vlaneseq
  %v557 = vshrl.u32 %v556, 7
  %v558 = vsub.s32 %v459, %v557
  %v559 = vrot.slane %v414, %v558
  %v560 = vsel %vm464, %v559, %v555
  %v561 = vlaneseq
  %v562 = vshrl.u32 %v561, 7
  %v563 = vsub.s32 %v440, %v562
  %v564 = vrot.slane %v417, %v563
  %v565 = vlaneseq
  %v566 = vshrl.u32 %v565, 7
  %v567 = vsub.s32 %v445, %v566
  %v568 = vrot.slane %v420, %v567
  %v569 = vsel %vm450, %v568, %v564
  %v570 = vlaneseq
  %v571 = vshrl.u32 %v570, 7
  %v572 = vsub.s32 %v452, %v571
  %v573 = vrot.slane %v423, %v572
  %v574 = vsel %vm457, %v573, %v569
  %v575 = vlaneseq
  %v576 = vshrl.u32 %v575, 7
  %v577 = vsub.s32 %v459, %v576
  %v578 = vrot.slane %v426, %v577
  %v579 = vsel %vm464, %v578, %v574
  %v580 = vlaneseq
  %v581 = vshrl.u32 %v580, 7
  %v582 = vsub.s32 %v440, %v581
  %v583 = vrot.slane %v429, %v582
  %v584 = vlaneseq
  %v585 = vshrl.u32 %v584, 7
  %v586 = vsub.s32 %v445, %v585
  %v587 = vrot.slane %v432, %v586
  %v588 = vsel %vm450, %v587, %v583
  %v589 = vlaneseq
  %v590 = vshrl.u32 %v589, 7
  %v591 = vsub.s32 %v452, %v590
  %v592 = vrot.slane %v435, %v591
  %v593 = vsel %vm457, %v592, %v588
  %v594 = vlaneseq
  %v595 = vshrl.u32 %v594, 7
  %v596 = vsub.s32 %v459, %v595
  %v597 = vrot.slane %v438, %v596
  %v598 = vsel %vm464, %v597, %v593
  %vm599 = vcmask 1041409
  %v600 = vsel %vm599, %v484, %v465
  %vm601 = vcmask 1042434
  %v602 = vsel %vm601, %v503, %v600
  %vm603 = vcmask 1043459
  %v604 = vsel %vm603, %v522, %v602
  %vm605 = vcmask 1044484
  %v606 = vsel %vm605, %v541, %v604
  %vm607 = vcmask 1045509
  %v608 = vsel %vm607, %v560, %v606
  %vm609 = vcmask 1046534
  %v610 = vsel %vm609, %v579, %v608
  %vm611 = vcmask 1047559
  %v612 = vsel %vm611, %v598, %v610
  %vm613 = vcmask 261120
  %v614 = vsel %vm613, %v612, 0
  %616 = vmatprep.subr.mxu0 0.0
  %617 = vmatpush1.msra.mxu0 %v300
  %618 = vmatprep.subr.mxu0 0.0
  %619 = vmatpush1.msra.mxu0 %v301
  %620 = vmatprep.subr.mxu0 0.0
  %621 = vmatpush1.msra.mxu0 %v302
  %622 = vmatprep.subr.mxu0 0.0
  %623 = vmatpush1.msra.mxu0 %v303
  %624 = vmatprep.subr.mxu0 0.0
  %625 = vmatpush1.msra.mxu0 0.0
  %626 = vmatprep.subr.mxu0 0.0
  %627 = vmatpush1.msra.mxu0 0.0
  %628 = vmatprep.subr.mxu0 0.0
  %629 = vmatpush1.msra.mxu0 0.0
  %630 = vmatprep.subr.mxu0 0.0
  %631 = vmatpush1.msra.mxu0 0.0
  %632 = vmatprep.subr.mxu0 0.0
  %633 = vmatpush1.msra.mxu0 0.0
  %634 = vmatprep.subr.mxu0 0.0
  %635 = vmatpush1.msra.mxu0 0.0
  %636 = vmatprep.subr.mxu0 0.0
  %637 = vmatpush1.msra.mxu0 0.0
  %638 = vmatprep.subr.mxu0 0.0
  %639 = vmatpush1.msra.mxu0 0.0
  %640 = vmatprep.subr.mxu0 0.0
  %641 = vmatpush1.msra.mxu0 0.0
  %642 = vmatprep.subr.mxu0 0.0
  %643 = vmatpush1.msra.mxu0 0.0
  %644 = vmatprep.subr.mxu0 0.0
  %645 = vmatpush1.msra.mxu0 0.0
  %646 = vmatprep.subr.mxu0 0.0
  %647 = vmatpush1.msra.mxu0 0.0
  %648 = vmatprep.subr.mxu0 0.0
  %649 = vmatpush1.msra.mxu0 0.0
  %650 = vmatprep.subr.mxu0 0.0
  %651 = vmatpush1.msra.mxu0 0.0
  %652 = vmatprep.subr.mxu0 0.0
  %653 = vmatpush1.msra.mxu0 0.0
  %654 = vmatprep.subr.mxu0 0.0
  %655 = vmatpush1.msra.mxu0 0.0
  %656 = vmatprep.subr.mxu0 0.0
  %657 = vmatpush1.msra.mxu0 0.0
  %658 = vmatprep.subr.mxu0 0.0
  %659 = vmatpush1.msra.mxu0 0.0
  %660 = vmatprep.subr.mxu0 0.0
  %661 = vmatpush1.msra.mxu0 0.0
  %662 = vmatprep.subr.mxu0 0.0
  %663 = vmatpush1.msra.mxu0 0.0
  %664 = vmatprep.subr.mxu0 0.0
  %665 = vmatpush1.msra.mxu0 0.0
  %666 = vmatprep.subr.mxu0 0.0
  %667 = vmatpush1.msra.mxu0 0.0
  %668 = vmatprep.subr.mxu0 0.0
  %669 = vmatpush1.msra.mxu0 0.0
  %670 = vmatprep.subr.mxu0 0.0
  %671 = vmatpush1.msra.mxu0 0.0
  %672 = vmatprep.subr.mxu0 0.0
  %673 = vmatpush1.msra.mxu0 0.0
  %674 = vmatprep.subr.mxu0 0.0
  %675 = vmatpush1.msra.mxu0 0.0
  %676 = vmatprep.subr.mxu0 0.0
  %677 = vmatpush1.msra.mxu0 0.0
  %678 = vmatprep.subr.mxu0 0.0
  %679 = vmatpush1.msra.mxu0 0.0
  %680 = vmatprep.mubr.f32.mxu0 0.0
  %681 = vmatmul.mubr.f32.gmra.mrb[0].mxu0 %v614
  %v682 = vpop.f32.mrb[0].mxu0
  %v683 = vadd.f32 %v309, %v682
  %v684 = vpop.f32.mrb[0].mxu0
  %685 = vdwg.mxu0
  %v687 = vcombine.high %v683, %v683
  %v689 = vunpack.c.l.s4 1966171168
  %v690 = vunpack.c.0.s8 %v689
  %v691 = vlaneseq
  %v692 = vshrl.u32 %v691, 7
  %v693 = vsub.s32 %v690, %v692
  %v694 = vrot.slane %v683, %v693
  %v696 = vunpack.c.l.s4 1966171168
  %v697 = vunpack.c.0.s8 %v696
  %v698 = vlaneseq
  %v699 = vshrl.u32 %v698, 7
  %v700 = vsub.s32 %v697, %v699
  %v701 = vrot.slane %v687, %v700
  %v702 = vcombine.high %v694, %v694
  %v703 = vcombine.high %v701, %v701
  %v705 = vunpack.c.l.s4 1966171168
  %v706 = vunpack.c.0.s8 %v705
  %v707 = vlaneseq
  %v708 = vshrl.u32 %v707, 7
  %v709 = vsub.s32 %v706, %v708
  %v710 = vrot.slane %v694, %v709
  %v712 = vunpack.c.l.s4 1966171168
  %v713 = vunpack.c.0.s8 %v712
  %v714 = vlaneseq
  %v715 = vshrl.u32 %v714, 7
  %v716 = vsub.s32 %v713, %v715
  %v717 = vrot.slane %v701, %v716
  %v719 = vunpack.c.l.s4 1966171168
  %v720 = vunpack.c.0.s8 %v719
  %v721 = vlaneseq
  %v722 = vshrl.u32 %v721, 7
  %v723 = vsub.s32 %v720, %v722
  %v724 = vrot.slane %v702, %v723
  %v726 = vunpack.c.l.s4 1966171168
  %v727 = vunpack.c.0.s8 %v726
  %v728 = vlaneseq
  %v729 = vshrl.u32 %v728, 7
  %v730 = vsub.s32 %v727, %v729
  %v731 = vrot.slane %v703, %v730
  %v732 = vcombine.high %v710, %v710
  %v733 = vcombine.high %v717, %v717
  %v734 = vcombine.high %v724, %v724
  %v735 = vcombine.high %v731, %v731
  %v736 = vlaneseq
  %v737 = vshrl.u32 %v736, 7
  %v738 = vsub.s32 0, %v737
  %v739 = vrot.slane %v710, %v738
  %v740 = vlaneseq
  %v741 = vshrl.u32 %v740, 7
  %v742 = vsub.s32 0, %v741
  %v743 = vrot.slane %v724, %v742
  %v744 = vlaneseq
  %v745 = vshrl.u32 %v744, 7
  %v746 = vsub.s32 0, %v745
  %v747 = vrot.slane %v732, %v746
  %v748 = vlaneseq
  %v749 = vshrl.u32 %v748, 7
  %v750 = vsub.s32 0, %v749
  %v751 = vrot.slane %v734, %v750
  %v752 = vlaneseq
  %v753 = vshrl.u32 %v752, 7
  %v754 = vsub.s32 0, %v753
  %v755 = vrot.slane %v717, %v754
  %v756 = vlaneseq
  %v757 = vshrl.u32 %v756, 7
  %v758 = vsub.s32 0, %v757
  %v759 = vrot.slane %v731, %v758
  %v760 = vlaneseq
  %v761 = vshrl.u32 %v760, 7
  %v762 = vsub.s32 0, %v761
  %v763 = vrot.slane %v733, %v762
  %v764 = vlaneseq
  %v765 = vshrl.u32 %v764, 7
  %v766 = vsub.s32 0, %v765
  %v767 = vrot.slane %v735, %v766
  %v776 = vmul.f32 %v739, %v76
  %v777 = vmul.f32 %v743, %v76
  %v778 = vmul.f32 %v747, %v76
  %v779 = vmul.f32 %v751, %v76
  %v780 = vmul.f32 %v755, %v76
  %v781 = vmul.f32 %v759, %v76
  %v782 = vmul.f32 %v763, %v76
  %v783 = vmul.f32 %v767, %v76
  %v784 = vld [vmem:[%s5] sm:$0xff]
  %v785 = vld [vmem:[%s5 + $0x8] sm:$0xff]
  %v786 = vld [vmem:[%s5 + $0x10] sm:$0xff]
  %v787 = vld [vmem:[%s5 + $0x18] sm:$0xff]
  %v796 = vcombine.low %v776, %v777
  %v797 = vcombine.low %v778, %v779
  %v798 = vcombine.low %v780, %v781
  %v799 = vcombine.low %v782, %v783
  %v800 = vsel %vm613, %v796, 0
  %v802 = vsel %vm613, %v797, 0
  %v804 = vsel %vm613, %v798, 0
  %v806 = vsel %vm613, %v799, 0
  %808 = vmatprep.subr.mxu0 0.0
  %809 = vmatpush1.msra.mxu0 %v784
  %810 = vmatprep.subr.mxu0 0.0
  %811 = vmatpush1.msra.mxu0 %v785
  %812 = vmatprep.subr.mxu0 0.0
  %813 = vmatpush1.msra.mxu0 %v786
  %814 = vmatprep.subr.mxu0 0.0
  %815 = vmatpush1.msra.mxu0 %v787
  %816 = vmatprep.subr.mxu0 0.0
  %817 = vmatpush1.msra.mxu0 0.0
  %818 = vmatprep.subr.mxu0 0.0
  %819 = vmatpush1.msra.mxu0 0.0
  %820 = vmatprep.subr.mxu0 0.0
  %821 = vmatpush1.msra.mxu0 0.0
  %822 = vmatprep.subr.mxu0 0.0
  %823 = vmatpush1.msra.mxu0 0.0
  %824 = vmatprep.subr.mxu0 0.0
  %825 = vmatpush1.msra.mxu0 0.0
  %826 = vmatprep.subr.mxu0 0.0
  %827 = vmatpush1.msra.mxu0 0.0
  %828 = vmatprep.subr.mxu0 0.0
  %829 = vmatpush1.msra.mxu0 0.0
  %830 = vmatprep.subr.mxu0 0.0
  %831 = vmatpush1.msra.mxu0 0.0
  %832 = vmatprep.subr.mxu0 0.0
  %833 = vmatpush1.msra.mxu0 0.0
  %834 = vmatprep.subr.mxu0 0.0
  %835 = vmatpush1.msra.mxu0 0.0
  %836 = vmatprep.subr.mxu0 0.0
  %837 = vmatpush1.msra.mxu0 0.0
  %838 = vmatprep.subr.mxu0 0.0
  %839 = vmatpush1.msra.mxu0 0.0
  %840 = vmatprep.subr.mxu0 0.0
  %841 = vmatpush1.msra.mxu0 0.0
  %842 = vmatprep.subr.mxu0 0.0
  %843 = vmatpush1.msra.mxu0 0.0
  %844 = vmatprep.subr.mxu0 0.0
  %845 = vmatpush1.msra.mxu0 0.0
  %846 = vmatprep.subr.mxu0 0.0
  %847 = vmatpush1.msra.mxu0 0.0
  %848 = vmatprep.subr.mxu0 0.0
  %849 = vmatpush1.msra.mxu0 0.0
  %850 = vmatprep.subr.mxu0 0.0
  %851 = vmatpush1.msra.mxu0 0.0
  %852 = vmatprep.subr.mxu0 0.0
  %853 = vmatpush1.msra.mxu0 0.0
  %854 = vmatprep.subr.mxu0 0.0
  %855 = vmatpush1.msra.mxu0 0.0
  %856 = vmatprep.subr.mxu0 0.0
  %857 = vmatpush1.msra.mxu0 0.0
  %858 = vmatprep.subr.mxu0 0.0
  %859 = vmatpush1.msra.mxu0 0.0
  %860 = vmatprep.subr.mxu0 0.0
  %861 = vmatpush1.msra.mxu0 0.0
  %862 = vmatprep.subr.mxu0 0.0
  %863 = vmatpush1.msra.mxu0 0.0
  %864 = vmatprep.subr.mxu0 0.0
  %865 = vmatpush1.msra.mxu0 0.0
  %866 = vmatprep.subr.mxu0 0.0
  %867 = vmatpush1.msra.mxu0 0.0
  %868 = vmatprep.subr.mxu0 0.0
  %869 = vmatpush1.msra.mxu0 0.0
  %870 = vmatprep.subr.mxu0 0.0
  %871 = vmatpush1.msra.mxu0 0.0
  %872 = vmatprep.mubr.f32.mxu0 0.0
  %873 = vmatmul.mubr.f32.gmra.mrb[0].mxu0 %v800
  %v874 = vpop.f32.mrb[0].mxu0
  %v875 = vadd.f32 0.0, %v874
  %v876 = vpop.f32.mrb[0].mxu0
  %877 = vmatprep.mubr.f32.mxu0 0.0
  %878 = vmatmul.mubr.f32.gmra.mrb[0].mxu0 %v802
  %v879 = vpop.f32.mrb[0].mxu0
  %v880 = vadd.f32 0.0, %v879
  %v881 = vpop.f32.mrb[0].mxu0
  %882 = vmatprep.mubr.f32.mxu0 0.0
  %883 = vmatmul.mubr.f32.gmra.mrb[0].mxu0 %v804
  %v884 = vpop.f32.mrb[0].mxu0
  %v885 = vadd.f32 0.0, %v884
  %v886 = vpop.f32.mrb[0].mxu0
  %887 = vmatprep.mubr.f32.mxu0 0.0
  %888 = vmatmul.mubr.f32.gmra.mrb[0].mxu0 %v806
  %v889 = vpop.f32.mrb[0].mxu0
  %v890 = vadd.f32 0.0, %v889
  %v891 = vpop.f32.mrb[0].mxu0
  %892 = vdwg.mxu0
  %v897 = vcombine.high %v875, %v875
  %v898 = vcombine.high %v880, %v880
  %v899 = vcombine.high %v885, %v885
  %v900 = vcombine.high %v890, %v890
  %v901 = vld [vmem:[%s6] sm:$0x1]
  %v903 = vlaneseq
  %v904 = vshrl.u32 %v903, 7
  %v905 = vsub.s32 0, %v904
  %v906 = vrot.slane %v901, %v905
  %v908 = vmul.f32 %v683, %v906
  %v909 = vld [vmem:[%s11] sm:$0xff]
  %v910 = vld [vmem:[%s11 + $0x8] sm:$0xff]
  %v911 = vld [vmem:[%s11 + $0x10] sm:$0xff]
  %v912 = vld [vmem:[%s11 + $0x18] sm:$0xff]
  %v914 = vsel %vm613, %v908, 0
  %916 = vmatprep.subr.mxu0 0.0
  %917 = vmatpush1.msra.mxu0 %v909
  %918 = vmatprep.subr.mxu0 0.0
  %919 = vmatpush1.msra.mxu0 %v910
  %920 = vmatprep.subr.mxu0 0.0
  %921 = vmatpush1.msra.mxu0 %v911
  %922 = vmatprep.subr.mxu0 0.0
  %923 = vmatpush1.msra.mxu0 %v912
  %924 = vmatprep.subr.mxu0 0.0
  %925 = vmatpush1.msra.mxu0 0.0
  %926 = vmatprep.subr.mxu0 0.0
  %927 = vmatpush1.msra.mxu0 0.0
  %928 = vmatprep.subr.mxu0 0.0
  %929 = vmatpush1.msra.mxu0 0.0
  %930 = vmatprep.subr.mxu0 0.0
  %931 = vmatpush1.msra.mxu0 0.0
  %932 = vmatprep.subr.mxu0 0.0
  %933 = vmatpush1.msra.mxu0 0.0
  %934 = vmatprep.subr.mxu0 0.0
  %935 = vmatpush1.msra.mxu0 0.0
  %936 = vmatprep.subr.mxu0 0.0
  %937 = vmatpush1.msra.mxu0 0.0
  %938 = vmatprep.subr.mxu0 0.0
  %939 = vmatpush1.msra.mxu0 0.0
  %940 = vmatprep.subr.mxu0 0.0
  %941 = vmatpush1.msra.mxu0 0.0
  %942 = vmatprep.subr.mxu0 0.0
  %943 = vmatpush1.msra.mxu0 0.0
  %944 = vmatprep.subr.mxu0 0.0
  %945 = vmatpush1.msra.mxu0 0.0
  %946 = vmatprep.subr.mxu0 0.0
  %947 = vmatpush1.msra.mxu0 0.0
  %948 = vmatprep.subr.mxu0 0.0
  %949 = vmatpush1.msra.mxu0 0.0
  %950 = vmatprep.subr.mxu0 0.0
  %951 = vmatpush1.msra.mxu0 0.0
  %952 = vmatprep.subr.mxu0 0.0
  %953 = vmatpush1.msra.mxu0 0.0
  %954 = vmatprep.subr.mxu0 0.0
  %955 = vmatpush1.msra.mxu0 0.0
  %956 = vmatprep.subr.mxu0 0.0
  %957 = vmatpush1.msra.mxu0 0.0
  %958 = vmatprep.subr.mxu0 0.0
  %959 = vmatpush1.msra.mxu0 0.0
  %960 = vmatprep.subr.mxu0 0.0
  %961 = vmatpush1.msra.mxu0 0.0
  %962 = vmatprep.subr.mxu0 0.0
  %963 = vmatpush1.msra.mxu0 0.0
  %964 = vmatprep.subr.mxu0 0.0
  %965 = vmatpush1.msra.mxu0 0.0
  %966 = vmatprep.subr.mxu0 0.0
  %967 = vmatpush1.msra.mxu0 0.0
  %968 = vmatprep.subr.mxu0 0.0
  %969 = vmatpush1.msra.mxu0 0.0
  %970 = vmatprep.subr.mxu0 0.0
  %971 = vmatpush1.msra.mxu0 0.0
  %972 = vmatprep.subr.mxu0 0.0
  %973 = vmatpush1.msra.mxu0 0.0
  %974 = vmatprep.subr.mxu0 0.0
  %975 = vmatpush1.msra.mxu0 0.0
  %976 = vmatprep.subr.mxu0 0.0
  %977 = vmatpush1.msra.mxu0 0.0
  %978 = vmatprep.subr.mxu0 0.0
  %979 = vmatpush1.msra.mxu0 0.0
  %980 = vmatprep.mubr.f32.mxu0 0.0
  %981 = vmatmul.mubr.f32.gmra.mrb[0].mxu0 %v914
  %v982 = vpop.f32.mrb[0].mxu0
  %v983 = vadd.f32 0.0, %v982
  %v984 = vpop.f32.mrb[0].mxu0
  %985 = vdwg.mxu0
  %v986 = vlaneseq
  %v987 = vshrl.u32 %v986, 7
  %v988 = vsub.s32 0, %v987
  %v989 = vrot.slane %v875, %v988
  %991 = vbcast.lane.b32.xlu0 %v989, 256
  %v992 = vpop.permute.xlu0 %991
  %s994 = sor.u32 256, 8
  %995 = vbcast.lane.b32.xlu0 %v989, %s994
  %v996 = vpop.permute.xlu0 %995
  %s998 = sor.u32 256, 16
  %999 = vbcast.lane.b32.xlu0 %v989, %s998
  %v1000 = vpop.permute.xlu0 %999
  %s1002 = sor.u32 256, 24
  %1003 = vbcast.lane.b32.xlu0 %v989, %s1002
  %v1004 = vpop.permute.xlu0 %1003
  %v1005 = vlaneseq
  %v1006 = vshrl.u32 %v1005, 7
  %v1007 = vsub.s32 1, %v1006
  %v1008 = vrot.slane %v875, %v1007
  %1010 = vbcast.lane.b32.xlu0 %v1008, 256
  %v1011 = vpop.permute.xlu0 %1010
  %s1013 = sor.u32 256, 8
  %1014 = vbcast.lane.b32.xlu0 %v1008, %s1013
  %v1015 = vpop.permute.xlu0 %1014
  %s1017 = sor.u32 256, 16
  %1018 = vbcast.lane.b32.xlu0 %v1008, %s1017
  %v1019 = vpop.permute.xlu0 %1018
  %s1021 = sor.u32 256, 24
  %1022 = vbcast.lane.b32.xlu0 %v1008, %s1021
  %v1023 = vpop.permute.xlu0 %1022
  %v1024 = vlaneseq
  %v1025 = vshrl.u32 %v1024, 7
  %v1026 = vsub.s32 2, %v1025
  %v1027 = vrot.slane %v875, %v1026
  %1029 = vbcast.lane.b32.xlu0 %v1027, 256
  %v1030 = vpop.permute.xlu0 %1029
  %s1032 = sor.u32 256, 8
  %1033 = vbcast.lane.b32.xlu0 %v1027, %s1032
  %v1034 = vpop.permute.xlu0 %1033
  %s1036 = sor.u32 256, 16
  %1037 = vbcast.lane.b32.xlu0 %v1027, %s1036
  %v1038 = vpop.permute.xlu0 %1037
  %s1040 = sor.u32 256, 24
  %1041 = vbcast.lane.b32.xlu0 %v1027, %s1040
  %v1042 = vpop.permute.xlu0 %1041
  %v1043 = vlaneseq
  %v1044 = vshrl.u32 %v1043, 7
  %v1045 = vsub.s32 3, %v1044
  %v1046 = vrot.slane %v875, %v1045
  %1048 = vbcast.lane.b32.xlu0 %v1046, 256
  %v1049 = vpop.permute.xlu0 %1048
  %s1051 = sor.u32 256, 8
  %1052 = vbcast.lane.b32.xlu0 %v1046, %s1051
  %v1053 = vpop.permute.xlu0 %1052
  %s1055 = sor.u32 256, 16
  %1056 = vbcast.lane.b32.xlu0 %v1046, %s1055
  %v1057 = vpop.permute.xlu0 %1056
  %s1059 = sor.u32 256, 24
  %1060 = vbcast.lane.b32.xlu0 %v1046, %s1059
  %v1061 = vpop.permute.xlu0 %1060
  %v1062 = vlaneseq
  %v1063 = vshrl.u32 %v1062, 7
  %v1064 = vsub.s32 0, %v1063
  %v1065 = vrot.slane %v897, %v1064
  %1067 = vbcast.lane.b32.xlu0 %v1065, 256
  %v1068 = vpop.permute.xlu0 %1067
  %s1070 = sor.u32 256, 8
  %1071 = vbcast.lane.b32.xlu0 %v1065, %s1070
  %v1072 = vpop.permute.xlu0 %1071
  %s1074 = sor.u32 256, 16
  %1075 = vbcast.lane.b32.xlu0 %v1065, %s1074
  %v1076 = vpop.permute.xlu0 %1075
  %s1078 = sor.u32 256, 24
  %1079 = vbcast.lane.b32.xlu0 %v1065, %s1078
  %v1080 = vpop.permute.xlu0 %1079
  %v1081 = vlaneseq
  %v1082 = vshrl.u32 %v1081, 7
  %v1083 = vsub.s32 1, %v1082
  %v1084 = vrot.slane %v897, %v1083
  %1086 = vbcast.lane.b32.xlu0 %v1084, 256
  %v1087 = vpop.permute.xlu0 %1086
  %s1089 = sor.u32 256, 8
  %1090 = vbcast.lane.b32.xlu0 %v1084, %s1089
  %v1091 = vpop.permute.xlu0 %1090
  %s1093 = sor.u32 256, 16
  %1094 = vbcast.lane.b32.xlu0 %v1084, %s1093
  %v1095 = vpop.permute.xlu0 %1094
  %s1097 = sor.u32 256, 24
  %1098 = vbcast.lane.b32.xlu0 %v1084, %s1097
  %v1099 = vpop.permute.xlu0 %1098
  %v1100 = vlaneseq
  %v1101 = vshrl.u32 %v1100, 7
  %v1102 = vsub.s32 2, %v1101
  %v1103 = vrot.slane %v897, %v1102
  %1105 = vbcast.lane.b32.xlu0 %v1103, 256
  %v1106 = vpop.permute.xlu0 %1105
  %s1108 = sor.u32 256, 8
  %1109 = vbcast.lane.b32.xlu0 %v1103, %s1108
  %v1110 = vpop.permute.xlu0 %1109
  %s1112 = sor.u32 256, 16
  %1113 = vbcast.lane.b32.xlu0 %v1103, %s1112
  %v1114 = vpop.permute.xlu0 %1113
  %s1116 = sor.u32 256, 24
  %1117 = vbcast.lane.b32.xlu0 %v1103, %s1116
  %v1118 = vpop.permute.xlu0 %1117
  %v1119 = vlaneseq
  %v1120 = vshrl.u32 %v1119, 7
  %v1121 = vsub.s32 3, %v1120
  %v1122 = vrot.slane %v897, %v1121
  %1124 = vbcast.lane.b32.xlu0 %v1122, 256
  %v1125 = vpop.permute.xlu0 %1124
  %s1127 = sor.u32 256, 8
  %1128 = vbcast.lane.b32.xlu0 %v1122, %s1127
  %v1129 = vpop.permute.xlu0 %1128
  %s1131 = sor.u32 256, 16
  %1132 = vbcast.lane.b32.xlu0 %v1122, %s1131
  %v1133 = vpop.permute.xlu0 %1132
  %s1135 = sor.u32 256, 24
  %1136 = vbcast.lane.b32.xlu0 %v1122, %s1135
  %v1137 = vpop.permute.xlu0 %1136
  %v1138 = vlaneseq
  %v1139 = vshrl.u32 %v1138, 7
  %v1140 = vsub.s32 0, %v1139
  %v1141 = vrot.slane %v880, %v1140
  %1143 = vbcast.lane.b32.xlu0 %v1141, 256
  %v1144 = vpop.permute.xlu0 %1143
  %s1146 = sor.u32 256, 8
  %1147 = vbcast.lane.b32.xlu0 %v1141, %s1146
  %v1148 = vpop.permute.xlu0 %1147
  %s1150 = sor.u32 256, 16
  %1151 = vbcast.lane.b32.xlu0 %v1141, %s1150
  %v1152 = vpop.permute.xlu0 %1151
  %s1154 = sor.u32 256, 24
  %1155 = vbcast.lane.b32.xlu0 %v1141, %s1154
  %v1156 = vpop.permute.xlu0 %1155
  %v1157 = vlaneseq
  %v1158 = vshrl.u32 %v1157, 7
  %v1159 = vsub.s32 1, %v1158
  %v1160 = vrot.slane %v880, %v1159
  %1162 = vbcast.lane.b32.xlu0 %v1160, 256
  %v1163 = vpop.permute.xlu0 %1162
  %s1165 = sor.u32 256, 8
  %1166 = vbcast.lane.b32.xlu0 %v1160, %s1165
  %v1167 = vpop.permute.xlu0 %1166
  %s1169 = sor.u32 256, 16
  %1170 = vbcast.lane.b32.xlu0 %v1160, %s1169
  %v1171 = vpop.permute.xlu0 %1170
  %s1173 = sor.u32 256, 24
  %1174 = vbcast.lane.b32.xlu0 %v1160, %s1173
  %v1175 = vpop.permute.xlu0 %1174
  %v1176 = vlaneseq
  %v1177 = vshrl.u32 %v1176, 7
  %v1178 = vsub.s32 2, %v1177
  %v1179 = vrot.slane %v880, %v1178
  %1181 = vbcast.lane.b32.xlu0 %v1179, 256
  %v1182 = vpop.permute.xlu0 %1181
  %s1184 = sor.u32 256, 8
  %1185 = vbcast.lane.b32.xlu0 %v1179, %s1184
  %v1186 = vpop.permute.xlu0 %1185
  %s1188 = sor.u32 256, 16
  %1189 = vbcast.lane.b32.xlu0 %v1179, %s1188
  %v1190 = vpop.permute.xlu0 %1189
  %s1192 = sor.u32 256, 24
  %1193 = vbcast.lane.b32.xlu0 %v1179, %s1192
  %v1194 = vpop.permute.xlu0 %1193
  %v1195 = vlaneseq
  %v1196 = vshrl.u32 %v1195, 7
  %v1197 = vsub.s32 3, %v1196
  %v1198 = vrot.slane %v880, %v1197
  %1200 = vbcast.lane.b32.xlu0 %v1198, 256
  %v1201 = vpop.permute.xlu0 %1200
  %s1203 = sor.u32 256, 8
  %1204 = vbcast.lane.b32.xlu0 %v1198, %s1203
  %v1205 = vpop.permute.xlu0 %1204
  %s1207 = sor.u32 256, 16
  %1208 = vbcast.lane.b32.xlu0 %v1198, %s1207
  %v1209 = vpop.permute.xlu0 %1208
  %s1211 = sor.u32 256, 24
  %1212 = vbcast.lane.b32.xlu0 %v1198, %s1211
  %v1213 = vpop.permute.xlu0 %1212
  %v1214 = vlaneseq
  %v1215 = vshrl.u32 %v1214, 7
  %v1216 = vsub.s32 0, %v1215
  %v1217 = vrot.slane %v898, %v1216
  %1219 = vbcast.lane.b32.xlu0 %v1217, 256
  %v1220 = vpop.permute.xlu0 %1219
  %s1222 = sor.u32 256, 8
  %1223 = vbcast.lane.b32.xlu0 %v1217, %s1222
  %v1224 = vpop.permute.xlu0 %1223
  %s1226 = sor.u32 256, 16
  %1227 = vbcast.lane.b32.xlu0 %v1217, %s1226
  %v1228 = vpop.permute.xlu0 %1227
  %s1230 = sor.u32 256, 24
  %1231 = vbcast.lane.b32.xlu0 %v1217, %s1230
  %v1232 = vpop.permute.xlu0 %1231
  %v1233 = vlaneseq
  %v1234 = vshrl.u32 %v1233, 7
  %v1235 = vsub.s32 1, %v1234
  %v1236 = vrot.slane %v898, %v1235
  %1238 = vbcast.lane.b32.xlu0 %v1236, 256
  %v1239 = vpop.permute.xlu0 %1238
  %s1241 = sor.u32 256, 8
  %1242 = vbcast.lane.b32.xlu0 %v1236, %s1241
  %v1243 = vpop.permute.xlu0 %1242
  %s1245 = sor.u32 256, 16
  %1246 = vbcast.lane.b32.xlu0 %v1236, %s1245
  %v1247 = vpop.permute.xlu0 %1246
  %s1249 = sor.u32 256, 24
  %1250 = vbcast.lane.b32.xlu0 %v1236, %s1249
  %v1251 = vpop.permute.xlu0 %1250
  %v1252 = vlaneseq
  %v1253 = vshrl.u32 %v1252, 7
  %v1254 = vsub.s32 2, %v1253
  %v1255 = vrot.slane %v898, %v1254
  %1257 = vbcast.lane.b32.xlu0 %v1255, 256
  %v1258 = vpop.permute.xlu0 %1257
  %s1260 = sor.u32 256, 8
  %1261 = vbcast.lane.b32.xlu0 %v1255, %s1260
  %v1262 = vpop.permute.xlu0 %1261
  %s1264 = sor.u32 256, 16
  %1265 = vbcast.lane.b32.xlu0 %v1255, %s1264
  %v1266 = vpop.permute.xlu0 %1265
  %s1268 = sor.u32 256, 24
  %1269 = vbcast.lane.b32.xlu0 %v1255, %s1268
  %v1270 = vpop.permute.xlu0 %1269
  %v1271 = vlaneseq
  %v1272 = vshrl.u32 %v1271, 7
  %v1273 = vsub.s32 3, %v1272
  %v1274 = vrot.slane %v898, %v1273
  %1276 = vbcast.lane.b32.xlu0 %v1274, 256
  %v1277 = vpop.permute.xlu0 %1276
  %s1279 = sor.u32 256, 8
  %1280 = vbcast.lane.b32.xlu0 %v1274, %s1279
  %v1281 = vpop.permute.xlu0 %1280
  %s1283 = sor.u32 256, 16
  %1284 = vbcast.lane.b32.xlu0 %v1274, %s1283
  %v1285 = vpop.permute.xlu0 %1284
  %s1287 = sor.u32 256, 24
  %1288 = vbcast.lane.b32.xlu0 %v1274, %s1287
  %v1289 = vpop.permute.xlu0 %1288
  %v1290 = vlaneseq
  %v1291 = vshrl.u32 %v1290, 7
  %v1292 = vsub.s32 0, %v1291
  %v1293 = vrot.slane %v885, %v1292
  %1295 = vbcast.lane.b32.xlu0 %v1293, 256
  %v1296 = vpop.permute.xlu0 %1295
  %s1298 = sor.u32 256, 8
  %1299 = vbcast.lane.b32.xlu0 %v1293, %s1298
  %v1300 = vpop.permute.xlu0 %1299
  %s1302 = sor.u32 256, 16
  %1303 = vbcast.lane.b32.xlu0 %v1293, %s1302
  %v1304 = vpop.permute.xlu0 %1303
  %s1306 = sor.u32 256, 24
  %1307 = vbcast.lane.b32.xlu0 %v1293, %s1306
  %v1308 = vpop.permute.xlu0 %1307
  %v1309 = vlaneseq
  %v1310 = vshrl.u32 %v1309, 7
  %v1311 = vsub.s32 1, %v1310
  %v1312 = vrot.slane %v885, %v1311
  %1314 = vbcast.lane.b32.xlu0 %v1312, 256
  %v1315 = vpop.permute.xlu0 %1314
  %s1317 = sor.u32 256, 8
  %1318 = vbcast.lane.b32.xlu0 %v1312, %s1317
  %v1319 = vpop.permute.xlu0 %1318
  %s1321 = sor.u32 256, 16
  %1322 = vbcast.lane.b32.xlu0 %v1312, %s1321
  %v1323 = vpop.permute.xlu0 %1322
  %s1325 = sor.u32 256, 24
  %1326 = vbcast.lane.b32.xlu0 %v1312, %s1325
  %v1327 = vpop.permute.xlu0 %1326
  %v1328 = vlaneseq
  %v1329 = vshrl.u32 %v1328, 7
  %v1330 = vsub.s32 2, %v1329
  %v1331 = vrot.slane %v885, %v1330
  %1333 = vbcast.lane.b32.xlu0 %v1331, 256
  %v1334 = vpop.permute.xlu0 %1333
  %s1336 = sor.u32 256, 8
  %1337 = vbcast.lane.b32.xlu0 %v1331, %s1336
  %v1338 = vpop.permute.xlu0 %1337
  %s1340 = sor.u32 256, 16
  %1341 = vbcast.lane.b32.xlu0 %v1331, %s1340
  %v1342 = vpop.permute.xlu0 %1341
  %s1344 = sor.u32 256, 24
  %1345 = vbcast.lane.b32.xlu0 %v1331, %s1344
  %v1346 = vpop.permute.xlu0 %1345
  %v1347 = vlaneseq
  %v1348 = vshrl.u32 %v1347, 7
  %v1349 = vsub.s32 3, %v1348
  %v1350 = vrot.slane %v885, %v1349
  %1352 = vbcast.lane.b32.xlu0 %v1350, 256
  %v1353 = vpop.permute.xlu0 %1352
  %s1355 = sor.u32 256, 8
  %1356 = vbcast.lane.b32.xlu0 %v1350, %s1355
  %v1357 = vpop.permute.xlu0 %1356
  %s1359 = sor.u32 256, 16
  %1360 = vbcast.lane.b32.xlu0 %v1350, %s1359
  %v1361 = vpop.permute.xlu0 %1360
  %s1363 = sor.u32 256, 24
  %1364 = vbcast.lane.b32.xlu0 %v1350, %s1363
  %v1365 = vpop.permute.xlu0 %1364
  %v1366 = vlaneseq
  %v1367 = vshrl.u32 %v1366, 7
  %v1368 = vsub.s32 0, %v1367
  %v1369 = vrot.slane %v899, %v1368
  %1371 = vbcast.lane.b32.xlu0 %v1369, 256
  %v1372 = vpop.permute.xlu0 %1371
  %s1374 = sor.u32 256, 8
  %1375 = vbcast.lane.b32.xlu0 %v1369, %s1374
  %v1376 = vpop.permute.xlu0 %1375
  %s1378 = sor.u32 256, 16
  %1379 = vbcast.lane.b32.xlu0 %v1369, %s1378
  %v1380 = vpop.permute.xlu0 %1379
  %s1382 = sor.u32 256, 24
  %1383 = vbcast.lane.b32.xlu0 %v1369, %s1382
  %v1384 = vpop.permute.xlu0 %1383
  %v1385 = vlaneseq
  %v1386 = vshrl.u32 %v1385, 7
  %v1387 = vsub.s32 1, %v1386
  %v1388 = vrot.slane %v899, %v1387
  %1390 = vbcast.lane.b32.xlu0 %v1388, 256
  %v1391 = vpop.permute.xlu0 %1390
  %s1393 = sor.u32 256, 8
  %1394 = vbcast.lane.b32.xlu0 %v1388, %s1393
  %v1395 = vpop.permute.xlu0 %1394
  %s1397 = sor.u32 256, 16
  %1398 = vbcast.lane.b32.xlu0 %v1388, %s1397
  %v1399 = vpop.permute.xlu0 %1398
  %s1401 = sor.u32 256, 24
  %1402 = vbcast.lane.b32.xlu0 %v1388, %s1401
  %v1403 = vpop.permute.xlu0 %1402
  %v1404 = vlaneseq
  %v1405 = vshrl.u32 %v1404, 7
  %v1406 = vsub.s32 2, %v1405
  %v1407 = vrot.slane %v899, %v1406
  %1409 = vbcast.lane.b32.xlu0 %v1407, 256
  %v1410 = vpop.permute.xlu0 %1409
  %s1412 = sor.u32 256, 8
  %1413 = vbcast.lane.b32.xlu0 %v1407, %s1412
  %v1414 = vpop.permute.xlu0 %1413
  %s1416 = sor.u32 256, 16
  %1417 = vbcast.lane.b32.xlu0 %v1407, %s1416
  %v1418 = vpop.permute.xlu0 %1417
  %s1420 = sor.u32 256, 24
  %1421 = vbcast.lane.b32.xlu0 %v1407, %s1420
  %v1422 = vpop.permute.xlu0 %1421
  %v1423 = vlaneseq
  %v1424 = vshrl.u32 %v1423, 7
  %v1425 = vsub.s32 3, %v1424
  %v1426 = vrot.slane %v899, %v1425
  %1428 = vbcast.lane.b32.xlu0 %v1426, 256
  %v1429 = vpop.permute.xlu0 %1428
  %s1431 = sor.u32 256, 8
  %1432 = vbcast.lane.b32.xlu0 %v1426, %s1431
  %v1433 = vpop.permute.xlu0 %1432
  %s1435 = sor.u32 256, 16
  %1436 = vbcast.lane.b32.xlu0 %v1426, %s1435
  %v1437 = vpop.permute.xlu0 %1436
  %s1439 = sor.u32 256, 24
  %1440 = vbcast.lane.b32.xlu0 %v1426, %s1439
  %v1441 = vpop.permute.xlu0 %1440
  %v1442 = vlaneseq
  %v1443 = vshrl.u32 %v1442, 7
  %v1444 = vsub.s32 0, %v1443
  %v1445 = vrot.slane %v890, %v1444
  %1447 = vbcast.lane.b32.xlu0 %v1445, 256
  %v1448 = vpop.permute.xlu0 %1447
  %s1450 = sor.u32 256, 8
  %1451 = vbcast.lane.b32.xlu0 %v1445, %s1450
  %v1452 = vpop.permute.xlu0 %1451
  %s1454 = sor.u32 256, 16
  %1455 = vbcast.lane.b32.xlu0 %v1445, %s1454
  %v1456 = vpop.permute.xlu0 %1455
  %s1458 = sor.u32 256, 24
  %1459 = vbcast.lane.b32.xlu0 %v1445, %s1458
  %v1460 = vpop.permute.xlu0 %1459
  %v1461 = vlaneseq
  %v1462 = vshrl.u32 %v1461, 7
  %v1463 = vsub.s32 1, %v1462
  %v1464 = vrot.slane %v890, %v1463
  %1466 = vbcast.lane.b32.xlu0 %v1464, 256
  %v1467 = vpop.permute.xlu0 %1466
  %s1469 = sor.u32 256, 8
  %1470 = vbcast.lane.b32.xlu0 %v1464, %s1469
  %v1471 = vpop.permute.xlu0 %1470
  %s1473 = sor.u32 256, 16
  %1474 = vbcast.lane.b32.xlu0 %v1464, %s1473
  %v1475 = vpop.permute.xlu0 %1474
  %s1477 = sor.u32 256, 24
  %1478 = vbcast.lane.b32.xlu0 %v1464, %s1477
  %v1479 = vpop.permute.xlu0 %1478
  %v1480 = vlaneseq
  %v1481 = vshrl.u32 %v1480, 7
  %v1482 = vsub.s32 2, %v1481
  %v1483 = vrot.slane %v890, %v1482
  %1485 = vbcast.lane.b32.xlu0 %v1483, 256
  %v1486 = vpop.permute.xlu0 %1485
  %s1488 = sor.u32 256, 8
  %1489 = vbcast.lane.b32.xlu0 %v1483, %s1488
  %v1490 = vpop.permute.xlu0 %1489
  %s1492 = sor.u32 256, 16
  %1493 = vbcast.lane.b32.xlu0 %v1483, %s1492
  %v1494 = vpop.permute.xlu0 %1493
  %s1496 = sor.u32 256, 24
  %1497 = vbcast.lane.b32.xlu0 %v1483, %s1496
  %v1498 = vpop.permute.xlu0 %1497
  %v1499 = vlaneseq
  %v1500 = vshrl.u32 %v1499, 7
  %v1501 = vsub.s32 3, %v1500
  %v1502 = vrot.slane %v890, %v1501
  %1504 = vbcast.lane.b32.xlu0 %v1502, 256
  %v1505 = vpop.permute.xlu0 %1504
  %s1507 = sor.u32 256, 8
  %1508 = vbcast.lane.b32.xlu0 %v1502, %s1507
  %v1509 = vpop.permute.xlu0 %1508
  %s1511 = sor.u32 256, 16
  %1512 = vbcast.lane.b32.xlu0 %v1502, %s1511
  %v1513 = vpop.permute.xlu0 %1512
  %s1515 = sor.u32 256, 24
  %1516 = vbcast.lane.b32.xlu0 %v1502, %s1515
  %v1517 = vpop.permute.xlu0 %1516
  %v1518 = vlaneseq
  %v1519 = vshrl.u32 %v1518, 7
  %v1520 = vsub.s32 0, %v1519
  %v1521 = vrot.slane %v900, %v1520
  %1523 = vbcast.lane.b32.xlu0 %v1521, 256
  %v1524 = vpop.permute.xlu0 %1523
  %s1526 = sor.u32 256, 8
  %1527 = vbcast.lane.b32.xlu0 %v1521, %s1526
  %v1528 = vpop.permute.xlu0 %1527
  %s1530 = sor.u32 256, 16
  %1531 = vbcast.lane.b32.xlu0 %v1521, %s1530
  %v1532 = vpop.permute.xlu0 %1531
  %s1534 = sor.u32 256, 24
  %1535 = vbcast.lane.b32.xlu0 %v1521, %s1534
  %v1536 = vpop.permute.xlu0 %1535
  %v1537 = vlaneseq
  %v1538 = vshrl.u32 %v1537, 7
  %v1539 = vsub.s32 1, %v1538
  %v1540 = vrot.slane %v900, %v1539
  %1542 = vbcast.lane.b32.xlu0 %v1540, 256
  %v1543 = vpop.permute.xlu0 %1542
  %s1545 = sor.u32 256, 8
  %1546 = vbcast.lane.b32.xlu0 %v1540, %s1545
  %v1547 = vpop.permute.xlu0 %1546
  %s1549 = sor.u32 256, 16
  %1550 = vbcast.lane.b32.xlu0 %v1540, %s1549
  %v1551 = vpop.permute.xlu0 %1550
  %s1553 = sor.u32 256, 24
  %1554 = vbcast.lane.b32.xlu0 %v1540, %s1553
  %v1555 = vpop.permute.xlu0 %1554
  %v1556 = vlaneseq
  %v1557 = vshrl.u32 %v1556, 7
  %v1558 = vsub.s32 2, %v1557
  %v1559 = vrot.slane %v900, %v1558
  %1561 = vbcast.lane.b32.xlu0 %v1559, 256
  %v1562 = vpop.permute.xlu0 %1561
  %s1564 = sor.u32 256, 8
  %1565 = vbcast.lane.b32.xlu0 %v1559, %s1564
  %v1566 = vpop.permute.xlu0 %1565
  %s1568 = sor.u32 256, 16
  %1569 = vbcast.lane.b32.xlu0 %v1559, %s1568
  %v1570 = vpop.permute.xlu0 %1569
  %s1572 = sor.u32 256, 24
  %1573 = vbcast.lane.b32.xlu0 %v1559, %s1572
  %v1574 = vpop.permute.xlu0 %1573
  %v1575 = vlaneseq
  %v1576 = vshrl.u32 %v1575, 7
  %v1577 = vsub.s32 3, %v1576
  %v1578 = vrot.slane %v900, %v1577
  %1580 = vbcast.lane.b32.xlu0 %v1578, 256
  %v1581 = vpop.permute.xlu0 %1580
  %s1583 = sor.u32 256, 8
  %1584 = vbcast.lane.b32.xlu0 %v1578, %s1583
  %v1585 = vpop.permute.xlu0 %1584
  %s1587 = sor.u32 256, 16
  %1588 = vbcast.lane.b32.xlu0 %v1578, %s1587
  %v1589 = vpop.permute.xlu0 %1588
  %s1591 = sor.u32 256, 24
  %1592 = vbcast.lane.b32.xlu0 %v1578, %s1591
  %v1593 = vpop.permute.xlu0 %1592
  %v1722 = vmul.f32 %v232, %v992
  %v1723 = vmul.f32 %v233, %v996
  %v1724 = vmul.f32 %v234, %v1000
  %v1725 = vmul.f32 %v235, %v1004
  %v1726 = vmul.f32 %v232, %v1011
  %v1727 = vmul.f32 %v233, %v1015
  %v1728 = vmul.f32 %v234, %v1019
  %v1729 = vmul.f32 %v235, %v1023
  %v1730 = vmul.f32 %v232, %v1030
  %v1731 = vmul.f32 %v233, %v1034
  %v1732 = vmul.f32 %v234, %v1038
  %v1733 = vmul.f32 %v235, %v1042
  %v1734 = vmul.f32 %v232, %v1049
  %v1735 = vmul.f32 %v233, %v1053
  %v1736 = vmul.f32 %v234, %v1057
  %v1737 = vmul.f32 %v235, %v1061
  %v1738 = vmul.f32 %v236, %v1068
  %v1739 = vmul.f32 %v237, %v1072
  %v1740 = vmul.f32 %v238, %v1076
  %v1741 = vmul.f32 %v239, %v1080
  %v1742 = vmul.f32 %v236, %v1087
  %v1743 = vmul.f32 %v237, %v1091
  %v1744 = vmul.f32 %v238, %v1095
  %v1745 = vmul.f32 %v239, %v1099
  %v1746 = vmul.f32 %v236, %v1106
  %v1747 = vmul.f32 %v237, %v1110
  %v1748 = vmul.f32 %v238, %v1114
  %v1749 = vmul.f32 %v239, %v1118
  %v1750 = vmul.f32 %v236, %v1125
  %v1751 = vmul.f32 %v237, %v1129
  %v1752 = vmul.f32 %v238, %v1133
  %v1753 = vmul.f32 %v239, %v1137
  %v1754 = vmul.f32 %v240, %v1144
  %v1755 = vmul.f32 %v241, %v1148
  %v1756 = vmul.f32 %v242, %v1152
  %v1757 = vmul.f32 %v243, %v1156
  %v1758 = vmul.f32 %v240, %v1163
  %v1759 = vmul.f32 %v241, %v1167
  %v1760 = vmul.f32 %v242, %v1171
  %v1761 = vmul.f32 %v243, %v1175
  %v1762 = vmul.f32 %v240, %v1182
  %v1763 = vmul.f32 %v241, %v1186
  %v1764 = vmul.f32 %v242, %v1190
  %v1765 = vmul.f32 %v243, %v1194
  %v1766 = vmul.f32 %v240, %v1201
  %v1767 = vmul.f32 %v241, %v1205
  %v1768 = vmul.f32 %v242, %v1209
  %v1769 = vmul.f32 %v243, %v1213
  %v1770 = vmul.f32 %v244, %v1220
  %v1771 = vmul.f32 %v245, %v1224
  %v1772 = vmul.f32 %v246, %v1228
  %v1773 = vmul.f32 %v247, %v1232
  %v1774 = vmul.f32 %v244, %v1239
  %v1775 = vmul.f32 %v245, %v1243
  %v1776 = vmul.f32 %v246, %v1247
  %v1777 = vmul.f32 %v247, %v1251
  %v1778 = vmul.f32 %v244, %v1258
  %v1779 = vmul.f32 %v245, %v1262
  %v1780 = vmul.f32 %v246, %v1266
  %v1781 = vmul.f32 %v247, %v1270
  %v1782 = vmul.f32 %v244, %v1277
  %v1783 = vmul.f32 %v245, %v1281
  %v1784 = vmul.f32 %v246, %v1285
  %v1785 = vmul.f32 %v247, %v1289
  %v1786 = vmul.f32 %v248, %v1296
  %v1787 = vmul.f32 %v249, %v1300
  %v1788 = vmul.f32 %v250, %v1304
  %v1789 = vmul.f32 %v251, %v1308
  %v1790 = vmul.f32 %v248, %v1315
  %v1791 = vmul.f32 %v249, %v1319
  %v1792 = vmul.f32 %v250, %v1323
  %v1793 = vmul.f32 %v251, %v1327
  %v1794 = vmul.f32 %v248, %v1334
  %v1795 = vmul.f32 %v249, %v1338
  %v1796 = vmul.f32 %v250, %v1342
  %v1797 = vmul.f32 %v251, %v1346
  %v1798 = vmul.f32 %v248, %v1353
  %v1799 = vmul.f32 %v249, %v1357
  %v1800 = vmul.f32 %v250, %v1361
  %v1801 = vmul.f32 %v251, %v1365
  %v1802 = vmul.f32 %v252, %v1372
  %v1803 = vmul.f32 %v253, %v1376
  %v1804 = vmul.f32 %v254, %v1380
  %v1805 = vmul.f32 %v255, %v1384
  %v1806 = vmul.f32 %v252, %v1391
  %v1807 = vmul.f32 %v253, %v1395
  %v1808 = vmul.f32 %v254, %v1399
  %v1809 = vmul.f32 %v255, %v1403
  %v1810 = vmul.f32 %v252, %v1410
  %v1811 = vmul.f32 %v253, %v1414
  %v1812 = vmul.f32 %v254, %v1418
  %v1813 = vmul.f32 %v255, %v1422
  %v1814 = vmul.f32 %v252, %v1429
  %v1815 = vmul.f32 %v253, %v1433
  %v1816 = vmul.f32 %v254, %v1437
  %v1817 = vmul.f32 %v255, %v1441
  %v1818 = vmul.f32 %v256, %v1448
  %v1819 = vmul.f32 %v257, %v1452
  %v1820 = vmul.f32 %v258, %v1456
  %v1821 = vmul.f32 %v259, %v1460
  %v1822 = vmul.f32 %v256, %v1467
  %v1823 = vmul.f32 %v257, %v1471
  %v1824 = vmul.f32 %v258, %v1475
  %v1825 = vmul.f32 %v259, %v1479
  %v1826 = vmul.f32 %v256, %v1486
  %v1827 = vmul.f32 %v257, %v1490
  %v1828 = vmul.f32 %v258, %v1494
  %v1829 = vmul.f32 %v259, %v1498
  %v1830 = vmul.f32 %v256, %v1505
  %v1831 = vmul.f32 %v257, %v1509
  %v1832 = vmul.f32 %v258, %v1513
  %v1833 = vmul.f32 %v259, %v1517
  %v1834 = vmul.f32 %v260, %v1524
  %v1835 = vmul.f32 %v261, %v1528
  %v1836 = vmul.f32 %v262, %v1532
  %v1837 = vmul.f32 %v263, %v1536
  %v1838 = vmul.f32 %v260, %v1543
  %v1839 = vmul.f32 %v261, %v1547
  %v1840 = vmul.f32 %v262, %v1551
  %v1841 = vmul.f32 %v263, %v1555
  %v1842 = vmul.f32 %v260, %v1562
  %v1843 = vmul.f32 %v261, %v1566
  %v1844 = vmul.f32 %v262, %v1570
  %v1845 = vmul.f32 %v263, %v1574
  %v1846 = vmul.f32 %v260, %v1581
  %v1847 = vmul.f32 %v261, %v1585
  %v1848 = vmul.f32 %v262, %v1589
  %v1849 = vmul.f32 %v263, %v1593
  %1978 = vset.pattern.permute.xlu0 0
  %1979 = vperm.xlu0 %1978, %v1722
  %v1980 = vpop.permute.xlu0 %1979
  %1981 = vset.pattern.permute.xlu0 0
  %1982 = vperm.xlu0 %1981, %v1723
  %v1983 = vpop.permute.xlu0 %1982
  %1984 = vset.pattern.permute.xlu0 0
  %1985 = vperm.xlu0 %1984, %v1724
  %v1986 = vpop.permute.xlu0 %1985
  %1987 = vset.pattern.permute.xlu0 0
  %1988 = vperm.xlu0 %1987, %v1725
  %v1989 = vpop.permute.xlu0 %1988
  %1990 = vset.pattern.permute.xlu0 0
  %1991 = vperm.xlu0 %1990, %v1726
  %v1992 = vpop.permute.xlu0 %1991
  %1993 = vset.pattern.permute.xlu0 0
  %1994 = vperm.xlu0 %1993, %v1727
  %v1995 = vpop.permute.xlu0 %1994
  %1996 = vset.pattern.permute.xlu0 0
  %1997 = vperm.xlu0 %1996, %v1728
  %v1998 = vpop.permute.xlu0 %1997
  %1999 = vset.pattern.permute.xlu0 0
  %2000 = vperm.xlu0 %1999, %v1729
  %v2001 = vpop.permute.xlu0 %2000
  %2002 = vset.pattern.permute.xlu0 0
  %2003 = vperm.xlu0 %2002, %v1730
  %v2004 = vpop.permute.xlu0 %2003
  %2005 = vset.pattern.permute.xlu0 0
  %2006 = vperm.xlu0 %2005, %v1731
  %v2007 = vpop.permute.xlu0 %2006
  %2008 = vset.pattern.permute.xlu0 0
  %2009 = vperm.xlu0 %2008, %v1732
  %v2010 = vpop.permute.xlu0 %2009
  %2011 = vset.pattern.permute.xlu0 0
  %2012 = vperm.xlu0 %2011, %v1733
  %v2013 = vpop.permute.xlu0 %2012
  %2014 = vset.pattern.permute.xlu0 0
  %2015 = vperm.xlu0 %2014, %v1734
  %v2016 = vpop.permute.xlu0 %2015
  %2017 = vset.pattern.permute.xlu0 0
  %2018 = vperm.xlu0 %2017, %v1735
  %v2019 = vpop.permute.xlu0 %2018
  %2020 = vset.pattern.permute.xlu0 0
  %2021 = vperm.xlu0 %2020, %v1736
  %v2022 = vpop.permute.xlu0 %2021
  %2023 = vset.pattern.permute.xlu0 0
  %2024 = vperm.xlu0 %2023, %v1737
  %v2025 = vpop.permute.xlu0 %2024
  %2026 = vset.pattern.permute.xlu0 0
  %2027 = vperm.xlu0 %2026, %v1738
  %v2028 = vpop.permute.xlu0 %2027
  %2029 = vset.pattern.permute.xlu0 0
  %2030 = vperm.xlu0 %2029, %v1739
  %v2031 = vpop.permute.xlu0 %2030
  %2032 = vset.pattern.permute.xlu0 0
  %2033 = vperm.xlu0 %2032, %v1740
  %v2034 = vpop.permute.xlu0 %2033
  %2035 = vset.pattern.permute.xlu0 0
  %2036 = vperm.xlu0 %2035, %v1741
  %v2037 = vpop.permute.xlu0 %2036
  %2038 = vset.pattern.permute.xlu0 0
  %2039 = vperm.xlu0 %2038, %v1742
  %v2040 = vpop.permute.xlu0 %2039
  %2041 = vset.pattern.permute.xlu0 0
  %2042 = vperm.xlu0 %2041, %v1743
  %v2043 = vpop.permute.xlu0 %2042
  %2044 = vset.pattern.permute.xlu0 0
  %2045 = vperm.xlu0 %2044, %v1744
  %v2046 = vpop.permute.xlu0 %2045
  %2047 = vset.pattern.permute.xlu0 0
  %2048 = vperm.xlu0 %2047, %v1745
  %v2049 = vpop.permute.xlu0 %2048
  %2050 = vset.pattern.permute.xlu0 0
  %2051 = vperm.xlu0 %2050, %v1746
  %v2052 = vpop.permute.xlu0 %2051
  %2053 = vset.pattern.permute.xlu0 0
  %2054 = vperm.xlu0 %2053, %v1747
  %v2055 = vpop.permute.xlu0 %2054
  %2056 = vset.pattern.permute.xlu0 0
  %2057 = vperm.xlu0 %2056, %v1748
  %v2058 = vpop.permute.xlu0 %2057
  %2059 = vset.pattern.permute.xlu0 0
  %2060 = vperm.xlu0 %2059, %v1749
  %v2061 = vpop.permute.xlu0 %2060
  %2062 = vset.pattern.permute.xlu0 0
  %2063 = vperm.xlu0 %2062, %v1750
  %v2064 = vpop.permute.xlu0 %2063
  %2065 = vset.pattern.permute.xlu0 0
  %2066 = vperm.xlu0 %2065, %v1751
  %v2067 = vpop.permute.xlu0 %2066
  %2068 = vset.pattern.permute.xlu0 0
  %2069 = vperm.xlu0 %2068, %v1752
  %v2070 = vpop.permute.xlu0 %2069
  %2071 = vset.pattern.permute.xlu0 0
  %2072 = vperm.xlu0 %2071, %v1753
  %v2073 = vpop.permute.xlu0 %2072
  %2074 = vset.pattern.permute.xlu0 0
  %2075 = vperm.xlu0 %2074, %v1754
  %v2076 = vpop.permute.xlu0 %2075
  %2077 = vset.pattern.permute.xlu0 0
  %2078 = vperm.xlu0 %2077, %v1755
  %v2079 = vpop.permute.xlu0 %2078
  %2080 = vset.pattern.permute.xlu0 0
  %2081 = vperm.xlu0 %2080, %v1756
  %v2082 = vpop.permute.xlu0 %2081
  %2083 = vset.pattern.permute.xlu0 0
  %2084 = vperm.xlu0 %2083, %v1757
  %v2085 = vpop.permute.xlu0 %2084
  %2086 = vset.pattern.permute.xlu0 0
  %2087 = vperm.xlu0 %2086, %v1758
  %v2088 = vpop.permute.xlu0 %2087
  %2089 = vset.pattern.permute.xlu0 0
  %2090 = vperm.xlu0 %2089, %v1759
  %v2091 = vpop.permute.xlu0 %2090
  %2092 = vset.pattern.permute.xlu0 0
  %2093 = vperm.xlu0 %2092, %v1760
  %v2094 = vpop.permute.xlu0 %2093
  %2095 = vset.pattern.permute.xlu0 0
  %2096 = vperm.xlu0 %2095, %v1761
  %v2097 = vpop.permute.xlu0 %2096
  %2098 = vset.pattern.permute.xlu0 0
  %2099 = vperm.xlu0 %2098, %v1762
  %v2100 = vpop.permute.xlu0 %2099
  %2101 = vset.pattern.permute.xlu0 0
  %2102 = vperm.xlu0 %2101, %v1763
  %v2103 = vpop.permute.xlu0 %2102
  %2104 = vset.pattern.permute.xlu0 0
  %2105 = vperm.xlu0 %2104, %v1764
  %v2106 = vpop.permute.xlu0 %2105
  %2107 = vset.pattern.permute.xlu0 0
  %2108 = vperm.xlu0 %2107, %v1765
  %v2109 = vpop.permute.xlu0 %2108
  %2110 = vset.pattern.permute.xlu0 0
  %2111 = vperm.xlu0 %2110, %v1766
  %v2112 = vpop.permute.xlu0 %2111
  %2113 = vset.pattern.permute.xlu0 0
  %2114 = vperm.xlu0 %2113, %v1767
  %v2115 = vpop.permute.xlu0 %2114
  %2116 = vset.pattern.permute.xlu0 0
  %2117 = vperm.xlu0 %2116, %v1768
  %v2118 = vpop.permute.xlu0 %2117
  %2119 = vset.pattern.permute.xlu0 0
  %2120 = vperm.xlu0 %2119, %v1769
  %v2121 = vpop.permute.xlu0 %2120
  %2122 = vset.pattern.permute.xlu0 0
  %2123 = vperm.xlu0 %2122, %v1770
  %v2124 = vpop.permute.xlu0 %2123
  %2125 = vset.pattern.permute.xlu0 0
  %2126 = vperm.xlu0 %2125, %v1771
  %v2127 = vpop.permute.xlu0 %2126
  %2128 = vset.pattern.permute.xlu0 0
  %2129 = vperm.xlu0 %2128, %v1772
  %v2130 = vpop.permute.xlu0 %2129
  %2131 = vset.pattern.permute.xlu0 0
  %2132 = vperm.xlu0 %2131, %v1773
  %v2133 = vpop.permute.xlu0 %2132
  %2134 = vset.pattern.permute.xlu0 0
  %2135 = vperm.xlu0 %2134, %v1774
  %v2136 = vpop.permute.xlu0 %2135
  %2137 = vset.pattern.permute.xlu0 0
  %2138 = vperm.xlu0 %2137, %v1775
  %v2139 = vpop.permute.xlu0 %2138
  %2140 = vset.pattern.permute.xlu0 0
  %2141 = vperm.xlu0 %2140, %v1776
  %v2142 = vpop.permute.xlu0 %2141
  %2143 = vset.pattern.permute.xlu0 0
  %2144 = vperm.xlu0 %2143, %v1777
  %v2145 = vpop.permute.xlu0 %2144
  %2146 = vset.pattern.permute.xlu0 0
  %2147 = vperm.xlu0 %2146, %v1778
  %v2148 = vpop.permute.xlu0 %2147
  %2149 = vset.pattern.permute.xlu0 0
  %2150 = vperm.xlu0 %2149, %v1779
  %v2151 = vpop.permute.xlu0 %2150
  %2152 = vset.pattern.permute.xlu0 0
  %2153 = vperm.xlu0 %2152, %v1780
  %v2154 = vpop.permute.xlu0 %2153
  %2155 = vset.pattern.permute.xlu0 0
  %2156 = vperm.xlu0 %2155, %v1781
  %v2157 = vpop.permute.xlu0 %2156
  %2158 = vset.pattern.permute.xlu0 0
  %2159 = vperm.xlu0 %2158, %v1782
  %v2160 = vpop.permute.xlu0 %2159
  %2161 = vset.pattern.permute.xlu0 0
  %2162 = vperm.xlu0 %2161, %v1783
  %v2163 = vpop.permute.xlu0 %2162
  %2164 = vset.pattern.permute.xlu0 0
  %2165 = vperm.xlu0 %2164, %v1784
  %v2166 = vpop.permute.xlu0 %2165
  %2167 = vset.pattern.permute.xlu0 0
  %2168 = vperm.xlu0 %2167, %v1785
  %v2169 = vpop.permute.xlu0 %2168
  %2170 = vset.pattern.permute.xlu0 0
  %2171 = vperm.xlu0 %2170, %v1786
  %v2172 = vpop.permute.xlu0 %2171
  %2173 = vset.pattern.permute.xlu0 0
  %2174 = vperm.xlu0 %2173, %v1787
  %v2175 = vpop.permute.xlu0 %2174
  %2176 = vset.pattern.permute.xlu0 0
  %2177 = vperm.xlu0 %2176, %v1788
  %v2178 = vpop.permute.xlu0 %2177
  %2179 = vset.pattern.permute.xlu0 0
  %2180 = vperm.xlu0 %2179, %v1789
  %v2181 = vpop.permute.xlu0 %2180
  %2182 = vset.pattern.permute.xlu0 0
  %2183 = vperm.xlu0 %2182, %v1790
  %v2184 = vpop.permute.xlu0 %2183
  %2185 = vset.pattern.permute.xlu0 0
  %2186 = vperm.xlu0 %2185, %v1791
  %v2187 = vpop.permute.xlu0 %2186
  %2188 = vset.pattern.permute.xlu0 0
  %2189 = vperm.xlu0 %2188, %v1792
  %v2190 = vpop.permute.xlu0 %2189
  %2191 = vset.pattern.permute.xlu0 0
  %2192 = vperm.xlu0 %2191, %v1793
  %v2193 = vpop.permute.xlu0 %2192
  %2194 = vset.pattern.permute.xlu0 0
  %2195 = vperm.xlu0 %2194, %v1794
  %v2196 = vpop.permute.xlu0 %2195
  %2197 = vset.pattern.permute.xlu0 0
  %2198 = vperm.xlu0 %2197, %v1795
  %v2199 = vpop.permute.xlu0 %2198
  %2200 = vset.pattern.permute.xlu0 0
  %2201 = vperm.xlu0 %2200, %v1796
  %v2202 = vpop.permute.xlu0 %2201
  %2203 = vset.pattern.permute.xlu0 0
  %2204 = vperm.xlu0 %2203, %v1797
  %v2205 = vpop.permute.xlu0 %2204
  %2206 = vset.pattern.permute.xlu0 0
  %2207 = vperm.xlu0 %2206, %v1798
  %v2208 = vpop.permute.xlu0 %2207
  %2209 = vset.pattern.permute.xlu0 0
  %2210 = vperm.xlu0 %2209, %v1799
  %v2211 = vpop.permute.xlu0 %2210
  %2212 = vset.pattern.permute.xlu0 0
  %2213 = vperm.xlu0 %2212, %v1800
  %v2214 = vpop.permute.xlu0 %2213
  %2215 = vset.pattern.permute.xlu0 0
  %2216 = vperm.xlu0 %2215, %v1801
  %v2217 = vpop.permute.xlu0 %2216
  %2218 = vset.pattern.permute.xlu0 0
  %2219 = vperm.xlu0 %2218, %v1802
  %v2220 = vpop.permute.xlu0 %2219
  %2221 = vset.pattern.permute.xlu0 0
  %2222 = vperm.xlu0 %2221, %v1803
  %v2223 = vpop.permute.xlu0 %2222
  %2224 = vset.pattern.permute.xlu0 0
  %2225 = vperm.xlu0 %2224, %v1804
  %v2226 = vpop.permute.xlu0 %2225
  %2227 = vset.pattern.permute.xlu0 0
  %2228 = vperm.xlu0 %2227, %v1805
  %v2229 = vpop.permute.xlu0 %2228
  %2230 = vset.pattern.permute.xlu0 0
  %2231 = vperm.xlu0 %2230, %v1806
  %v2232 = vpop.permute.xlu0 %2231
  %2233 = vset.pattern.permute.xlu0 0
  %2234 = vperm.xlu0 %2233, %v1807
  %v2235 = vpop.permute.xlu0 %2234
  %2236 = vset.pattern.permute.xlu0 0
  %2237 = vperm.xlu0 %2236, %v1808
  %v2238 = vpop.permute.xlu0 %2237
  %2239 = vset.pattern.permute.xlu0 0
  %2240 = vperm.xlu0 %2239, %v1809
  %v2241 = vpop.permute.xlu0 %2240
  %2242 = vset.pattern.permute.xlu0 0
  %2243 = vperm.xlu0 %2242, %v1810
  %v2244 = vpop.permute.xlu0 %2243
  %2245 = vset.pattern.permute.xlu0 0
  %2246 = vperm.xlu0 %2245, %v1811
  %v2247 = vpop.permute.xlu0 %2246
  %2248 = vset.pattern.permute.xlu0 0
  %2249 = vperm.xlu0 %2248, %v1812
  %v2250 = vpop.permute.xlu0 %2249
  %2251 = vset.pattern.permute.xlu0 0
  %2252 = vperm.xlu0 %2251, %v1813
  %v2253 = vpop.permute.xlu0 %2252
  %2254 = vset.pattern.permute.xlu0 0
  %2255 = vperm.xlu0 %2254, %v1814
  %v2256 = vpop.permute.xlu0 %2255
  %2257 = vset.pattern.permute.xlu0 0
  %2258 = vperm.xlu0 %2257, %v1815
  %v2259 = vpop.permute.xlu0 %2258
  %2260 = vset.pattern.permute.xlu0 0
  %2261 = vperm.xlu0 %2260, %v1816
  %v2262 = vpop.permute.xlu0 %2261
  %2263 = vset.pattern.permute.xlu0 0
  %2264 = vperm.xlu0 %2263, %v1817
  %v2265 = vpop.permute.xlu0 %2264
  %2266 = vset.pattern.permute.xlu0 0
  %2267 = vperm.xlu0 %2266, %v1818
  %v2268 = vpop.permute.xlu0 %2267
  %2269 = vset.pattern.permute.xlu0 0
  %2270 = vperm.xlu0 %2269, %v1819
  %v2271 = vpop.permute.xlu0 %2270
  %2272 = vset.pattern.permute.xlu0 0
  %2273 = vperm.xlu0 %2272, %v1820
  %v2274 = vpop.permute.xlu0 %2273
  %2275 = vset.pattern.permute.xlu0 0
  %2276 = vperm.xlu0 %2275, %v1821
  %v2277 = vpop.permute.xlu0 %2276
  %2278 = vset.pattern.permute.xlu0 0
  %2279 = vperm.xlu0 %2278, %v1822
  %v2280 = vpop.permute.xlu0 %2279
  %2281 = vset.pattern.permute.xlu0 0
  %2282 = vperm.xlu0 %2281, %v1823
  %v2283 = vpop.permute.xlu0 %2282
  %2284 = vset.pattern.permute.xlu0 0
  %2285 = vperm.xlu0 %2284, %v1824
  %v2286 = vpop.permute.xlu0 %2285
  %2287 = vset.pattern.permute.xlu0 0
  %2288 = vperm.xlu0 %2287, %v1825
  %v2289 = vpop.permute.xlu0 %2288
  %2290 = vset.pattern.permute.xlu0 0
  %2291 = vperm.xlu0 %2290, %v1826
  %v2292 = vpop.permute.xlu0 %2291
  %2293 = vset.pattern.permute.xlu0 0
  %2294 = vperm.xlu0 %2293, %v1827
  %v2295 = vpop.permute.xlu0 %2294
  %2296 = vset.pattern.permute.xlu0 0
  %2297 = vperm.xlu0 %2296, %v1828
  %v2298 = vpop.permute.xlu0 %2297
  %2299 = vset.pattern.permute.xlu0 0
  %2300 = vperm.xlu0 %2299, %v1829
  %v2301 = vpop.permute.xlu0 %2300
  %2302 = vset.pattern.permute.xlu0 0
  %2303 = vperm.xlu0 %2302, %v1830
  %v2304 = vpop.permute.xlu0 %2303
  %2305 = vset.pattern.permute.xlu0 0
  %2306 = vperm.xlu0 %2305, %v1831
  %v2307 = vpop.permute.xlu0 %2306
  %2308 = vset.pattern.permute.xlu0 0
  %2309 = vperm.xlu0 %2308, %v1832
  %v2310 = vpop.permute.xlu0 %2309
  %2311 = vset.pattern.permute.xlu0 0
  %2312 = vperm.xlu0 %2311, %v1833
  %v2313 = vpop.permute.xlu0 %2312
  %2314 = vset.pattern.permute.xlu0 0
  %2315 = vperm.xlu0 %2314, %v1834
  %v2316 = vpop.permute.xlu0 %2315
  %2317 = vset.pattern.permute.xlu0 0
  %2318 = vperm.xlu0 %2317, %v1835
  %v2319 = vpop.permute.xlu0 %2318
  %2320 = vset.pattern.permute.xlu0 0
  %2321 = vperm.xlu0 %2320, %v1836
  %v2322 = vpop.permute.xlu0 %2321
  %2323 = vset.pattern.permute.xlu0 0
  %2324 = vperm.xlu0 %2323, %v1837
  %v2325 = vpop.permute.xlu0 %2324
  %2326 = vset.pattern.permute.xlu0 0
  %2327 = vperm.xlu0 %2326, %v1838
  %v2328 = vpop.permute.xlu0 %2327
  %2329 = vset.pattern.permute.xlu0 0
  %2330 = vperm.xlu0 %2329, %v1839
  %v2331 = vpop.permute.xlu0 %2330
  %2332 = vset.pattern.permute.xlu0 0
  %2333 = vperm.xlu0 %2332, %v1840
  %v2334 = vpop.permute.xlu0 %2333
  %2335 = vset.pattern.permute.xlu0 0
  %2336 = vperm.xlu0 %2335, %v1841
  %v2337 = vpop.permute.xlu0 %2336
  %2338 = vset.pattern.permute.xlu0 0
  %2339 = vperm.xlu0 %2338, %v1842
  %v2340 = vpop.permute.xlu0 %2339
  %2341 = vset.pattern.permute.xlu0 0
  %2342 = vperm.xlu0 %2341, %v1843
  %v2343 = vpop.permute.xlu0 %2342
  %2344 = vset.pattern.permute.xlu0 0
  %2345 = vperm.xlu0 %2344, %v1844
  %v2346 = vpop.permute.xlu0 %2345
  %2347 = vset.pattern.permute.xlu0 0
  %2348 = vperm.xlu0 %2347, %v1845
  %v2349 = vpop.permute.xlu0 %2348
  %2350 = vset.pattern.permute.xlu0 0
  %2351 = vperm.xlu0 %2350, %v1846
  %v2352 = vpop.permute.xlu0 %2351
  %2353 = vset.pattern.permute.xlu0 0
  %2354 = vperm.xlu0 %2353, %v1847
  %v2355 = vpop.permute.xlu0 %2354
  %2356 = vset.pattern.permute.xlu0 0
  %2357 = vperm.xlu0 %2356, %v1848
  %v2358 = vpop.permute.xlu0 %2357
  %2359 = vset.pattern.permute.xlu0 0
  %2360 = vperm.xlu0 %2359, %v1849
  %v2361 = vpop.permute.xlu0 %2360
  %v2362 = vlaneseq
  %v2363 = vshrl.u32 %v2362, 7
  %v2364 = vsub.s32 %v440, %v2363
  %v2365 = vrot.slane %v1980, %v2364
  %v2366 = vlaneseq
  %v2367 = vshrl.u32 %v2366, 7
  %v2368 = vsub.s32 %v445, %v2367
  %v2369 = vrot.slane %v1983, %v2368
  %v2370 = vsel %vm450, %v2369, %v2365
  %v2371 = vlaneseq
  %v2372 = vshrl.u32 %v2371, 7
  %v2373 = vsub.s32 %v452, %v2372
  %v2374 = vrot.slane %v1986, %v2373
  %v2375 = vsel %vm457, %v2374, %v2370
  %v2376 = vlaneseq
  %v2377 = vshrl.u32 %v2376, 7
  %v2378 = vsub.s32 %v459, %v2377
  %v2379 = vrot.slane %v1989, %v2378
  %v2380 = vsel %vm464, %v2379, %v2375
  %v2381 = vlaneseq
  %v2382 = vshrl.u32 %v2381, 7
  %v2383 = vsub.s32 %v440, %v2382
  %v2384 = vrot.slane %v1992, %v2383
  %v2385 = vlaneseq
  %v2386 = vshrl.u32 %v2385, 7
  %v2387 = vsub.s32 %v445, %v2386
  %v2388 = vrot.slane %v1995, %v2387
  %v2389 = vsel %vm450, %v2388, %v2384
  %v2390 = vlaneseq
  %v2391 = vshrl.u32 %v2390, 7
  %v2392 = vsub.s32 %v452, %v2391
  %v2393 = vrot.slane %v1998, %v2392
  %v2394 = vsel %vm457, %v2393, %v2389
  %v2395 = vlaneseq
  %v2396 = vshrl.u32 %v2395, 7
  %v2397 = vsub.s32 %v459, %v2396
  %v2398 = vrot.slane %v2001, %v2397
  %v2399 = vsel %vm464, %v2398, %v2394
  %v2400 = vlaneseq
  %v2401 = vshrl.u32 %v2400, 7
  %v2402 = vsub.s32 %v440, %v2401
  %v2403 = vrot.slane %v2004, %v2402
  %v2404 = vlaneseq
  %v2405 = vshrl.u32 %v2404, 7
  %v2406 = vsub.s32 %v445, %v2405
  %v2407 = vrot.slane %v2007, %v2406
  %v2408 = vsel %vm450, %v2407, %v2403
  %v2409 = vlaneseq
  %v2410 = vshrl.u32 %v2409, 7
  %v2411 = vsub.s32 %v452, %v2410
  %v2412 = vrot.slane %v2010, %v2411
  %v2413 = vsel %vm457, %v2412, %v2408
  %v2414 = vlaneseq
  %v2415 = vshrl.u32 %v2414, 7
  %v2416 = vsub.s32 %v459, %v2415
  %v2417 = vrot.slane %v2013, %v2416
  %v2418 = vsel %vm464, %v2417, %v2413
  %v2419 = vlaneseq
  %v2420 = vshrl.u32 %v2419, 7
  %v2421 = vsub.s32 %v440, %v2420
  %v2422 = vrot.slane %v2016, %v2421
  %v2423 = vlaneseq
  %v2424 = vshrl.u32 %v2423, 7
  %v2425 = vsub.s32 %v445, %v2424
  %v2426 = vrot.slane %v2019, %v2425
  %v2427 = vsel %vm450, %v2426, %v2422
  %v2428 = vlaneseq
  %v2429 = vshrl.u32 %v2428, 7
  %v2430 = vsub.s32 %v452, %v2429
  %v2431 = vrot.slane %v2022, %v2430
  %v2432 = vsel %vm457, %v2431, %v2427
  %v2433 = vlaneseq
  %v2434 = vshrl.u32 %v2433, 7
  %v2435 = vsub.s32 %v459, %v2434
  %v2436 = vrot.slane %v2025, %v2435
  %v2437 = vsel %vm464, %v2436, %v2432
  %v2438 = vlaneseq
  %v2439 = vshrl.u32 %v2438, 7
  %v2440 = vsub.s32 %v440, %v2439
  %v2441 = vrot.slane %v2028, %v2440
  %v2442 = vlaneseq
  %v2443 = vshrl.u32 %v2442, 7
  %v2444 = vsub.s32 %v445, %v2443
  %v2445 = vrot.slane %v2031, %v2444
  %v2446 = vsel %vm450, %v2445, %v2441
  %v2447 = vlaneseq
  %v2448 = vshrl.u32 %v2447, 7
  %v2449 = vsub.s32 %v452, %v2448
  %v2450 = vrot.slane %v2034, %v2449
  %v2451 = vsel %vm457, %v2450, %v2446
  %v2452 = vlaneseq
  %v2453 = vshrl.u32 %v2452, 7
  %v2454 = vsub.s32 %v459, %v2453
  %v2455 = vrot.slane %v2037, %v2454
  %v2456 = vsel %vm464, %v2455, %v2451
  %v2457 = vlaneseq
  %v2458 = vshrl.u32 %v2457, 7
  %v2459 = vsub.s32 %v440, %v2458
  %v2460 = vrot.slane %v2040, %v2459
  %v2461 = vlaneseq
  %v2462 = vshrl.u32 %v2461, 7
  %v2463 = vsub.s32 %v445, %v2462
  %v2464 = vrot.slane %v2043, %v2463
  %v2465 = vsel %vm450, %v2464, %v2460
  %v2466 = vlaneseq
  %v2467 = vshrl.u32 %v2466, 7
  %v2468 = vsub.s32 %v452, %v2467
  %v2469 = vrot.slane %v2046, %v2468
  %v2470 = vsel %vm457, %v2469, %v2465
  %v2471 = vlaneseq
  %v2472 = vshrl.u32 %v2471, 7
  %v2473 = vsub.s32 %v459, %v2472
  %v2474 = vrot.slane %v2049, %v2473
  %v2475 = vsel %vm464, %v2474, %v2470
  %v2476 = vlaneseq
  %v2477 = vshrl.u32 %v2476, 7
  %v2478 = vsub.s32 %v440, %v2477
  %v2479 = vrot.slane %v2052, %v2478
  %v2480 = vlaneseq
  %v2481 = vshrl.u32 %v2480, 7
  %v2482 = vsub.s32 %v445, %v2481
  %v2483 = vrot.slane %v2055, %v2482
  %v2484 = vsel %vm450, %v2483, %v2479
  %v2485 = vlaneseq
  %v2486 = vshrl.u32 %v2485, 7
  %v2487 = vsub.s32 %v452, %v2486
  %v2488 = vrot.slane %v2058, %v2487
  %v2489 = vsel %vm457, %v2488, %v2484
  %v2490 = vlaneseq
  %v2491 = vshrl.u32 %v2490, 7
  %v2492 = vsub.s32 %v459, %v2491
  %v2493 = vrot.slane %v2061, %v2492
  %v2494 = vsel %vm464, %v2493, %v2489
  %v2495 = vlaneseq
  %v2496 = vshrl.u32 %v2495, 7
  %v2497 = vsub.s32 %v440, %v2496
  %v2498 = vrot.slane %v2064, %v2497
  %v2499 = vlaneseq
  %v2500 = vshrl.u32 %v2499, 7
  %v2501 = vsub.s32 %v445, %v2500
  %v2502 = vrot.slane %v2067, %v2501
  %v2503 = vsel %vm450, %v2502, %v2498
  %v2504 = vlaneseq
  %v2505 = vshrl.u32 %v2504, 7
  %v2506 = vsub.s32 %v452, %v2505
  %v2507 = vrot.slane %v2070, %v2506
  %v2508 = vsel %vm457, %v2507, %v2503
  %v2509 = vlaneseq
  %v2510 = vshrl.u32 %v2509, 7
  %v2511 = vsub.s32 %v459, %v2510
  %v2512 = vrot.slane %v2073, %v2511
  %v2513 = vsel %vm464, %v2512, %v2508
  %v2514 = vlaneseq
  %v2515 = vshrl.u32 %v2514, 7
  %v2516 = vsub.s32 %v440, %v2515
  %v2517 = vrot.slane %v2076, %v2516
  %v2518 = vlaneseq
  %v2519 = vshrl.u32 %v2518, 7
  %v2520 = vsub.s32 %v445, %v2519
  %v2521 = vrot.slane %v2079, %v2520
  %v2522 = vsel %vm450, %v2521, %v2517
  %v2523 = vlaneseq
  %v2524 = vshrl.u32 %v2523, 7
  %v2525 = vsub.s32 %v452, %v2524
  %v2526 = vrot.slane %v2082, %v2525
  %v2527 = vsel %vm457, %v2526, %v2522
  %v2528 = vlaneseq
  %v2529 = vshrl.u32 %v2528, 7
  %v2530 = vsub.s32 %v459, %v2529
  %v2531 = vrot.slane %v2085, %v2530
  %v2532 = vsel %vm464, %v2531, %v2527
  %v2533 = vlaneseq
  %v2534 = vshrl.u32 %v2533, 7
  %v2535 = vsub.s32 %v440, %v2534
  %v2536 = vrot.slane %v2088, %v2535
  %v2537 = vlaneseq
  %v2538 = vshrl.u32 %v2537, 7
  %v2539 = vsub.s32 %v445, %v2538
  %v2540 = vrot.slane %v2091, %v2539
  %v2541 = vsel %vm450, %v2540, %v2536
  %v2542 = vlaneseq
  %v2543 = vshrl.u32 %v2542, 7
  %v2544 = vsub.s32 %v452, %v2543
  %v2545 = vrot.slane %v2094, %v2544
  %v2546 = vsel %vm457, %v2545, %v2541
  %v2547 = vlaneseq
  %v2548 = vshrl.u32 %v2547, 7
  %v2549 = vsub.s32 %v459, %v2548
  %v2550 = vrot.slane %v2097, %v2549
  %v2551 = vsel %vm464, %v2550, %v2546
  %v2552 = vlaneseq
  %v2553 = vshrl.u32 %v2552, 7
  %v2554 = vsub.s32 %v440, %v2553
  %v2555 = vrot.slane %v2100, %v2554
  %v2556 = vlaneseq
  %v2557 = vshrl.u32 %v2556, 7
  %v2558 = vsub.s32 %v445, %v2557
  %v2559 = vrot.slane %v2103, %v2558
  %v2560 = vsel %vm450, %v2559, %v2555
  %v2561 = vlaneseq
  %v2562 = vshrl.u32 %v2561, 7
  %v2563 = vsub.s32 %v452, %v2562
  %v2564 = vrot.slane %v2106, %v2563
  %v2565 = vsel %vm457, %v2564, %v2560
  %v2566 = vlaneseq
  %v2567 = vshrl.u32 %v2566, 7
  %v2568 = vsub.s32 %v459, %v2567
  %v2569 = vrot.slane %v2109, %v2568
  %v2570 = vsel %vm464, %v2569, %v2565
  %v2571 = vlaneseq
  %v2572 = vshrl.u32 %v2571, 7
  %v2573 = vsub.s32 %v440, %v2572
  %v2574 = vrot.slane %v2112, %v2573
  %v2575 = vlaneseq
  %v2576 = vshrl.u32 %v2575, 7
  %v2577 = vsub.s32 %v445, %v2576
  %v2578 = vrot.slane %v2115, %v2577
  %v2579 = vsel %vm450, %v2578, %v2574
  %v2580 = vlaneseq
  %v2581 = vshrl.u32 %v2580, 7
  %v2582 = vsub.s32 %v452, %v2581
  %v2583 = vrot.slane %v2118, %v2582
  %v2584 = vsel %vm457, %v2583, %v2579
  %v2585 = vlaneseq
  %v2586 = vshrl.u32 %v2585, 7
  %v2587 = vsub.s32 %v459, %v2586
  %v2588 = vrot.slane %v2121, %v2587
  %v2589 = vsel %vm464, %v2588, %v2584
  %v2590 = vlaneseq
  %v2591 = vshrl.u32 %v2590, 7
  %v2592 = vsub.s32 %v440, %v2591
  %v2593 = vrot.slane %v2124, %v2592
  %v2594 = vlaneseq
  %v2595 = vshrl.u32 %v2594, 7
  %v2596 = vsub.s32 %v445, %v2595
  %v2597 = vrot.slane %v2127, %v2596
  %v2598 = vsel %vm450, %v2597, %v2593
  %v2599 = vlaneseq
  %v2600 = vshrl.u32 %v2599, 7
  %v2601 = vsub.s32 %v452, %v2600
  %v2602 = vrot.slane %v2130, %v2601
  %v2603 = vsel %vm457, %v2602, %v2598
  %v2604 = vlaneseq
  %v2605 = vshrl.u32 %v2604, 7
  %v2606 = vsub.s32 %v459, %v2605
  %v2607 = vrot.slane %v2133, %v2606
  %v2608 = vsel %vm464, %v2607, %v2603
  %v2609 = vlaneseq
  %v2610 = vshrl.u32 %v2609, 7
  %v2611 = vsub.s32 %v440, %v2610
  %v2612 = vrot.slane %v2136, %v2611
  %v2613 = vlaneseq
  %v2614 = vshrl.u32 %v2613, 7
  %v2615 = vsub.s32 %v445, %v2614
  %v2616 = vrot.slane %v2139, %v2615
  %v2617 = vsel %vm450, %v2616, %v2612
  %v2618 = vlaneseq
  %v2619 = vshrl.u32 %v2618, 7
  %v2620 = vsub.s32 %v452, %v2619
  %v2621 = vrot.slane %v2142, %v2620
  %v2622 = vsel %vm457, %v2621, %v2617
  %v2623 = vlaneseq
  %v2624 = vshrl.u32 %v2623, 7
  %v2625 = vsub.s32 %v459, %v2624
  %v2626 = vrot.slane %v2145, %v2625
  %v2627 = vsel %vm464, %v2626, %v2622
  %v2628 = vlaneseq
  %v2629 = vshrl.u32 %v2628, 7
  %v2630 = vsub.s32 %v440, %v2629
  %v2631 = vrot.slane %v2148, %v2630
  %v2632 = vlaneseq
  %v2633 = vshrl.u32 %v2632, 7
  %v2634 = vsub.s32 %v445, %v2633
  %v2635 = vrot.slane %v2151, %v2634
  %v2636 = vsel %vm450, %v2635, %v2631
  %v2637 = vlaneseq
  %v2638 = vshrl.u32 %v2637, 7
  %v2639 = vsub.s32 %v452, %v2638
  %v2640 = vrot.slane %v2154, %v2639
  %v2641 = vsel %vm457, %v2640, %v2636
  %v2642 = vlaneseq
  %v2643 = vshrl.u32 %v2642, 7
  %v2644 = vsub.s32 %v459, %v2643
  %v2645 = vrot.slane %v2157, %v2644
  %v2646 = vsel %vm464, %v2645, %v2641
  %v2647 = vlaneseq
  %v2648 = vshrl.u32 %v2647, 7
  %v2649 = vsub.s32 %v440, %v2648
  %v2650 = vrot.slane %v2160, %v2649
  %v2651 = vlaneseq
  %v2652 = vshrl.u32 %v2651, 7
  %v2653 = vsub.s32 %v445, %v2652
  %v2654 = vrot.slane %v2163, %v2653
  %v2655 = vsel %vm450, %v2654, %v2650
  %v2656 = vlaneseq
  %v2657 = vshrl.u32 %v2656, 7
  %v2658 = vsub.s32 %v452, %v2657
  %v2659 = vrot.slane %v2166, %v2658
  %v2660 = vsel %vm457, %v2659, %v2655
  %v2661 = vlaneseq
  %v2662 = vshrl.u32 %v2661, 7
  %v2663 = vsub.s32 %v459, %v2662
  %v2664 = vrot.slane %v2169, %v2663
  %v2665 = vsel %vm464, %v2664, %v2660
  %v2666 = vlaneseq
  %v2667 = vshrl.u32 %v2666, 7
  %v2668 = vsub.s32 %v440, %v2667
  %v2669 = vrot.slane %v2172, %v2668
  %v2670 = vlaneseq
  %v2671 = vshrl.u32 %v2670, 7
  %v2672 = vsub.s32 %v445, %v2671
  %v2673 = vrot.slane %v2175, %v2672
  %v2674 = vsel %vm450, %v2673, %v2669
  %v2675 = vlaneseq
  %v2676 = vshrl.u32 %v2675, 7
  %v2677 = vsub.s32 %v452, %v2676
  %v2678 = vrot.slane %v2178, %v2677
  %v2679 = vsel %vm457, %v2678, %v2674
  %v2680 = vlaneseq
  %v2681 = vshrl.u32 %v2680, 7
  %v2682 = vsub.s32 %v459, %v2681
  %v2683 = vrot.slane %v2181, %v2682
  %v2684 = vsel %vm464, %v2683, %v2679
  %v2685 = vlaneseq
  %v2686 = vshrl.u32 %v2685, 7
  %v2687 = vsub.s32 %v440, %v2686
  %v2688 = vrot.slane %v2184, %v2687
  %v2689 = vlaneseq
  %v2690 = vshrl.u32 %v2689, 7
  %v2691 = vsub.s32 %v445, %v2690
  %v2692 = vrot.slane %v2187, %v2691
  %v2693 = vsel %vm450, %v2692, %v2688
  %v2694 = vlaneseq
  %v2695 = vshrl.u32 %v2694, 7
  %v2696 = vsub.s32 %v452, %v2695
  %v2697 = vrot.slane %v2190, %v2696
  %v2698 = vsel %vm457, %v2697, %v2693
  %v2699 = vlaneseq
  %v2700 = vshrl.u32 %v2699, 7
  %v2701 = vsub.s32 %v459, %v2700
  %v2702 = vrot.slane %v2193, %v2701
  %v2703 = vsel %vm464, %v2702, %v2698
  %v2704 = vlaneseq
  %v2705 = vshrl.u32 %v2704, 7
  %v2706 = vsub.s32 %v440, %v2705
  %v2707 = vrot.slane %v2196, %v2706
  %v2708 = vlaneseq
  %v2709 = vshrl.u32 %v2708, 7
  %v2710 = vsub.s32 %v445, %v2709
  %v2711 = vrot.slane %v2199, %v2710
  %v2712 = vsel %vm450, %v2711, %v2707
  %v2713 = vlaneseq
  %v2714 = vshrl.u32 %v2713, 7
  %v2715 = vsub.s32 %v452, %v2714
  %v2716 = vrot.slane %v2202, %v2715
  %v2717 = vsel %vm457, %v2716, %v2712
  %v2718 = vlaneseq
  %v2719 = vshrl.u32 %v2718, 7
  %v2720 = vsub.s32 %v459, %v2719
  %v2721 = vrot.slane %v2205, %v2720
  %v2722 = vsel %vm464, %v2721, %v2717
  %v2723 = vlaneseq
  %v2724 = vshrl.u32 %v2723, 7
  %v2725 = vsub.s32 %v440, %v2724
  %v2726 = vrot.slane %v2208, %v2725
  %v2727 = vlaneseq
  %v2728 = vshrl.u32 %v2727, 7
  %v2729 = vsub.s32 %v445, %v2728
  %v2730 = vrot.slane %v2211, %v2729
  %v2731 = vsel %vm450, %v2730, %v2726
  %v2732 = vlaneseq
  %v2733 = vshrl.u32 %v2732, 7
  %v2734 = vsub.s32 %v452, %v2733
  %v2735 = vrot.slane %v2214, %v2734
  %v2736 = vsel %vm457, %v2735, %v2731
  %v2737 = vlaneseq
  %v2738 = vshrl.u32 %v2737, 7
  %v2739 = vsub.s32 %v459, %v2738
  %v2740 = vrot.slane %v2217, %v2739
  %v2741 = vsel %vm464, %v2740, %v2736
  %v2742 = vlaneseq
  %v2743 = vshrl.u32 %v2742, 7
  %v2744 = vsub.s32 %v440, %v2743
  %v2745 = vrot.slane %v2220, %v2744
  %v2746 = vlaneseq
  %v2747 = vshrl.u32 %v2746, 7
  %v2748 = vsub.s32 %v445, %v2747
  %v2749 = vrot.slane %v2223, %v2748
  %v2750 = vsel %vm450, %v2749, %v2745
  %v2751 = vlaneseq
  %v2752 = vshrl.u32 %v2751, 7
  %v2753 = vsub.s32 %v452, %v2752
  %v2754 = vrot.slane %v2226, %v2753
  %v2755 = vsel %vm457, %v2754, %v2750
  %v2756 = vlaneseq
  %v2757 = vshrl.u32 %v2756, 7
  %v2758 = vsub.s32 %v459, %v2757
  %v2759 = vrot.slane %v2229, %v2758
  %v2760 = vsel %vm464, %v2759, %v2755
  %v2761 = vlaneseq
  %v2762 = vshrl.u32 %v2761, 7
  %v2763 = vsub.s32 %v440, %v2762
  %v2764 = vrot.slane %v2232, %v2763
  %v2765 = vlaneseq
  %v2766 = vshrl.u32 %v2765, 7
  %v2767 = vsub.s32 %v445, %v2766
  %v2768 = vrot.slane %v2235, %v2767
  %v2769 = vsel %vm450, %v2768, %v2764
  %v2770 = vlaneseq
  %v2771 = vshrl.u32 %v2770, 7
  %v2772 = vsub.s32 %v452, %v2771
  %v2773 = vrot.slane %v2238, %v2772
  %v2774 = vsel %vm457, %v2773, %v2769
  %v2775 = vlaneseq
  %v2776 = vshrl.u32 %v2775, 7
  %v2777 = vsub.s32 %v459, %v2776
  %v2778 = vrot.slane %v2241, %v2777
  %v2779 = vsel %vm464, %v2778, %v2774
  %v2780 = vlaneseq
  %v2781 = vshrl.u32 %v2780, 7
  %v2782 = vsub.s32 %v440, %v2781
  %v2783 = vrot.slane %v2244, %v2782
  %v2784 = vlaneseq
  %v2785 = vshrl.u32 %v2784, 7
  %v2786 = vsub.s32 %v445, %v2785
  %v2787 = vrot.slane %v2247, %v2786
  %v2788 = vsel %vm450, %v2787, %v2783
  %v2789 = vlaneseq
  %v2790 = vshrl.u32 %v2789, 7
  %v2791 = vsub.s32 %v452, %v2790
  %v2792 = vrot.slane %v2250, %v2791
  %v2793 = vsel %vm457, %v2792, %v2788
  %v2794 = vlaneseq
  %v2795 = vshrl.u32 %v2794, 7
  %v2796 = vsub.s32 %v459, %v2795
  %v2797 = vrot.slane %v2253, %v2796
  %v2798 = vsel %vm464, %v2797, %v2793
  %v2799 = vlaneseq
  %v2800 = vshrl.u32 %v2799, 7
  %v2801 = vsub.s32 %v440, %v2800
  %v2802 = vrot.slane %v2256, %v2801
  %v2803 = vlaneseq
  %v2804 = vshrl.u32 %v2803, 7
  %v2805 = vsub.s32 %v445, %v2804
  %v2806 = vrot.slane %v2259, %v2805
  %v2807 = vsel %vm450, %v2806, %v2802
  %v2808 = vlaneseq
  %v2809 = vshrl.u32 %v2808, 7
  %v2810 = vsub.s32 %v452, %v2809
  %v2811 = vrot.slane %v2262, %v2810
  %v2812 = vsel %vm457, %v2811, %v2807
  %v2813 = vlaneseq
  %v2814 = vshrl.u32 %v2813, 7
  %v2815 = vsub.s32 %v459, %v2814
  %v2816 = vrot.slane %v2265, %v2815
  %v2817 = vsel %vm464, %v2816, %v2812
  %v2818 = vlaneseq
  %v2819 = vshrl.u32 %v2818, 7
  %v2820 = vsub.s32 %v440, %v2819
  %v2821 = vrot.slane %v2268, %v2820
  %v2822 = vlaneseq
  %v2823 = vshrl.u32 %v2822, 7
  %v2824 = vsub.s32 %v445, %v2823
  %v2825 = vrot.slane %v2271, %v2824
  %v2826 = vsel %vm450, %v2825, %v2821
  %v2827 = vlaneseq
  %v2828 = vshrl.u32 %v2827, 7
  %v2829 = vsub.s32 %v452, %v2828
  %v2830 = vrot.slane %v2274, %v2829
  %v2831 = vsel %vm457, %v2830, %v2826
  %v2832 = vlaneseq
  %v2833 = vshrl.u32 %v2832, 7
  %v2834 = vsub.s32 %v459, %v2833
  %v2835 = vrot.slane %v2277, %v2834
  %v2836 = vsel %vm464, %v2835, %v2831
  %v2837 = vlaneseq
  %v2838 = vshrl.u32 %v2837, 7
  %v2839 = vsub.s32 %v440, %v2838
  %v2840 = vrot.slane %v2280, %v2839
  %v2841 = vlaneseq
  %v2842 = vshrl.u32 %v2841, 7
  %v2843 = vsub.s32 %v445, %v2842
  %v2844 = vrot.slane %v2283, %v2843
  %v2845 = vsel %vm450, %v2844, %v2840
  %v2846 = vlaneseq
  %v2847 = vshrl.u32 %v2846, 7
  %v2848 = vsub.s32 %v452, %v2847
  %v2849 = vrot.slane %v2286, %v2848
  %v2850 = vsel %vm457, %v2849, %v2845
  %v2851 = vlaneseq
  %v2852 = vshrl.u32 %v2851, 7
  %v2853 = vsub.s32 %v459, %v2852
  %v2854 = vrot.slane %v2289, %v2853
  %v2855 = vsel %vm464, %v2854, %v2850
  %v2856 = vlaneseq
  %v2857 = vshrl.u32 %v2856, 7
  %v2858 = vsub.s32 %v440, %v2857
  %v2859 = vrot.slane %v2292, %v2858
  %v2860 = vlaneseq
  %v2861 = vshrl.u32 %v2860, 7
  %v2862 = vsub.s32 %v445, %v2861
  %v2863 = vrot.slane %v2295, %v2862
  %v2864 = vsel %vm450, %v2863, %v2859
  %v2865 = vlaneseq
  %v2866 = vshrl.u32 %v2865, 7
  %v2867 = vsub.s32 %v452, %v2866
  %v2868 = vrot.slane %v2298, %v2867
  %v2869 = vsel %vm457, %v2868, %v2864
  %v2870 = vlaneseq
  %v2871 = vshrl.u32 %v2870, 7
  %v2872 = vsub.s32 %v459, %v2871
  %v2873 = vrot.slane %v2301, %v2872
  %v2874 = vsel %vm464, %v2873, %v2869
  %v2875 = vlaneseq
  %v2876 = vshrl.u32 %v2875, 7
  %v2877 = vsub.s32 %v440, %v2876
  %v2878 = vrot.slane %v2304, %v2877
  %v2879 = vlaneseq
  %v2880 = vshrl.u32 %v2879, 7
  %v2881 = vsub.s32 %v445, %v2880
  %v2882 = vrot.slane %v2307, %v2881
  %v2883 = vsel %vm450, %v2882, %v2878
  %v2884 = vlaneseq
  %v2885 = vshrl.u32 %v2884, 7
  %v2886 = vsub.s32 %v452, %v2885
  %v2887 = vrot.slane %v2310, %v2886
  %v2888 = vsel %vm457, %v2887, %v2883
  %v2889 = vlaneseq
  %v2890 = vshrl.u32 %v2889, 7
  %v2891 = vsub.s32 %v459, %v2890
  %v2892 = vrot.slane %v2313, %v2891
  %v2893 = vsel %vm464, %v2892, %v2888
  %v2894 = vlaneseq
  %v2895 = vshrl.u32 %v2894, 7
  %v2896 = vsub.s32 %v440, %v2895
  %v2897 = vrot.slane %v2316, %v2896
  %v2898 = vlaneseq
  %v2899 = vshrl.u32 %v2898, 7
  %v2900 = vsub.s32 %v445, %v2899
  %v2901 = vrot.slane %v2319, %v2900
  %v2902 = vsel %vm450, %v2901, %v2897
  %v2903 = vlaneseq
  %v2904 = vshrl.u32 %v2903, 7
  %v2905 = vsub.s32 %v452, %v2904
  %v2906 = vrot.slane %v2322, %v2905
  %v2907 = vsel %vm457, %v2906, %v2902
  %v2908 = vlaneseq
  %v2909 = vshrl.u32 %v2908, 7
  %v2910 = vsub.s32 %v459, %v2909
  %v2911 = vrot.slane %v2325, %v2910
  %v2912 = vsel %vm464, %v2911, %v2907
  %v2913 = vlaneseq
  %v2914 = vshrl.u32 %v2913, 7
  %v2915 = vsub.s32 %v440, %v2914
  %v2916 = vrot.slane %v2328, %v2915
  %v2917 = vlaneseq
  %v2918 = vshrl.u32 %v2917, 7
  %v2919 = vsub.s32 %v445, %v2918
  %v2920 = vrot.slane %v2331, %v2919
  %v2921 = vsel %vm450, %v2920, %v2916
  %v2922 = vlaneseq
  %v2923 = vshrl.u32 %v2922, 7
  %v2924 = vsub.s32 %v452, %v2923
  %v2925 = vrot.slane %v2334, %v2924
  %v2926 = vsel %vm457, %v2925, %v2921
  %v2927 = vlaneseq
  %v2928 = vshrl.u32 %v2927, 7
  %v2929 = vsub.s32 %v459, %v2928
  %v2930 = vrot.slane %v2337, %v2929
  %v2931 = vsel %vm464, %v2930, %v2926
  %v2932 = vlaneseq
  %v2933 = vshrl.u32 %v2932, 7
  %v2934 = vsub.s32 %v440, %v2933
  %v2935 = vrot.slane %v2340, %v2934
  %v2936 = vlaneseq
  %v2937 = vshrl.u32 %v2936, 7
  %v2938 = vsub.s32 %v445, %v2937
  %v2939 = vrot.slane %v2343, %v2938
  %v2940 = vsel %vm450, %v2939, %v2935
  %v2941 = vlaneseq
  %v2942 = vshrl.u32 %v2941, 7
  %v2943 = vsub.s32 %v452, %v2942
  %v2944 = vrot.slane %v2346, %v2943
  %v2945 = vsel %vm457, %v2944, %v2940
  %v2946 = vlaneseq
  %v2947 = vshrl.u32 %v2946, 7
  %v2948 = vsub.s32 %v459, %v2947
  %v2949 = vrot.slane %v2349, %v2948
  %v2950 = vsel %vm464, %v2949, %v2945
  %v2951 = vlaneseq
  %v2952 = vshrl.u32 %v2951, 7
  %v2953 = vsub.s32 %v440, %v2952
  %v2954 = vrot.slane %v2352, %v2953
  %v2955 = vlaneseq
  %v2956 = vshrl.u32 %v2955, 7
  %v2957 = vsub.s32 %v445, %v2956
  %v2958 = vrot.slane %v2355, %v2957
  %v2959 = vsel %vm450, %v2958, %v2954
  %v2960 = vlaneseq
  %v2961 = vshrl.u32 %v2960, 7
  %v2962 = vsub.s32 %v452, %v2961
  %v2963 = vrot.slane %v2358, %v2962
  %v2964 = vsel %vm457, %v2963, %v2959
  %v2965 = vlaneseq
  %v2966 = vshrl.u32 %v2965, 7
  %v2967 = vsub.s32 %v459, %v2966
  %v2968 = vrot.slane %v2361, %v2967
  %v2969 = vsel %vm464, %v2968, %v2964
  %v2970 = vsel %vm599, %v2399, %v2380
  %v2971 = vsel %vm601, %v2418, %v2970
  %v2972 = vsel %vm603, %v2437, %v2971
  %v2973 = vsel %vm599, %v2475, %v2456
  %v2974 = vsel %vm601, %v2494, %v2973
  %v2975 = vsel %vm603, %v2513, %v2974
  %v2976 = vsel %vm599, %v2551, %v2532
  %v2977 = vsel %vm601, %v2570, %v2976
  %v2978 = vsel %vm603, %v2589, %v2977
  %v2979 = vsel %vm599, %v2627, %v2608
  %v2980 = vsel %vm601, %v2646, %v2979
  %v2981 = vsel %vm603, %v2665, %v2980
  %v2982 = vsel %vm599, %v2703, %v2684
  %v2983 = vsel %vm601, %v2722, %v2982
  %v2984 = vsel %vm603, %v2741, %v2983
  %v2985 = vsel %vm599, %v2779, %v2760
  %v2986 = vsel %vm601, %v2798, %v2985
  %v2987 = vsel %vm603, %v2817, %v2986
  %v2988 = vsel %vm599, %v2855, %v2836
  %v2989 = vsel %vm601, %v2874, %v2988
  %v2990 = vsel %vm603, %v2893, %v2989
  %v2991 = vsel %vm599, %v2931, %v2912
  %v2992 = vsel %vm601, %v2950, %v2991
  %v2993 = vsel %vm603, %v2969, %v2992
  %vm3002 = vcmask 257024
  %v3003 = vsel %vm3002, %v2972, 0.0
  %3004 = vadd.xlane.f32.xlu0 %v3003
  %v3005 = vpop.xlane.xlu0 %3004
  %v3006 = vsel %vm3002, %v2975, 0.0
  %3007 = vadd.xlane.f32.xlu0 %v3006
  %v3008 = vpop.xlane.xlu0 %3007
  %v3009 = vsel %vm3002, %v2978, 0.0
  %3010 = vadd.xlane.f32.xlu0 %v3009
  %v3011 = vpop.xlane.xlu0 %3010
  %v3012 = vsel %vm3002, %v2981, 0.0
  %3013 = vadd.xlane.f32.xlu0 %v3012
  %v3014 = vpop.xlane.xlu0 %3013
  %v3015 = vsel %vm3002, %v2984, 0.0
  %3016 = vadd.xlane.f32.xlu0 %v3015
  %v3017 = vpop.xlane.xlu0 %3016
  %v3018 = vsel %vm3002, %v2987, 0.0
  %3019 = vadd.xlane.f32.xlu0 %v3018
  %v3020 = vpop.xlane.xlu0 %3019
  %v3021 = vsel %vm3002, %v2990, 0.0
  %3022 = vadd.xlane.f32.xlu0 %v3021
  %v3023 = vpop.xlane.xlu0 %3022
  %v3024 = vsel %vm3002, %v2993, 0.0
  %3025 = vadd.xlane.f32.xlu0 %v3024
  %v3026 = vpop.xlane.xlu0 %3025
  %v3028 = vlaneseq
  %v3029 = vshrl.u32 %v3028, 7
  %v3030 = vsub.s32 0, %v3029
  %v3031 = vrot.slane %v983, %v3030
  %3033 = vbcast.lane.b32.xlu0 %v3031, 256
  %v3034 = vpop.permute.xlu0 %3033
  %v3035 = vlaneseq
  %v3036 = vshrl.u32 %v3035, 7
  %v3037 = vsub.s32 1, %v3036
  %v3038 = vrot.slane %v983, %v3037
  %3040 = vbcast.lane.b32.xlu0 %v3038, 256
  %v3041 = vpop.permute.xlu0 %3040
  %v3042 = vlaneseq
  %v3043 = vshrl.u32 %v3042, 7
  %v3044 = vsub.s32 2, %v3043
  %v3045 = vrot.slane %v983, %v3044
  %3047 = vbcast.lane.b32.xlu0 %v3045, 256
  %v3048 = vpop.permute.xlu0 %3047
  %v3049 = vlaneseq
  %v3050 = vshrl.u32 %v3049, 7
  %v3051 = vsub.s32 3, %v3050
  %v3052 = vrot.slane %v983, %v3051
  %3054 = vbcast.lane.b32.xlu0 %v3052, 256
  %v3055 = vpop.permute.xlu0 %3054
  %v3056 = vlaneseq
  %v3057 = vshrl.u32 %v3056, 7
  %v3058 = vsub.s32 4, %v3057
  %v3059 = vrot.slane %v983, %v3058
  %3061 = vbcast.lane.b32.xlu0 %v3059, 256
  %v3062 = vpop.permute.xlu0 %3061
  %v3063 = vlaneseq
  %v3064 = vshrl.u32 %v3063, 7
  %v3065 = vsub.s32 5, %v3064
  %v3066 = vrot.slane %v983, %v3065
  %3068 = vbcast.lane.b32.xlu0 %v3066, 256
  %v3069 = vpop.permute.xlu0 %3068
  %v3070 = vlaneseq
  %v3071 = vshrl.u32 %v3070, 7
  %v3072 = vsub.s32 6, %v3071
  %v3073 = vrot.slane %v983, %v3072
  %3075 = vbcast.lane.b32.xlu0 %v3073, 256
  %v3076 = vpop.permute.xlu0 %3075
  %v3077 = vlaneseq
  %v3078 = vshrl.u32 %v3077, 7
  %v3079 = vsub.s32 7, %v3078
  %v3080 = vrot.slane %v983, %v3079
  %3082 = vbcast.lane.b32.xlu0 %v3080, 256
  %v3083 = vpop.permute.xlu0 %3082
  %v3092 = vadd.f32 %v3005, %v3034
  %v3093 = vadd.f32 %v3008, %v3041
  %v3094 = vadd.f32 %v3011, %v3048
  %v3095 = vadd.f32 %v3014, %v3055
  %v3096 = vadd.f32 %v3017, %v3062
  %v3097 = vadd.f32 %v3020, %v3069
  %v3098 = vadd.f32 %v3023, %v3076
  %v3099 = vadd.f32 %v3026, %v3083
  %v3100 = vlaneseq
  %v3101 = vshrl.u32 %v3100, 7
  %v3102 = vsub.s32 0, %v3101
  %v3103 = vrot.slane %v983, %v3102
  %3105 = vbcast.lane.b32.xlu0 %v3103, 256
  %v3106 = vpop.permute.xlu0 %3105
  %v3107 = vlaneseq
  %v3108 = vshrl.u32 %v3107, 7
  %v3109 = vsub.s32 1, %v3108
  %v3110 = vrot.slane %v983, %v3109
  %3112 = vbcast.lane.b32.xlu0 %v3110, 256
  %v3113 = vpop.permute.xlu0 %3112
  %v3114 = vlaneseq
  %v3115 = vshrl.u32 %v3114, 7
  %v3116 = vsub.s32 2, %v3115
  %v3117 = vrot.slane %v983, %v3116
  %3119 = vbcast.lane.b32.xlu0 %v3117, 256
  %v3120 = vpop.permute.xlu0 %3119
  %v3121 = vlaneseq
  %v3122 = vshrl.u32 %v3121, 7
  %v3123 = vsub.s32 3, %v3122
  %v3124 = vrot.slane %v983, %v3123
  %3126 = vbcast.lane.b32.xlu0 %v3124, 256
  %v3127 = vpop.permute.xlu0 %3126
  %v3128 = vlaneseq
  %v3129 = vshrl.u32 %v3128, 7
  %v3130 = vsub.s32 4, %v3129
  %v3131 = vrot.slane %v983, %v3130
  %3133 = vbcast.lane.b32.xlu0 %v3131, 256
  %v3134 = vpop.permute.xlu0 %3133
  %v3135 = vlaneseq
  %v3136 = vshrl.u32 %v3135, 7
  %v3137 = vsub.s32 5, %v3136
  %v3138 = vrot.slane %v983, %v3137
  %3140 = vbcast.lane.b32.xlu0 %v3138, 256
  %v3141 = vpop.permute.xlu0 %3140
  %v3142 = vlaneseq
  %v3143 = vshrl.u32 %v3142, 7
  %v3144 = vsub.s32 6, %v3143
  %v3145 = vrot.slane %v983, %v3144
  %3147 = vbcast.lane.b32.xlu0 %v3145, 256
  %v3148 = vpop.permute.xlu0 %3147
  %v3149 = vlaneseq
  %v3150 = vshrl.u32 %v3149, 7
  %v3151 = vsub.s32 7, %v3150
  %v3152 = vrot.slane %v983, %v3151
  %3154 = vbcast.lane.b32.xlu0 %v3152, 256
  %v3155 = vpop.permute.xlu0 %3154
  %v3156 = vsel %vm613, %v875, 0
  %3158 = vmatprep.subr.mxu0 0.0
  %3159 = vmatpush1.msra.mxu0 %v268
  %3160 = vmatprep.subr.mxu0 0.0
  %3161 = vmatpush1.msra.mxu0 %v269
  %3162 = vmatprep.subr.mxu0 0.0
  %3163 = vmatpush1.msra.mxu0 %v270
  %3164 = vmatprep.subr.mxu0 0.0
  %3165 = vmatpush1.msra.mxu0 %v271
  %3166 = vmatprep.subr.mxu0 0.0
  %3167 = vmatpush1.msra.mxu0 0.0
  %3168 = vmatprep.subr.mxu0 0.0
  %3169 = vmatpush1.msra.mxu0 0.0
  %3170 = vmatprep.subr.mxu0 0.0
  %3171 = vmatpush1.msra.mxu0 0.0
  %3172 = vmatprep.subr.mxu0 0.0
  %3173 = vmatpush1.msra.mxu0 0.0
  %3174 = vmatprep.subr.mxu0 0.0
  %3175 = vmatpush1.msra.mxu0 0.0
  %3176 = vmatprep.subr.mxu0 0.0
  %3177 = vmatpush1.msra.mxu0 0.0
  %3178 = vmatprep.subr.mxu0 0.0
  %3179 = vmatpush1.msra.mxu0 0.0
  %3180 = vmatprep.subr.mxu0 0.0
  %3181 = vmatpush1.msra.mxu0 0.0
  %3182 = vmatprep.subr.mxu0 0.0
  %3183 = vmatpush1.msra.mxu0 0.0
  %3184 = vmatprep.subr.mxu0 0.0
  %3185 = vmatpush1.msra.mxu0 0.0
  %3186 = vmatprep.subr.mxu0 0.0
  %3187 = vmatpush1.msra.mxu0 0.0
  %3188 = vmatprep.subr.mxu0 0.0
  %3189 = vmatpush1.msra.mxu0 0.0
  %3190 = vmatprep.subr.mxu0 0.0
  %3191 = vmatpush1.msra.mxu0 0.0
  %3192 = vmatprep.subr.mxu0 0.0
  %3193 = vmatpush1.msra.mxu0 0.0
  %3194 = vmatprep.subr.mxu0 0.0
  %3195 = vmatpush1.msra.mxu0 0.0
  %3196 = vmatprep.subr.mxu0 0.0
  %3197 = vmatpush1.msra.mxu0 0.0
  %3198 = vmatprep.subr.mxu0 0.0
  %3199 = vmatpush1.msra.mxu0 0.0
  %3200 = vmatprep.subr.mxu0 0.0
  %3201 = vmatpush1.msra.mxu0 0.0
  %3202 = vmatprep.subr.mxu0 0.0
  %3203 = vmatpush1.msra.mxu0 0.0
  %3204 = vmatprep.subr.mxu0 0.0
  %3205 = vmatpush1.msra.mxu0 0.0
  %3206 = vmatprep.subr.mxu0 0.0
  %3207 = vmatpush1.msra.mxu0 0.0
  %3208 = vmatprep.subr.mxu0 0.0
  %3209 = vmatpush1.msra.mxu0 0.0
  %3210 = vmatprep.subr.mxu0 0.0
  %3211 = vmatpush1.msra.mxu0 0.0
  %3212 = vmatprep.subr.mxu0 0.0
  %3213 = vmatpush1.msra.mxu0 0.0
  %3214 = vmatprep.subr.mxu0 0.0
  %3215 = vmatpush1.msra.mxu0 0.0
  %3216 = vmatprep.subr.mxu0 0.0
  %3217 = vmatpush1.msra.mxu0 0.0
  %3218 = vmatprep.subr.mxu0 0.0
  %3219 = vmatpush1.msra.mxu0 0.0
  %3220 = vmatprep.subr.mxu0 0.0
  %3221 = vmatpush1.msra.mxu0 0.0
  %3222 = vmatprep.mubr.f32.mxu0 0.0
  %3223 = vmatmul.mubr.f32.gmra.mrb[0].mxu0 %v3156
  %v3224 = vpop.f32.mrb[0].mxu0
  %v3225 = vadd.f32 %v3106, %v3224
  %v3226 = vpop.f32.mrb[0].mxu0
  %3227 = vdwg.mxu0
  %v3228 = vsel %vm613, %v897, 0
  %3230 = vmatprep.subr.mxu0 0.0
  %3231 = vmatpush1.msra.mxu0 %v272
  %3232 = vmatprep.subr.mxu0 0.0
  %3233 = vmatpush1.msra.mxu0 %v273
  %3234 = vmatprep.subr.mxu0 0.0
  %3235 = vmatpush1.msra.mxu0 %v274
  %3236 = vmatprep.subr.mxu0 0.0
  %3237 = vmatpush1.msra.mxu0 %v275
  %3238 = vmatprep.subr.mxu0 0.0
  %3239 = vmatpush1.msra.mxu0 0.0
  %3240 = vmatprep.subr.mxu0 0.0
  %3241 = vmatpush1.msra.mxu0 0.0
  %3242 = vmatprep.subr.mxu0 0.0
  %3243 = vmatpush1.msra.mxu0 0.0
  %3244 = vmatprep.subr.mxu0 0.0
  %3245 = vmatpush1.msra.mxu0 0.0
  %3246 = vmatprep.subr.mxu0 0.0
  %3247 = vmatpush1.msra.mxu0 0.0
  %3248 = vmatprep.subr.mxu0 0.0
  %3249 = vmatpush1.msra.mxu0 0.0
  %3250 = vmatprep.subr.mxu0 0.0
  %3251 = vmatpush1.msra.mxu0 0.0
  %3252 = vmatprep.subr.mxu0 0.0
  %3253 = vmatpush1.msra.mxu0 0.0
  %3254 = vmatprep.subr.mxu0 0.0
  %3255 = vmatpush1.msra.mxu0 0.0
  %3256 = vmatprep.subr.mxu0 0.0
  %3257 = vmatpush1.msra.mxu0 0.0
  %3258 = vmatprep.subr.mxu0 0.0
  %3259 = vmatpush1.msra.mxu0 0.0
  %3260 = vmatprep.subr.mxu0 0.0
  %3261 = vmatpush1.msra.mxu0 0.0
  %3262 = vmatprep.subr.mxu0 0.0
  %3263 = vmatpush1.msra.mxu0 0.0
  %3264 = vmatprep.subr.mxu0 0.0
  %3265 = vmatpush1.msra.mxu0 0.0
  %3266 = vmatprep.subr.mxu0 0.0
  %3267 = vmatpush1.msra.mxu0 0.0
  %3268 = vmatprep.subr.mxu0 0.0
  %3269 = vmatpush1.msra.mxu0 0.0
  %3270 = vmatprep.subr.mxu0 0.0
  %3271 = vmatpush1.msra.mxu0 0.0
  %3272 = vmatprep.subr.mxu0 0.0
  %3273 = vmatpush1.msra.mxu0 0.0
  %3274 = vmatprep.subr.mxu0 0.0
  %3275 = vmatpush1.msra.mxu0 0.0
  %3276 = vmatprep.subr.mxu0 0.0
  %3277 = vmatpush1.msra.mxu0 0.0
  %3278 = vmatprep.subr.mxu0 0.0
  %3279 = vmatpush1.msra.mxu0 0.0
  %3280 = vmatprep.subr.mxu0 0.0
  %3281 = vmatpush1.msra.mxu0 0.0
  %3282 = vmatprep.subr.mxu0 0.0
  %3283 = vmatpush1.msra.mxu0 0.0
  %3284 = vmatprep.subr.mxu0 0.0
  %3285 = vmatpush1.msra.mxu0 0.0
  %3286 = vmatprep.subr.mxu0 0.0
  %3287 = vmatpush1.msra.mxu0 0.0
  %3288 = vmatprep.subr.mxu0 0.0
  %3289 = vmatpush1.msra.mxu0 0.0
  %3290 = vmatprep.subr.mxu0 0.0
  %3291 = vmatpush1.msra.mxu0 0.0
  %3292 = vmatprep.subr.mxu0 0.0
  %3293 = vmatpush1.msra.mxu0 0.0
  %3294 = vmatprep.mubr.f32.mxu0 0.0
  %3295 = vmatmul.mubr.f32.gmra.mrb[0].mxu0 %v3228
  %v3296 = vpop.f32.mrb[0].mxu0
  %v3297 = vadd.f32 %v3113, %v3296
  %v3298 = vpop.f32.mrb[0].mxu0
  %3299 = vdwg.mxu0
  %v3300 = vsel %vm613, %v880, 0
  %3302 = vmatprep.subr.mxu0 0.0
  %3303 = vmatpush1.msra.mxu0 %v276
  %3304 = vmatprep.subr.mxu0 0.0
  %3305 = vmatpush1.msra.mxu0 %v277
  %3306 = vmatprep.subr.mxu0 0.0
  %3307 = vmatpush1.msra.mxu0 %v278
  %3308 = vmatprep.subr.mxu0 0.0
  %3309 = vmatpush1.msra.mxu0 %v279
  %3310 = vmatprep.subr.mxu0 0.0
  %3311 = vmatpush1.msra.mxu0 0.0
  %3312 = vmatprep.subr.mxu0 0.0
  %3313 = vmatpush1.msra.mxu0 0.0
  %3314 = vmatprep.subr.mxu0 0.0
  %3315 = vmatpush1.msra.mxu0 0.0
  %3316 = vmatprep.subr.mxu0 0.0
  %3317 = vmatpush1.msra.mxu0 0.0
  %3318 = vmatprep.subr.mxu0 0.0
  %3319 = vmatpush1.msra.mxu0 0.0
  %3320 = vmatprep.subr.mxu0 0.0
  %3321 = vmatpush1.msra.mxu0 0.0
  %3322 = vmatprep.subr.mxu0 0.0
  %3323 = vmatpush1.msra.mxu0 0.0
  %3324 = vmatprep.subr.mxu0 0.0
  %3325 = vmatpush1.msra.mxu0 0.0
  %3326 = vmatprep.subr.mxu0 0.0
  %3327 = vmatpush1.msra.mxu0 0.0
  %3328 = vmatprep.subr.mxu0 0.0
  %3329 = vmatpush1.msra.mxu0 0.0
  %3330 = vmatprep.subr.mxu0 0.0
  %3331 = vmatpush1.msra.mxu0 0.0
  %3332 = vmatprep.subr.mxu0 0.0
  %3333 = vmatpush1.msra.mxu0 0.0
  %3334 = vmatprep.subr.mxu0 0.0
  %3335 = vmatpush1.msra.mxu0 0.0
  %3336 = vmatprep.subr.mxu0 0.0
  %3337 = vmatpush1.msra.mxu0 0.0
  %3338 = vmatprep.subr.mxu0 0.0
  %3339 = vmatpush1.msra.mxu0 0.0
  %3340 = vmatprep.subr.mxu0 0.0
  %3341 = vmatpush1.msra.mxu0 0.0
  %3342 = vmatprep.subr.mxu0 0.0
  %3343 = vmatpush1.msra.mxu0 0.0
  %3344 = vmatprep.subr.mxu0 0.0
  %3345 = vmatpush1.msra.mxu0 0.0
  %3346 = vmatprep.subr.mxu0 0.0
  %3347 = vmatpush1.msra.mxu0 0.0
  %3348 = vmatprep.subr.mxu0 0.0
  %3349 = vmatpush1.msra.mxu0 0.0
  %3350 = vmatprep.subr.mxu0 0.0
  %3351 = vmatpush1.msra.mxu0 0.0
  %3352 = vmatprep.subr.mxu0 0.0
  %3353 = vmatpush1.msra.mxu0 0.0
  %3354 = vmatprep.subr.mxu0 0.0
  %3355 = vmatpush1.msra.mxu0 0.0
  %3356 = vmatprep.subr.mxu0 0.0
  %3357 = vmatpush1.msra.mxu0 0.0
  %3358 = vmatprep.subr.mxu0 0.0
  %3359 = vmatpush1.msra.mxu0 0.0
  %3360 = vmatprep.subr.mxu0 0.0
  %3361 = vmatpush1.msra.mxu0 0.0
  %3362 = vmatprep.subr.mxu0 0.0
  %3363 = vmatpush1.msra.mxu0 0.0
  %3364 = vmatprep.subr.mxu0 0.0
  %3365 = vmatpush1.msra.mxu0 0.0
  %3366 = vmatprep.mubr.f32.mxu0 0.0
  %3367 = vmatmul.mubr.f32.gmra.mrb[0].mxu0 %v3300
  %v3368 = vpop.f32.mrb[0].mxu0
  %v3369 = vadd.f32 %v3120, %v3368
  %v3370 = vpop.f32.mrb[0].mxu0
  %3371 = vdwg.mxu0
  %v3372 = vsel %vm613, %v898, 0
  %3374 = vmatprep.subr.mxu0 0.0
  %3375 = vmatpush1.msra.mxu0 %v280
  %3376 = vmatprep.subr.mxu0 0.0
  %3377 = vmatpush1.msra.mxu0 %v281
  %3378 = vmatprep.subr.mxu0 0.0
  %3379 = vmatpush1.msra.mxu0 %v282
  %3380 = vmatprep.subr.mxu0 0.0
  %3381 = vmatpush1.msra.mxu0 %v283
  %3382 = vmatprep.subr.mxu0 0.0
  %3383 = vmatpush1.msra.mxu0 0.0
  %3384 = vmatprep.subr.mxu0 0.0
  %3385 = vmatpush1.msra.mxu0 0.0
  %3386 = vmatprep.subr.mxu0 0.0
  %3387 = vmatpush1.msra.mxu0 0.0
  %3388 = vmatprep.subr.mxu0 0.0
  %3389 = vmatpush1.msra.mxu0 0.0
  %3390 = vmatprep.subr.mxu0 0.0
  %3391 = vmatpush1.msra.mxu0 0.0
  %3392 = vmatprep.subr.mxu0 0.0
  %3393 = vmatpush1.msra.mxu0 0.0
  %3394 = vmatprep.subr.mxu0 0.0
  %3395 = vmatpush1.msra.mxu0 0.0
  %3396 = vmatprep.subr.mxu0 0.0
  %3397 = vmatpush1.msra.mxu0 0.0
  %3398 = vmatprep.subr.mxu0 0.0
  %3399 = vmatpush1.msra.mxu0 0.0
  %3400 = vmatprep.subr.mxu0 0.0
  %3401 = vmatpush1.msra.mxu0 0.0
  %3402 = vmatprep.subr.mxu0 0.0
  %3403 = vmatpush1.msra.mxu0 0.0
  %3404 = vmatprep.subr.mxu0 0.0
  %3405 = vmatpush1.msra.mxu0 0.0
  %3406 = vmatprep.subr.mxu0 0.0
  %3407 = vmatpush1.msra.mxu0 0.0
  %3408 = vmatprep.subr.mxu0 0.0
  %3409 = vmatpush1.msra.mxu0 0.0
  %3410 = vmatprep.subr.mxu0 0.0
  %3411 = vmatpush1.msra.mxu0 0.0
  %3412 = vmatprep.subr.mxu0 0.0
  %3413 = vmatpush1.msra.mxu0 0.0
  %3414 = vmatprep.subr.mxu0 0.0
  %3415 = vmatpush1.msra.mxu0 0.0
  %3416 = vmatprep.subr.mxu0 0.0
  %3417 = vmatpush1.msra.mxu0 0.0
  %3418 = vmatprep.subr.mxu0 0.0
  %3419 = vmatpush1.msra.mxu0 0.0
  %3420 = vmatprep.subr.mxu0 0.0
  %3421 = vmatpush1.msra.mxu0 0.0
  %3422 = vmatprep.subr.mxu0 0.0
  %3423 = vmatpush1.msra.mxu0 0.0
  %3424 = vmatprep.subr.mxu0 0.0
  %3425 = vmatpush1.msra.mxu0 0.0
  %3426 = vmatprep.subr.mxu0 0.0
  %3427 = vmatpush1.msra.mxu0 0.0
  %3428 = vmatprep.subr.mxu0 0.0
  %3429 = vmatpush1.msra.mxu0 0.0
  %3430 = vmatprep.subr.mxu0 0.0
  %3431 = vmatpush1.msra.mxu0 0.0
  %3432 = vmatprep.subr.mxu0 0.0
  %3433 = vmatpush1.msra.mxu0 0.0
  %3434 = vmatprep.subr.mxu0 0.0
  %3435 = vmatpush1.msra.mxu0 0.0
  %3436 = vmatprep.subr.mxu0 0.0
  %3437 = vmatpush1.msra.mxu0 0.0
  %3438 = vmatprep.mubr.f32.mxu0 0.0
  %3439 = vmatmul.mubr.f32.gmra.mrb[0].mxu0 %v3372
  %v3440 = vpop.f32.mrb[0].mxu0
  %v3441 = vadd.f32 %v3127, %v3440
  %v3442 = vpop.f32.mrb[0].mxu0
  %3443 = vdwg.mxu0
  %v3444 = vsel %vm613, %v885, 0
  %3446 = vmatprep.subr.mxu0 0.0
  %3447 = vmatpush1.msra.mxu0 %v284
  %3448 = vmatprep.subr.mxu0 0.0
  %3449 = vmatpush1.msra.mxu0 %v285
  %3450 = vmatprep.subr.mxu0 0.0
  %3451 = vmatpush1.msra.mxu0 %v286
  %3452 = vmatprep.subr.mxu0 0.0
  %3453 = vmatpush1.msra.mxu0 %v287
  %3454 = vmatprep.subr.mxu0 0.0
  %3455 = vmatpush1.msra.mxu0 0.0
  %3456 = vmatprep.subr.mxu0 0.0
  %3457 = vmatpush1.msra.mxu0 0.0
  %3458 = vmatprep.subr.mxu0 0.0
  %3459 = vmatpush1.msra.mxu0 0.0
  %3460 = vmatprep.subr.mxu0 0.0
  %3461 = vmatpush1.msra.mxu0 0.0
  %3462 = vmatprep.subr.mxu0 0.0
  %3463 = vmatpush1.msra.mxu0 0.0
  %3464 = vmatprep.subr.mxu0 0.0
  %3465 = vmatpush1.msra.mxu0 0.0
  %3466 = vmatprep.subr.mxu0 0.0
  %3467 = vmatpush1.msra.mxu0 0.0
  %3468 = vmatprep.subr.mxu0 0.0
  %3469 = vmatpush1.msra.mxu0 0.0
  %3470 = vmatprep.subr.mxu0 0.0
  %3471 = vmatpush1.msra.mxu0 0.0
  %3472 = vmatprep.subr.mxu0 0.0
  %3473 = vmatpush1.msra.mxu0 0.0
  %3474 = vmatprep.subr.mxu0 0.0
  %3475 = vmatpush1.msra.mxu0 0.0
  %3476 = vmatprep.subr.mxu0 0.0
  %3477 = vmatpush1.msra.mxu0 0.0
  %3478 = vmatprep.subr.mxu0 0.0
  %3479 = vmatpush1.msra.mxu0 0.0
  %3480 = vmatprep.subr.mxu0 0.0
  %3481 = vmatpush1.msra.mxu0 0.0
  %3482 = vmatprep.subr.mxu0 0.0
  %3483 = vmatpush1.msra.mxu0 0.0
  %3484 = vmatprep.subr.mxu0 0.0
  %3485 = vmatpush1.msra.mxu0 0.0
  %3486 = vmatprep.subr.mxu0 0.0
  %3487 = vmatpush1.msra.mxu0 0.0
  %3488 = vmatprep.subr.mxu0 0.0
  %3489 = vmatpush1.msra.mxu0 0.0
  %3490 = vmatprep.subr.mxu0 0.0
  %3491 = vmatpush1.msra.mxu0 0.0
  %3492 = vmatprep.subr.mxu0 0.0
  %3493 = vmatpush1.msra.mxu0 0.0
  %3494 = vmatprep.subr.mxu0 0.0
  %3495 = vmatpush1.msra.mxu0 0.0
  %3496 = vmatprep.subr.mxu0 0.0
  %3497 = vmatpush1.msra.mxu0 0.0
  %3498 = vmatprep.subr.mxu0 0.0
  %3499 = vmatpush1.msra.mxu0 0.0
  %3500 = vmatprep.subr.mxu0 0.0
  %3501 = vmatpush1.msra.mxu0 0.0
  %3502 = vmatprep.subr.mxu0 0.0
  %3503 = vmatpush1.msra.mxu0 0.0
  %3504 = vmatprep.subr.mxu0 0.0
  %3505 = vmatpush1.msra.mxu0 0.0
  %3506 = vmatprep.subr.mxu0 0.0
  %3507 = vmatpush1.msra.mxu0 0.0
  %3508 = vmatprep.subr.mxu0 0.0
  %3509 = vmatpush1.msra.mxu0 0.0
  %3510 = vmatprep.mubr.f32.mxu0 0.0
  %3511 = vmatmul.mubr.f32.gmra.mrb[0].mxu0 %v3444
  %v3512 = vpop.f32.mrb[0].mxu0
  %v3513 = vadd.f32 %v3134, %v3512
  %v3514 = vpop.f32.mrb[0].mxu0
  %3515 = vdwg.mxu0
  %v3516 = vsel %vm613, %v899, 0
  %3518 = vmatprep.subr.mxu0 0.0
  %3519 = vmatpush1.msra.mxu0 %v288
  %3520 = vmatprep.subr.mxu0 0.0
  %3521 = vmatpush1.msra.mxu0 %v289
  %3522 = vmatprep.subr.mxu0 0.0
  %3523 = vmatpush1.msra.mxu0 %v290
  %3524 = vmatprep.subr.mxu0 0.0
  %3525 = vmatpush1.msra.mxu0 %v291
  %3526 = vmatprep.subr.mxu0 0.0
  %3527 = vmatpush1.msra.mxu0 0.0
  %3528 = vmatprep.subr.mxu0 0.0
  %3529 = vmatpush1.msra.mxu0 0.0
  %3530 = vmatprep.subr.mxu0 0.0
  %3531 = vmatpush1.msra.mxu0 0.0
  %3532 = vmatprep.subr.mxu0 0.0
  %3533 = vmatpush1.msra.mxu0 0.0
  %3534 = vmatprep.subr.mxu0 0.0
  %3535 = vmatpush1.msra.mxu0 0.0
  %3536 = vmatprep.subr.mxu0 0.0
  %3537 = vmatpush1.msra.mxu0 0.0
  %3538 = vmatprep.subr.mxu0 0.0
  %3539 = vmatpush1.msra.mxu0 0.0
  %3540 = vmatprep.subr.mxu0 0.0
  %3541 = vmatpush1.msra.mxu0 0.0
  %3542 = vmatprep.subr.mxu0 0.0
  %3543 = vmatpush1.msra.mxu0 0.0
  %3544 = vmatprep.subr.mxu0 0.0
  %3545 = vmatpush1.msra.mxu0 0.0
  %3546 = vmatprep.subr.mxu0 0.0
  %3547 = vmatpush1.msra.mxu0 0.0
  %3548 = vmatprep.subr.mxu0 0.0
  %3549 = vmatpush1.msra.mxu0 0.0
  %3550 = vmatprep.subr.mxu0 0.0
  %3551 = vmatpush1.msra.mxu0 0.0
  %3552 = vmatprep.subr.mxu0 0.0
  %3553 = vmatpush1.msra.mxu0 0.0
  %3554 = vmatprep.subr.mxu0 0.0
  %3555 = vmatpush1.msra.mxu0 0.0
  %3556 = vmatprep.subr.mxu0 0.0
  %3557 = vmatpush1.msra.mxu0 0.0
  %3558 = vmatprep.subr.mxu0 0.0
  %3559 = vmatpush1.msra.mxu0 0.0
  %3560 = vmatprep.subr.mxu0 0.0
  %3561 = vmatpush1.msra.mxu0 0.0
  %3562 = vmatprep.subr.mxu0 0.0
  %3563 = vmatpush1.msra.mxu0 0.0
  %3564 = vmatprep.subr.mxu0 0.0
  %3565 = vmatpush1.msra.mxu0 0.0
  %3566 = vmatprep.subr.mxu0 0.0
  %3567 = vmatpush1.msra.mxu0 0.0
  %3568 = vmatprep.subr.mxu0 0.0
  %3569 = vmatpush1.msra.mxu0 0.0
  %3570 = vmatprep.subr.mxu0 0.0
  %3571 = vmatpush1.msra.mxu0 0.0
  %3572 = vmatprep.subr.mxu0 0.0
  %3573 = vmatpush1.msra.mxu0 0.0
  %3574 = vmatprep.subr.mxu0 0.0
  %3575 = vmatpush1.msra.mxu0 0.0
  %3576 = vmatprep.subr.mxu0 0.0
  %3577 = vmatpush1.msra.mxu0 0.0
  %3578 = vmatprep.subr.mxu0 0.0
  %3579 = vmatpush1.msra.mxu0 0.0
  %3580 = vmatprep.subr.mxu0 0.0
  %3581 = vmatpush1.msra.mxu0 0.0
  %3582 = vmatprep.mubr.f32.mxu0 0.0
  %3583 = vmatmul.mubr.f32.gmra.mrb[0].mxu0 %v3516
  %v3584 = vpop.f32.mrb[0].mxu0
  %v3585 = vadd.f32 %v3141, %v3584
  %v3586 = vpop.f32.mrb[0].mxu0
  %3587 = vdwg.mxu0
  %v3588 = vsel %vm613, %v890, 0
  %3590 = vmatprep.subr.mxu0 0.0
  %3591 = vmatpush1.msra.mxu0 %v292
  %3592 = vmatprep.subr.mxu0 0.0
  %3593 = vmatpush1.msra.mxu0 %v293
  %3594 = vmatprep.subr.mxu0 0.0
  %3595 = vmatpush1.msra.mxu0 %v294
  %3596 = vmatprep.subr.mxu0 0.0
  %3597 = vmatpush1.msra.mxu0 %v295
  %3598 = vmatprep.subr.mxu0 0.0
  %3599 = vmatpush1.msra.mxu0 0.0
  %3600 = vmatprep.subr.mxu0 0.0
  %3601 = vmatpush1.msra.mxu0 0.0
  %3602 = vmatprep.subr.mxu0 0.0
  %3603 = vmatpush1.msra.mxu0 0.0
  %3604 = vmatprep.subr.mxu0 0.0
  %3605 = vmatpush1.msra.mxu0 0.0
  %3606 = vmatprep.subr.mxu0 0.0
  %3607 = vmatpush1.msra.mxu0 0.0
  %3608 = vmatprep.subr.mxu0 0.0
  %3609 = vmatpush1.msra.mxu0 0.0
  %3610 = vmatprep.subr.mxu0 0.0
  %3611 = vmatpush1.msra.mxu0 0.0
  %3612 = vmatprep.subr.mxu0 0.0
  %3613 = vmatpush1.msra.mxu0 0.0
  %3614 = vmatprep.subr.mxu0 0.0
  %3615 = vmatpush1.msra.mxu0 0.0
  %3616 = vmatprep.subr.mxu0 0.0
  %3617 = vmatpush1.msra.mxu0 0.0
  %3618 = vmatprep.subr.mxu0 0.0
  %3619 = vmatpush1.msra.mxu0 0.0
  %3620 = vmatprep.subr.mxu0 0.0
  %3621 = vmatpush1.msra.mxu0 0.0
  %3622 = vmatprep.subr.mxu0 0.0
  %3623 = vmatpush1.msra.mxu0 0.0
  %3624 = vmatprep.subr.mxu0 0.0
  %3625 = vmatpush1.msra.mxu0 0.0
  %3626 = vmatprep.subr.mxu0 0.0
  %3627 = vmatpush1.msra.mxu0 0.0
  %3628 = vmatprep.subr.mxu0 0.0
  %3629 = vmatpush1.msra.mxu0 0.0
  %3630 = vmatprep.subr.mxu0 0.0
  %3631 = vmatpush1.msra.mxu0 0.0
  %3632 = vmatprep.subr.mxu0 0.0
  %3633 = vmatpush1.msra.mxu0 0.0
  %3634 = vmatprep.subr.mxu0 0.0
  %3635 = vmatpush1.msra.mxu0 0.0
  %3636 = vmatprep.subr.mxu0 0.0
  %3637 = vmatpush1.msra.mxu0 0.0
  %3638 = vmatprep.subr.mxu0 0.0
  %3639 = vmatpush1.msra.mxu0 0.0
  %3640 = vmatprep.subr.mxu0 0.0
  %3641 = vmatpush1.msra.mxu0 0.0
  %3642 = vmatprep.subr.mxu0 0.0
  %3643 = vmatpush1.msra.mxu0 0.0
  %3644 = vmatprep.subr.mxu0 0.0
  %3645 = vmatpush1.msra.mxu0 0.0
  %3646 = vmatprep.subr.mxu0 0.0
  %3647 = vmatpush1.msra.mxu0 0.0
  %3648 = vmatprep.subr.mxu0 0.0
  %3649 = vmatpush1.msra.mxu0 0.0
  %3650 = vmatprep.subr.mxu0 0.0
  %3651 = vmatpush1.msra.mxu0 0.0
  %3652 = vmatprep.subr.mxu0 0.0
  %3653 = vmatpush1.msra.mxu0 0.0
  %3654 = vmatprep.mubr.f32.mxu0 0.0
  %3655 = vmatmul.mubr.f32.gmra.mrb[0].mxu0 %v3588
  %v3656 = vpop.f32.mrb[0].mxu0
  %v3657 = vadd.f32 %v3148, %v3656
  %v3658 = vpop.f32.mrb[0].mxu0
  %3659 = vdwg.mxu0
  %v3660 = vsel %vm613, %v900, 0
  %3662 = vmatprep.subr.mxu0 0.0
  %3663 = vmatpush1.msra.mxu0 %v296
  %3664 = vmatprep.subr.mxu0 0.0
  %3665 = vmatpush1.msra.mxu0 %v297
  %3666 = vmatprep.subr.mxu0 0.0
  %3667 = vmatpush1.msra.mxu0 %v298
  %3668 = vmatprep.subr.mxu0 0.0
  %3669 = vmatpush1.msra.mxu0 %v299
  %3670 = vmatprep.subr.mxu0 0.0
  %3671 = vmatpush1.msra.mxu0 0.0
  %3672 = vmatprep.subr.mxu0 0.0
  %3673 = vmatpush1.msra.mxu0 0.0
  %3674 = vmatprep.subr.mxu0 0.0
  %3675 = vmatpush1.msra.mxu0 0.0
  %3676 = vmatprep.subr.mxu0 0.0
  %3677 = vmatpush1.msra.mxu0 0.0
  %3678 = vmatprep.subr.mxu0 0.0
  %3679 = vmatpush1.msra.mxu0 0.0
  %3680 = vmatprep.subr.mxu0 0.0
  %3681 = vmatpush1.msra.mxu0 0.0
  %3682 = vmatprep.subr.mxu0 0.0
  %3683 = vmatpush1.msra.mxu0 0.0
  %3684 = vmatprep.subr.mxu0 0.0
  %3685 = vmatpush1.msra.mxu0 0.0
  %3686 = vmatprep.subr.mxu0 0.0
  %3687 = vmatpush1.msra.mxu0 0.0
  %3688 = vmatprep.subr.mxu0 0.0
  %3689 = vmatpush1.msra.mxu0 0.0
  %3690 = vmatprep.subr.mxu0 0.0
  %3691 = vmatpush1.msra.mxu0 0.0
  %3692 = vmatprep.subr.mxu0 0.0
  %3693 = vmatpush1.msra.mxu0 0.0
  %3694 = vmatprep.subr.mxu0 0.0
  %3695 = vmatpush1.msra.mxu0 0.0
  %3696 = vmatprep.subr.mxu0 0.0
  %3697 = vmatpush1.msra.mxu0 0.0
  %3698 = vmatprep.subr.mxu0 0.0
  %3699 = vmatpush1.msra.mxu0 0.0
  %3700 = vmatprep.subr.mxu0 0.0
  %3701 = vmatpush1.msra.mxu0 0.0
  %3702 = vmatprep.subr.mxu0 0.0
  %3703 = vmatpush1.msra.mxu0 0.0
  %3704 = vmatprep.subr.mxu0 0.0
  %3705 = vmatpush1.msra.mxu0 0.0
  %3706 = vmatprep.subr.mxu0 0.0
  %3707 = vmatpush1.msra.mxu0 0.0
  %3708 = vmatprep.subr.mxu0 0.0
  %3709 = vmatpush1.msra.mxu0 0.0
  %3710 = vmatprep.subr.mxu0 0.0
  %3711 = vmatpush1.msra.mxu0 0.0
  %3712 = vmatprep.subr.mxu0 0.0
  %3713 = vmatpush1.msra.mxu0 0.0
  %3714 = vmatprep.subr.mxu0 0.0
  %3715 = vmatpush1.msra.mxu0 0.0
  %3716 = vmatprep.subr.mxu0 0.0
  %3717 = vmatpush1.msra.mxu0 0.0
  %3718 = vmatprep.subr.mxu0 0.0
  %3719 = vmatpush1.msra.mxu0 0.0
  %3720 = vmatprep.subr.mxu0 0.0
  %3721 = vmatpush1.msra.mxu0 0.0
  %3722 = vmatprep.subr.mxu0 0.0
  %3723 = vmatpush1.msra.mxu0 0.0
  %3724 = vmatprep.subr.mxu0 0.0
  %3725 = vmatpush1.msra.mxu0 0.0
  %3726 = vmatprep.mubr.f32.mxu0 0.0
  %3727 = vmatmul.mubr.f32.gmra.mrb[0].mxu0 %v3660
  %v3728 = vpop.f32.mrb[0].mxu0
  %v3729 = vadd.f32 %v3155, %v3728
  %v3730 = vpop.f32.mrb[0].mxu0
  %3731 = vdwg.mxu0
  %vm3732 = vcmask 125952
  %v3733 = vsel %vm3732, %v3225, -inf
  %3734 = vmax.xlane.f32.xlu0 %v3733
  %v3735 = vpop.xlane.xlu0 %3734
  %v3736 = vsel %vm3732, %v3297, -inf
  %3737 = vmax.xlane.f32.xlu0 %v3736
  %v3738 = vpop.xlane.xlu0 %3737
  %v3739 = vsel %vm3732, %v3369, -inf
  %3740 = vmax.xlane.f32.xlu0 %v3739
  %v3741 = vpop.xlane.xlu0 %3740
  %v3742 = vsel %vm3732, %v3441, -inf
  %3743 = vmax.xlane.f32.xlu0 %v3742
  %v3744 = vpop.xlane.xlu0 %3743
  %v3745 = vsel %vm3732, %v3513, -inf
  %3746 = vmax.xlane.f32.xlu0 %v3745
  %v3747 = vpop.xlane.xlu0 %3746
  %v3748 = vsel %vm3732, %v3585, -inf
  %3749 = vmax.xlane.f32.xlu0 %v3748
  %v3750 = vpop.xlane.xlu0 %3749
  %v3751 = vsel %vm3732, %v3657, -inf
  %3752 = vmax.xlane.f32.xlu0 %v3751
  %v3753 = vpop.xlane.xlu0 %3752
  %v3754 = vsel %vm3732, %v3729, -inf
  %3755 = vmax.xlane.f32.xlu0 %v3754
  %v3756 = vpop.xlane.xlu0 %3755
  %v3757 = vmax.f32 %v3735, %v3092
  %v3758 = vmax.f32 %v3738, %v3093
  %v3759 = vmax.f32 %v3741, %v3094
  %v3760 = vmax.f32 %v3744, %v3095
  %v3761 = vmax.f32 %v3747, %v3096
  %v3762 = vmax.f32 %v3750, %v3097
  %v3763 = vmax.f32 %v3753, %v3098
  %v3764 = vmax.f32 %v3756, %v3099
  %v3765 = vsub.f32 %v3092, %v3757
  %v3766 = vsub.f32 %v3093, %v3758
  %v3767 = vsub.f32 %v3094, %v3759
  %v3768 = vsub.f32 %v3095, %v3760
  %v3769 = vsub.f32 %v3096, %v3761
  %v3770 = vsub.f32 %v3097, %v3762
  %v3771 = vsub.f32 %v3098, %v3763
  %v3772 = vsub.f32 %v3099, %v3764
  %v3773 = vmul.f32 %v3765, 1.442695
  %v3774 = vpow.pop %v3773
  %v3775 = vmul.f32 %v3766, 1.442695
  %v3776 = vpow.pop %v3775
  %v3777 = vmul.f32 %v3767, 1.442695
  %v3778 = vpow.pop %v3777
  %v3779 = vmul.f32 %v3768, 1.442695
  %v3780 = vpow.pop %v3779
  %v3781 = vmul.f32 %v3769, 1.442695
  %v3782 = vpow.pop %v3781
  %v3783 = vmul.f32 %v3770, 1.442695
  %v3784 = vpow.pop %v3783
  %v3785 = vmul.f32 %v3771, 1.442695
  %v3786 = vpow.pop %v3785
  %v3787 = vmul.f32 %v3772, 1.442695
  %v3788 = vpow.pop %v3787
  %3790 = vset.pattern.permute.xlu0 0
  %3791 = vperm.xlu0 %3790, %v3757
  %v3792 = vpop.permute.xlu0 %3791
  %3795 = vset.pattern.permute.xlu0 0
  %3796 = vperm.xlu0 %3795, %v3758
  %v3797 = vpop.permute.xlu0 %3796
  %3800 = vset.pattern.permute.xlu0 0
  %3801 = vperm.xlu0 %3800, %v3759
  %v3802 = vpop.permute.xlu0 %3801
  %3805 = vset.pattern.permute.xlu0 0
  %3806 = vperm.xlu0 %3805, %v3760
  %v3807 = vpop.permute.xlu0 %3806
  %3810 = vset.pattern.permute.xlu0 0
  %3811 = vperm.xlu0 %3810, %v3761
  %v3812 = vpop.permute.xlu0 %3811
  %3815 = vset.pattern.permute.xlu0 0
  %3816 = vperm.xlu0 %3815, %v3762
  %v3817 = vpop.permute.xlu0 %3816
  %3820 = vset.pattern.permute.xlu0 0
  %3821 = vperm.xlu0 %3820, %v3763
  %v3822 = vpop.permute.xlu0 %3821
  %3825 = vset.pattern.permute.xlu0 0
  %3826 = vperm.xlu0 %3825, %v3764
  %v3827 = vpop.permute.xlu0 %3826
  %v3829 = vsub.f32 %v3225, %v3792
  %v3830 = vsub.f32 %v3297, %v3797
  %v3831 = vsub.f32 %v3369, %v3802
  %v3832 = vsub.f32 %v3441, %v3807
  %v3833 = vsub.f32 %v3513, %v3812
  %v3834 = vsub.f32 %v3585, %v3817
  %v3835 = vsub.f32 %v3657, %v3822
  %v3836 = vsub.f32 %v3729, %v3827
  %v3837 = vmul.f32 %v3829, 1.442695
  %v3838 = vpow.pop %v3837
  %v3839 = vmul.f32 %v3830, 1.442695
  %v3840 = vpow.pop %v3839
  %v3841 = vmul.f32 %v3831, 1.442695
  %v3842 = vpow.pop %v3841
  %v3843 = vmul.f32 %v3832, 1.442695
  %v3844 = vpow.pop %v3843
  %v3845 = vmul.f32 %v3833, 1.442695
  %v3846 = vpow.pop %v3845
  %v3847 = vmul.f32 %v3834, 1.442695
  %v3848 = vpow.pop %v3847
  %v3849 = vmul.f32 %v3835, 1.442695
  %v3850 = vpow.pop %v3849
  %v3851 = vmul.f32 %v3836, 1.442695
  %v3852 = vpow.pop %v3851
  %v3853 = vsel %vm3732, %v3838, 0.0
  %3854 = vadd.xlane.f32.xlu0 %v3853
  %v3855 = vpop.xlane.xlu0 %3854
  %v3856 = vsel %vm3732, %v3840, 0.0
  %3857 = vadd.xlane.f32.xlu0 %v3856
  %v3858 = vpop.xlane.xlu0 %3857
  %v3859 = vsel %vm3732, %v3842, 0.0
  %3860 = vadd.xlane.f32.xlu0 %v3859
  %v3861 = vpop.xlane.xlu0 %3860
  %v3862 = vsel %vm3732, %v3844, 0.0
  %3863 = vadd.xlane.f32.xlu0 %v3862
  %v3864 = vpop.xlane.xlu0 %3863
  %v3865 = vsel %vm3732, %v3846, 0.0
  %3866 = vadd.xlane.f32.xlu0 %v3865
  %v3867 = vpop.xlane.xlu0 %3866
  %v3868 = vsel %vm3732, %v3848, 0.0
  %3869 = vadd.xlane.f32.xlu0 %v3868
  %v3870 = vpop.xlane.xlu0 %3869
  %v3871 = vsel %vm3732, %v3850, 0.0
  %3872 = vadd.xlane.f32.xlu0 %v3871
  %v3873 = vpop.xlane.xlu0 %3872
  %v3874 = vsel %vm3732, %v3852, 0.0
  %3875 = vadd.xlane.f32.xlu0 %v3874
  %v3876 = vpop.xlane.xlu0 %3875
  %v3877 = vadd.f32 %v3774, %v3855
  %v3878 = vadd.f32 %v3776, %v3858
  %v3879 = vadd.f32 %v3778, %v3861
  %v3880 = vadd.f32 %v3780, %v3864
  %v3881 = vadd.f32 %v3782, %v3867
  %v3882 = vadd.f32 %v3784, %v3870
  %v3883 = vadd.f32 %v3786, %v3873
  %v3884 = vadd.f32 %v3788, %v3876
  %v3885 = vrcp.pop %v3877
  %v3886 = vrcp.pop %v3878
  %v3887 = vrcp.pop %v3879
  %v3888 = vrcp.pop %v3880
  %v3889 = vrcp.pop %v3881
  %v3890 = vrcp.pop %v3882
  %v3891 = vrcp.pop %v3883
  %v3892 = vrcp.pop %v3884
  %v3893 = vmul.f32 %v3774, %v3885
  %v3894 = vmul.f32 %v3776, %v3886
  %v3895 = vmul.f32 %v3778, %v3887
  %v3896 = vmul.f32 %v3780, %v3888
  %v3897 = vmul.f32 %v3782, %v3889
  %v3898 = vmul.f32 %v3784, %v3890
  %v3899 = vmul.f32 %v3786, %v3891
  %v3900 = vmul.f32 %v3788, %v3892
  %3902 = vset.pattern.permute.xlu0 0
  %3903 = vperm.xlu0 %3902, %v3885
  %v3904 = vpop.permute.xlu0 %3903
  %3907 = vset.pattern.permute.xlu0 0
  %3908 = vperm.xlu0 %3907, %v3886
  %v3909 = vpop.permute.xlu0 %3908
  %3912 = vset.pattern.permute.xlu0 0
  %3913 = vperm.xlu0 %3912, %v3887
  %v3914 = vpop.permute.xlu0 %3913
  %3917 = vset.pattern.permute.xlu0 0
  %3918 = vperm.xlu0 %3917, %v3888
  %v3919 = vpop.permute.xlu0 %3918
  %3922 = vset.pattern.permute.xlu0 0
  %3923 = vperm.xlu0 %3922, %v3889
  %v3924 = vpop.permute.xlu0 %3923
  %3927 = vset.pattern.permute.xlu0 0
  %3928 = vperm.xlu0 %3927, %v3890
  %v3929 = vpop.permute.xlu0 %3928
  %3932 = vset.pattern.permute.xlu0 0
  %3933 = vperm.xlu0 %3932, %v3891
  %v3934 = vpop.permute.xlu0 %3933
  %3937 = vset.pattern.permute.xlu0 0
  %3938 = vperm.xlu0 %3937, %v3892
  %v3939 = vpop.permute.xlu0 %3938
  %v3941 = vmul.f32 %v3838, %v3904
  %v3942 = vmul.f32 %v3840, %v3909
  %v3943 = vmul.f32 %v3842, %v3914
  %v3944 = vmul.f32 %v3844, %v3919
  %v3945 = vmul.f32 %v3846, %v3924
  %v3946 = vmul.f32 %v3848, %v3929
  %v3947 = vmul.f32 %v3850, %v3934
  %v3948 = vmul.f32 %v3852, %v3939
  %v3949 = vmul.f32 %v3877, %v3885
  %v3950 = vmul.f32 %v3878, %v3886
  %v3951 = vmul.f32 %v3879, %v3887
  %v3952 = vmul.f32 %v3880, %v3888
  %v3953 = vmul.f32 %v3881, %v3889
  %v3954 = vmul.f32 %v3882, %v3890
  %v3955 = vmul.f32 %v3883, %v3891
  %v3956 = vmul.f32 %v3884, %v3892
  %3958 = vset.pattern.permute.xlu0 0
  %3959 = vperm.xlu0 %3958, %v3893
  %v3960 = vpop.permute.xlu0 %3959
  %3963 = vset.pattern.permute.xlu0 0
  %3964 = vperm.xlu0 %3963, %v3894
  %v3965 = vpop.permute.xlu0 %3964
  %3968 = vset.pattern.permute.xlu0 0
  %3969 = vperm.xlu0 %3968, %v3895
  %v3970 = vpop.permute.xlu0 %3969
  %3973 = vset.pattern.permute.xlu0 0
  %3974 = vperm.xlu0 %3973, %v3896
  %v3975 = vpop.permute.xlu0 %3974
  %3978 = vset.pattern.permute.xlu0 0
  %3979 = vperm.xlu0 %3978, %v3897
  %v3980 = vpop.permute.xlu0 %3979
  %3983 = vset.pattern.permute.xlu0 0
  %3984 = vperm.xlu0 %3983, %v3898
  %v3985 = vpop.permute.xlu0 %3984
  %3988 = vset.pattern.permute.xlu0 0
  %3989 = vperm.xlu0 %3988, %v3899
  %v3990 = vpop.permute.xlu0 %3989
  %3993 = vset.pattern.permute.xlu0 0
  %3994 = vperm.xlu0 %3993, %v3900
  %v3995 = vpop.permute.xlu0 %3994
  %v3997 = vsel %vm601, %v465, %v465
  %v3998 = vsel %vm603, %v465, %v3997
  %v3999 = vsel %vm601, %v484, %v484
  %v4000 = vsel %vm603, %v484, %v3999
  %v4001 = vsel %vm601, %v503, %v503
  %v4002 = vsel %vm603, %v503, %v4001
  %v4003 = vsel %vm601, %v522, %v522
  %v4004 = vsel %vm603, %v522, %v4003
  %v4005 = vsel %vm601, %v541, %v541
  %v4006 = vsel %vm603, %v541, %v4005
  %v4007 = vsel %vm601, %v560, %v560
  %v4008 = vsel %vm603, %v560, %v4007
  %v4009 = vsel %vm601, %v579, %v579
  %v4010 = vsel %vm603, %v579, %v4009
  %v4011 = vsel %vm601, %v598, %v598
  %v4012 = vsel %vm603, %v598, %v4011
  %v4021 = vmul.f32 %v3960, %v3998
  %v4022 = vmul.f32 %v3965, %v4000
  %v4023 = vmul.f32 %v3970, %v4002
  %v4024 = vmul.f32 %v3975, %v4004
  %v4025 = vmul.f32 %v3980, %v4006
  %v4026 = vmul.f32 %v3985, %v4008
  %v4027 = vmul.f32 %v3990, %v4010
  %v4028 = vmul.f32 %v3995, %v4012
  %v4030 = vsel %vm77, %v3941, 0
  %v4033 = vsel %vm77, %v268, 0
  %v4036 = vsel %vm77, %v269, 0
  %v4039 = vsel %vm77, %v270, 0
  %v4042 = vsel %vm77, %v271, 0
  %4044 = vmatprep.subr.mxu0 0.0
  %4045 = vmatpush1.xpose.msra.mxu0 %v4033
  %4046 = vmatprep.subr.mxu0 0.0
  %4047 = vmatpush1.xpose.msra.mxu0 %v4036
  %4048 = vmatprep.subr.mxu0 0.0
  %4049 = vmatpush1.xpose.msra.mxu0 %v4039
  %4050 = vmatprep.subr.mxu0 0.0
  %4051 = vmatpush1.xpose.msra.mxu0 %v4042
  %4052 = vmatprep.subr.mxu0 0.0
  %4053 = vmatpush1.xpose.msra.mxu0 0.0
  %4054 = vmatprep.subr.mxu0 0.0
  %4055 = vmatpush1.xpose.msra.mxu0 0.0
  %4056 = vmatprep.subr.mxu0 0.0
  %4057 = vmatpush1.xpose.msra.mxu0 0.0
  %4058 = vmatprep.subr.mxu0 0.0
  %4059 = vmatpush1.xpose.msra.mxu0 0.0
  %4060 = vmatprep.subr.mxu0 0.0
  %4061 = vmatpush1.xpose.msra.mxu0 0.0
  %4062 = vmatprep.subr.mxu0 0.0
  %4063 = vmatpush1.xpose.msra.mxu0 0.0
  %4064 = vmatprep.subr.mxu0 0.0
  %4065 = vmatpush1.xpose.msra.mxu0 0.0
  %4066 = vmatprep.subr.mxu0 0.0
  %4067 = vmatpush1.xpose.msra.mxu0 0.0
  %4068 = vmatprep.subr.mxu0 0.0
  %4069 = vmatpush1.xpose.msra.mxu0 0.0
  %4070 = vmatprep.subr.mxu0 0.0
  %4071 = vmatpush1.xpose.msra.mxu0 0.0
  %4072 = vmatprep.subr.mxu0 0.0
  %4073 = vmatpush1.xpose.msra.mxu0 0.0
  %4074 = vmatprep.subr.mxu0 0.0
  %4075 = vmatpush1.xpose.msra.mxu0 0.0
  %4076 = vmatprep.subr.mxu0 0.0
  %4077 = vmatpush1.xpose.msra.mxu0 0.0
  %4078 = vmatprep.subr.mxu0 0.0
  %4079 = vmatpush1.xpose.msra.mxu0 0.0
  %4080 = vmatprep.subr.mxu0 0.0
  %4081 = vmatpush1.xpose.msra.mxu0 0.0
  %4082 = vmatprep.subr.mxu0 0.0
  %4083 = vmatpush1.xpose.msra.mxu0 0.0
  %4084 = vmatprep.subr.mxu0 0.0
  %4085 = vmatpush1.xpose.msra.mxu0 0.0
  %4086 = vmatprep.subr.mxu0 0.0
  %4087 = vmatpush1.xpose.msra.mxu0 0.0
  %4088 = vmatprep.subr.mxu0 0.0
  %4089 = vmatpush1.xpose.msra.mxu0 0.0
  %4090 = vmatprep.subr.mxu0 0.0
  %4091 = vmatpush1.xpose.msra.mxu0 0.0
  %4092 = vmatprep.subr.mxu0 0.0
  %4093 = vmatpush1.xpose.msra.mxu0 0.0
  %4094 = vmatprep.subr.mxu0 0.0
  %4095 = vmatpush1.xpose.msra.mxu0 0.0
  %4096 = vmatprep.subr.mxu0 0.0
  %4097 = vmatpush1.xpose.msra.mxu0 0.0
  %4098 = vmatprep.subr.mxu0 0.0
  %4099 = vmatpush1.xpose.msra.mxu0 0.0
  %4100 = vmatprep.subr.mxu0 0.0
  %4101 = vmatpush1.xpose.msra.mxu0 0.0
  %4102 = vmatprep.subr.mxu0 0.0
  %4103 = vmatpush1.xpose.msra.mxu0 0.0
  %4104 = vmatprep.subr.mxu0 0.0
  %4105 = vmatpush1.xpose.msra.mxu0 0.0
  %4106 = vmatprep.subr.mxu0 0.0
  %4107 = vmatpush1.xpose.msra.mxu0 0.0
  %4108 = vmatprep.mubr.f32.mxu0 0.0
  %4109 = vmatmul.mubr.f32.gmra.mrb[0].mxu0 %v4030
  %v4110 = vpop.f32.mrb[0].mxu0
  %v4111 = vadd.f32 0.0, %v4110
  %v4112 = vpop.f32.mrb[0].mxu0
  %4113 = vdwg.mxu0
  %v4115 = vsel %vm77, %v3942, 0
  %v4118 = vsel %vm77, %v272, 0
  %v4121 = vsel %vm77, %v273, 0
  %v4124 = vsel %vm77, %v274, 0
  %v4127 = vsel %vm77, %v275, 0
  %4129 = vmatprep.subr.mxu0 0.0
  %4130 = vmatpush1.xpose.msra.mxu0 %v4118
  %4131 = vmatprep.subr.mxu0 0.0
  %4132 = vmatpush1.xpose.msra.mxu0 %v4121
  %4133 = vmatprep.subr.mxu0 0.0
  %4134 = vmatpush1.xpose.msra.mxu0 %v4124
  %4135 = vmatprep.subr.mxu0 0.0
  %4136 = vmatpush1.xpose.msra.mxu0 %v4127
  %4137 = vmatprep.subr.mxu0 0.0
  %4138 = vmatpush1.xpose.msra.mxu0 0.0
  %4139 = vmatprep.subr.mxu0 0.0
  %4140 = vmatpush1.xpose.msra.mxu0 0.0
  %4141 = vmatprep.subr.mxu0 0.0
  %4142 = vmatpush1.xpose.msra.mxu0 0.0
  %4143 = vmatprep.subr.mxu0 0.0
  %4144 = vmatpush1.xpose.msra.mxu0 0.0
  %4145 = vmatprep.subr.mxu0 0.0
  %4146 = vmatpush1.xpose.msra.mxu0 0.0
  %4147 = vmatprep.subr.mxu0 0.0
  %4148 = vmatpush1.xpose.msra.mxu0 0.0
  %4149 = vmatprep.subr.mxu0 0.0
  %4150 = vmatpush1.xpose.msra.mxu0 0.0
  %4151 = vmatprep.subr.mxu0 0.0
  %4152 = vmatpush1.xpose.msra.mxu0 0.0
  %4153 = vmatprep.subr.mxu0 0.0
  %4154 = vmatpush1.xpose.msra.mxu0 0.0
  %4155 = vmatprep.subr.mxu0 0.0
  %4156 = vmatpush1.xpose.msra.mxu0 0.0
  %4157 = vmatprep.subr.mxu0 0.0
  %4158 = vmatpush1.xpose.msra.mxu0 0.0
  %4159 = vmatprep.subr.mxu0 0.0
  %4160 = vmatpush1.xpose.msra.mxu0 0.0
  %4161 = vmatprep.subr.mxu0 0.0
  %4162 = vmatpush1.xpose.msra.mxu0 0.0
  %4163 = vmatprep.subr.mxu0 0.0
  %4164 = vmatpush1.xpose.msra.mxu0 0.0
  %4165 = vmatprep.subr.mxu0 0.0
  %4166 = vmatpush1.xpose.msra.mxu0 0.0
  %4167 = vmatprep.subr.mxu0 0.0
  %4168 = vmatpush1.xpose.msra.mxu0 0.0
  %4169 = vmatprep.subr.mxu0 0.0
  %4170 = vmatpush1.xpose.msra.mxu0 0.0
  %4171 = vmatprep.subr.mxu0 0.0
  %4172 = vmatpush1.xpose.msra.mxu0 0.0
  %4173 = vmatprep.subr.mxu0 0.0
  %4174 = vmatpush1.xpose.msra.mxu0 0.0
  %4175 = vmatprep.subr.mxu0 0.0
  %4176 = vmatpush1.xpose.msra.mxu0 0.0
  %4177 = vmatprep.subr.mxu0 0.0
  %4178 = vmatpush1.xpose.msra.mxu0 0.0
  %4179 = vmatprep.subr.mxu0 0.0
  %4180 = vmatpush1.xpose.msra.mxu0 0.0
  %4181 = vmatprep.subr.mxu0 0.0
  %4182 = vmatpush1.xpose.msra.mxu0 0.0
  %4183 = vmatprep.subr.mxu0 0.0
  %4184 = vmatpush1.xpose.msra.mxu0 0.0
  %4185 = vmatprep.subr.mxu0 0.0
  %4186 = vmatpush1.xpose.msra.mxu0 0.0
  %4187 = vmatprep.subr.mxu0 0.0
  %4188 = vmatpush1.xpose.msra.mxu0 0.0
  %4189 = vmatprep.subr.mxu0 0.0
  %4190 = vmatpush1.xpose.msra.mxu0 0.0
  %4191 = vmatprep.subr.mxu0 0.0
  %4192 = vmatpush1.xpose.msra.mxu0 0.0
  %4193 = vmatprep.mubr.f32.mxu0 0.0
  %4194 = vmatmul.mubr.f32.gmra.mrb[0].mxu0 %v4115
  %v4195 = vpop.f32.mrb[0].mxu0
  %v4196 = vadd.f32 0.0, %v4195
  %v4197 = vpop.f32.mrb[0].mxu0
  %4198 = vdwg.mxu0
  %v4200 = vsel %vm77, %v3943, 0
  %v4203 = vsel %vm77, %v276, 0
  %v4206 = vsel %vm77, %v277, 0
  %v4209 = vsel %vm77, %v278, 0
  %v4212 = vsel %vm77, %v279, 0
  %4214 = vmatprep.subr.mxu0 0.0
  %4215 = vmatpush1.xpose.msra.mxu0 %v4203
  %4216 = vmatprep.subr.mxu0 0.0
  %4217 = vmatpush1.xpose.msra.mxu0 %v4206
  %4218 = vmatprep.subr.mxu0 0.0
  %4219 = vmatpush1.xpose.msra.mxu0 %v4209
  %4220 = vmatprep.subr.mxu0 0.0
  %4221 = vmatpush1.xpose.msra.mxu0 %v4212
  %4222 = vmatprep.subr.mxu0 0.0
  %4223 = vmatpush1.xpose.msra.mxu0 0.0
  %4224 = vmatprep.subr.mxu0 0.0
  %4225 = vmatpush1.xpose.msra.mxu0 0.0
  %4226 = vmatprep.subr.mxu0 0.0
  %4227 = vmatpush1.xpose.msra.mxu0 0.0
  %4228 = vmatprep.subr.mxu0 0.0
  %4229 = vmatpush1.xpose.msra.mxu0 0.0
  %4230 = vmatprep.subr.mxu0 0.0
  %4231 = vmatpush1.xpose.msra.mxu0 0.0
  %4232 = vmatprep.subr.mxu0 0.0
  %4233 = vmatpush1.xpose.msra.mxu0 0.0
  %4234 = vmatprep.subr.mxu0 0.0
  %4235 = vmatpush1.xpose.msra.mxu0 0.0
  %4236 = vmatprep.subr.mxu0 0.0
  %4237 = vmatpush1.xpose.msra.mxu0 0.0
  %4238 = vmatprep.subr.mxu0 0.0
  %4239 = vmatpush1.xpose.msra.mxu0 0.0
  %4240 = vmatprep.subr.mxu0 0.0
  %4241 = vmatpush1.xpose.msra.mxu0 0.0
  %4242 = vmatprep.subr.mxu0 0.0
  %4243 = vmatpush1.xpose.msra.mxu0 0.0
  %4244 = vmatprep.subr.mxu0 0.0
  %4245 = vmatpush1.xpose.msra.mxu0 0.0
  %4246 = vmatprep.subr.mxu0 0.0
  %4247 = vmatpush1.xpose.msra.mxu0 0.0
  %4248 = vmatprep.subr.mxu0 0.0
  %4249 = vmatpush1.xpose.msra.mxu0 0.0
  %4250 = vmatprep.subr.mxu0 0.0
  %4251 = vmatpush1.xpose.msra.mxu0 0.0
  %4252 = vmatprep.subr.mxu0 0.0
  %4253 = vmatpush1.xpose.msra.mxu0 0.0
  %4254 = vmatprep.subr.mxu0 0.0
  %4255 = vmatpush1.xpose.msra.mxu0 0.0
  %4256 = vmatprep.subr.mxu0 0.0
  %4257 = vmatpush1.xpose.msra.mxu0 0.0
  %4258 = vmatprep.subr.mxu0 0.0
  %4259 = vmatpush1.xpose.msra.mxu0 0.0
  %4260 = vmatprep.subr.mxu0 0.0
  %4261 = vmatpush1.xpose.msra.mxu0 0.0
  %4262 = vmatprep.subr.mxu0 0.0
  %4263 = vmatpush1.xpose.msra.mxu0 0.0
  %4264 = vmatprep.subr.mxu0 0.0
  %4265 = vmatpush1.xpose.msra.mxu0 0.0
  %4266 = vmatprep.subr.mxu0 0.0
  %4267 = vmatpush1.xpose.msra.mxu0 0.0
  %4268 = vmatprep.subr.mxu0 0.0
  %4269 = vmatpush1.xpose.msra.mxu0 0.0
  %4270 = vmatprep.subr.mxu0 0.0
  %4271 = vmatpush1.xpose.msra.mxu0 0.0
  %4272 = vmatprep.subr.mxu0 0.0
  %4273 = vmatpush1.xpose.msra.mxu0 0.0
  %4274 = vmatprep.subr.mxu0 0.0
  %4275 = vmatpush1.xpose.msra.mxu0 0.0
  %4276 = vmatprep.subr.mxu0 0.0
  %4277 = vmatpush1.xpose.msra.mxu0 0.0
  %4278 = vmatprep.mubr.f32.mxu0 0.0
  %4279 = vmatmul.mubr.f32.gmra.mrb[0].mxu0 %v4200
  %v4280 = vpop.f32.mrb[0].mxu0
  %v4281 = vadd.f32 0.0, %v4280
  %v4282 = vpop.f32.mrb[0].mxu0
  %4283 = vdwg.mxu0
  %v4285 = vsel %vm77, %v3944, 0
  %v4288 = vsel %vm77, %v280, 0
  %v4291 = vsel %vm77, %v281, 0
  %v4294 = vsel %vm77, %v282, 0
  %v4297 = vsel %vm77, %v283, 0
  %4299 = vmatprep.subr.mxu0 0.0
  %4300 = vmatpush1.xpose.msra.mxu0 %v4288
  %4301 = vmatprep.subr.mxu0 0.0
  %4302 = vmatpush1.xpose.msra.mxu0 %v4291
  %4303 = vmatprep.subr.mxu0 0.0
  %4304 = vmatpush1.xpose.msra.mxu0 %v4294
  %4305 = vmatprep.subr.mxu0 0.0
  %4306 = vmatpush1.xpose.msra.mxu0 %v4297
  %4307 = vmatprep.subr.mxu0 0.0
  %4308 = vmatpush1.xpose.msra.mxu0 0.0
  %4309 = vmatprep.subr.mxu0 0.0
  %4310 = vmatpush1.xpose.msra.mxu0 0.0
  %4311 = vmatprep.subr.mxu0 0.0
  %4312 = vmatpush1.xpose.msra.mxu0 0.0
  %4313 = vmatprep.subr.mxu0 0.0
  %4314 = vmatpush1.xpose.msra.mxu0 0.0
  %4315 = vmatprep.subr.mxu0 0.0
  %4316 = vmatpush1.xpose.msra.mxu0 0.0
  %4317 = vmatprep.subr.mxu0 0.0
  %4318 = vmatpush1.xpose.msra.mxu0 0.0
  %4319 = vmatprep.subr.mxu0 0.0
  %4320 = vmatpush1.xpose.msra.mxu0 0.0
  %4321 = vmatprep.subr.mxu0 0.0
  %4322 = vmatpush1.xpose.msra.mxu0 0.0
  %4323 = vmatprep.subr.mxu0 0.0
  %4324 = vmatpush1.xpose.msra.mxu0 0.0
  %4325 = vmatprep.subr.mxu0 0.0
  %4326 = vmatpush1.xpose.msra.mxu0 0.0
  %4327 = vmatprep.subr.mxu0 0.0
  %4328 = vmatpush1.xpose.msra.mxu0 0.0
  %4329 = vmatprep.subr.mxu0 0.0
  %4330 = vmatpush1.xpose.msra.mxu0 0.0
  %4331 = vmatprep.subr.mxu0 0.0
  %4332 = vmatpush1.xpose.msra.mxu0 0.0
  %4333 = vmatprep.subr.mxu0 0.0
  %4334 = vmatpush1.xpose.msra.mxu0 0.0
  %4335 = vmatprep.subr.mxu0 0.0
  %4336 = vmatpush1.xpose.msra.mxu0 0.0
  %4337 = vmatprep.subr.mxu0 0.0
  %4338 = vmatpush1.xpose.msra.mxu0 0.0
  %4339 = vmatprep.subr.mxu0 0.0
  %4340 = vmatpush1.xpose.msra.mxu0 0.0
  %4341 = vmatprep.subr.mxu0 0.0
  %4342 = vmatpush1.xpose.msra.mxu0 0.0
  %4343 = vmatprep.subr.mxu0 0.0
  %4344 = vmatpush1.xpose.msra.mxu0 0.0
  %4345 = vmatprep.subr.mxu0 0.0
  %4346 = vmatpush1.xpose.msra.mxu0 0.0
  %4347 = vmatprep.subr.mxu0 0.0
  %4348 = vmatpush1.xpose.msra.mxu0 0.0
  %4349 = vmatprep.subr.mxu0 0.0
  %4350 = vmatpush1.xpose.msra.mxu0 0.0
  %4351 = vmatprep.subr.mxu0 0.0
  %4352 = vmatpush1.xpose.msra.mxu0 0.0
  %4353 = vmatprep.subr.mxu0 0.0
  %4354 = vmatpush1.xpose.msra.mxu0 0.0
  %4355 = vmatprep.subr.mxu0 0.0
  %4356 = vmatpush1.xpose.msra.mxu0 0.0
  %4357 = vmatprep.subr.mxu0 0.0
  %4358 = vmatpush1.xpose.msra.mxu0 0.0
  %4359 = vmatprep.subr.mxu0 0.0
  %4360 = vmatpush1.xpose.msra.mxu0 0.0
  %4361 = vmatprep.subr.mxu0 0.0
  %4362 = vmatpush1.xpose.msra.mxu0 0.0
  %4363 = vmatprep.mubr.f32.mxu0 0.0
  %4364 = vmatmul.mubr.f32.gmra.mrb[0].mxu0 %v4285
  %v4365 = vpop.f32.mrb[0].mxu0
  %v4366 = vadd.f32 0.0, %v4365
  %v4367 = vpop.f32.mrb[0].mxu0
  %4368 = vdwg.mxu0
  %v4370 = vsel %vm77, %v3945, 0
  %v4373 = vsel %vm77, %v284, 0
  %v4376 = vsel %vm77, %v285, 0
  %v4379 = vsel %vm77, %v286, 0
  %v4382 = vsel %vm77, %v287, 0
  %4384 = vmatprep.subr.mxu0 0.0
  %4385 = vmatpush1.xpose.msra.mxu0 %v4373
  %4386 = vmatprep.subr.mxu0 0.0
  %4387 = vmatpush1.xpose.msra.mxu0 %v4376
  %4388 = vmatprep.subr.mxu0 0.0
  %4389 = vmatpush1.xpose.msra.mxu0 %v4379
  %4390 = vmatprep.subr.mxu0 0.0
  %4391 = vmatpush1.xpose.msra.mxu0 %v4382
  %4392 = vmatprep.subr.mxu0 0.0
  %4393 = vmatpush1.xpose.msra.mxu0 0.0
  %4394 = vmatprep.subr.mxu0 0.0
  %4395 = vmatpush1.xpose.msra.mxu0 0.0
  %4396 = vmatprep.subr.mxu0 0.0
  %4397 = vmatpush1.xpose.msra.mxu0 0.0
  %4398 = vmatprep.subr.mxu0 0.0
  %4399 = vmatpush1.xpose.msra.mxu0 0.0
  %4400 = vmatprep.subr.mxu0 0.0
  %4401 = vmatpush1.xpose.msra.mxu0 0.0
  %4402 = vmatprep.subr.mxu0 0.0
  %4403 = vmatpush1.xpose.msra.mxu0 0.0
  %4404 = vmatprep.subr.mxu0 0.0
  %4405 = vmatpush1.xpose.msra.mxu0 0.0
  %4406 = vmatprep.subr.mxu0 0.0
  %4407 = vmatpush1.xpose.msra.mxu0 0.0
  %4408 = vmatprep.subr.mxu0 0.0
  %4409 = vmatpush1.xpose.msra.mxu0 0.0
  %4410 = vmatprep.subr.mxu0 0.0
  %4411 = vmatpush1.xpose.msra.mxu0 0.0
  %4412 = vmatprep.subr.mxu0 0.0
  %4413 = vmatpush1.xpose.msra.mxu0 0.0
  %4414 = vmatprep.subr.mxu0 0.0
  %4415 = vmatpush1.xpose.msra.mxu0 0.0
  %4416 = vmatprep.subr.mxu0 0.0
  %4417 = vmatpush1.xpose.msra.mxu0 0.0
  %4418 = vmatprep.subr.mxu0 0.0
  %4419 = vmatpush1.xpose.msra.mxu0 0.0
  %4420 = vmatprep.subr.mxu0 0.0
  %4421 = vmatpush1.xpose.msra.mxu0 0.0
  %4422 = vmatprep.subr.mxu0 0.0
  %4423 = vmatpush1.xpose.msra.mxu0 0.0
  %4424 = vmatprep.subr.mxu0 0.0
  %4425 = vmatpush1.xpose.msra.mxu0 0.0
  %4426 = vmatprep.subr.mxu0 0.0
  %4427 = vmatpush1.xpose.msra.mxu0 0.0
  %4428 = vmatprep.subr.mxu0 0.0
  %4429 = vmatpush1.xpose.msra.mxu0 0.0
  %4430 = vmatprep.subr.mxu0 0.0
  %4431 = vmatpush1.xpose.msra.mxu0 0.0
  %4432 = vmatprep.subr.mxu0 0.0
  %4433 = vmatpush1.xpose.msra.mxu0 0.0
  %4434 = vmatprep.subr.mxu0 0.0
  %4435 = vmatpush1.xpose.msra.mxu0 0.0
  %4436 = vmatprep.subr.mxu0 0.0
  %4437 = vmatpush1.xpose.msra.mxu0 0.0
  %4438 = vmatprep.subr.mxu0 0.0
  %4439 = vmatpush1.xpose.msra.mxu0 0.0
  %4440 = vmatprep.subr.mxu0 0.0
  %4441 = vmatpush1.xpose.msra.mxu0 0.0
  %4442 = vmatprep.subr.mxu0 0.0
  %4443 = vmatpush1.xpose.msra.mxu0 0.0
  %4444 = vmatprep.subr.mxu0 0.0
  %4445 = vmatpush1.xpose.msra.mxu0 0.0
  %4446 = vmatprep.subr.mxu0 0.0
  %4447 = vmatpush1.xpose.msra.mxu0 0.0
  %4448 = vmatprep.mubr.f32.mxu0 0.0
  %4449 = vmatmul.mubr.f32.gmra.mrb[0].mxu0 %v4370
  %v4450 = vpop.f32.mrb[0].mxu0
  %v4451 = vadd.f32 0.0, %v4450
  %v4452 = vpop.f32.mrb[0].mxu0
  %4453 = vdwg.mxu0
  %v4455 = vsel %vm77, %v3946, 0
  %v4458 = vsel %vm77, %v288, 0
  %v4461 = vsel %vm77, %v289, 0
  %v4464 = vsel %vm77, %v290, 0
  %v4467 = vsel %vm77, %v291, 0
  %4469 = vmatprep.subr.mxu0 0.0
  %4470 = vmatpush1.xpose.msra.mxu0 %v4458
  %4471 = vmatprep.subr.mxu0 0.0
  %4472 = vmatpush1.xpose.msra.mxu0 %v4461
  %4473 = vmatprep.subr.mxu0 0.0
  %4474 = vmatpush1.xpose.msra.mxu0 %v4464
  %4475 = vmatprep.subr.mxu0 0.0
  %4476 = vmatpush1.xpose.msra.mxu0 %v4467
  %4477 = vmatprep.subr.mxu0 0.0
  %4478 = vmatpush1.xpose.msra.mxu0 0.0
  %4479 = vmatprep.subr.mxu0 0.0
  %4480 = vmatpush1.xpose.msra.mxu0 0.0
  %4481 = vmatprep.subr.mxu0 0.0
  %4482 = vmatpush1.xpose.msra.mxu0 0.0
  %4483 = vmatprep.subr.mxu0 0.0
  %4484 = vmatpush1.xpose.msra.mxu0 0.0
  %4485 = vmatprep.subr.mxu0 0.0
  %4486 = vmatpush1.xpose.msra.mxu0 0.0
  %4487 = vmatprep.subr.mxu0 0.0
  %4488 = vmatpush1.xpose.msra.mxu0 0.0
  %4489 = vmatprep.subr.mxu0 0.0
  %4490 = vmatpush1.xpose.msra.mxu0 0.0
  %4491 = vmatprep.subr.mxu0 0.0
  %4492 = vmatpush1.xpose.msra.mxu0 0.0
  %4493 = vmatprep.subr.mxu0 0.0
  %4494 = vmatpush1.xpose.msra.mxu0 0.0
  %4495 = vmatprep.subr.mxu0 0.0
  %4496 = vmatpush1.xpose.msra.mxu0 0.0
  %4497 = vmatprep.subr.mxu0 0.0
  %4498 = vmatpush1.xpose.msra.mxu0 0.0
  %4499 = vmatprep.subr.mxu0 0.0
  %4500 = vmatpush1.xpose.msra.mxu0 0.0
  %4501 = vmatprep.subr.mxu0 0.0
  %4502 = vmatpush1.xpose.msra.mxu0 0.0
  %4503 = vmatprep.subr.mxu0 0.0
  %4504 = vmatpush1.xpose.msra.mxu0 0.0
  %4505 = vmatprep.subr.mxu0 0.0
  %4506 = vmatpush1.xpose.msra.mxu0 0.0
  %4507 = vmatprep.subr.mxu0 0.0
  %4508 = vmatpush1.xpose.msra.mxu0 0.0
  %4509 = vmatprep.subr.mxu0 0.0
  %4510 = vmatpush1.xpose.msra.mxu0 0.0
  %4511 = vmatprep.subr.mxu0 0.0
  %4512 = vmatpush1.xpose.msra.mxu0 0.0
  %4513 = vmatprep.subr.mxu0 0.0
  %4514 = vmatpush1.xpose.msra.mxu0 0.0
  %4515 = vmatprep.subr.mxu0 0.0
  %4516 = vmatpush1.xpose.msra.mxu0 0.0
  %4517 = vmatprep.subr.mxu0 0.0
  %4518 = vmatpush1.xpose.msra.mxu0 0.0
  %4519 = vmatprep.subr.mxu0 0.0
  %4520 = vmatpush1.xpose.msra.mxu0 0.0
  %4521 = vmatprep.subr.mxu0 0.0
  %4522 = vmatpush1.xpose.msra.mxu0 0.0
  %4523 = vmatprep.subr.mxu0 0.0
  %4524 = vmatpush1.xpose.msra.mxu0 0.0
  %4525 = vmatprep.subr.mxu0 0.0
  %4526 = vmatpush1.xpose.msra.mxu0 0.0
  %4527 = vmatprep.subr.mxu0 0.0
  %4528 = vmatpush1.xpose.msra.mxu0 0.0
  %4529 = vmatprep.subr.mxu0 0.0
  %4530 = vmatpush1.xpose.msra.mxu0 0.0
  %4531 = vmatprep.subr.mxu0 0.0
  %4532 = vmatpush1.xpose.msra.mxu0 0.0
  %4533 = vmatprep.mubr.f32.mxu0 0.0
  %4534 = vmatmul.mubr.f32.gmra.mrb[0].mxu0 %v4455
  %v4535 = vpop.f32.mrb[0].mxu0
  %v4536 = vadd.f32 0.0, %v4535
  %v4537 = vpop.f32.mrb[0].mxu0
  %4538 = vdwg.mxu0
  %v4540 = vsel %vm77, %v3947, 0
  %v4543 = vsel %vm77, %v292, 0
  %v4546 = vsel %vm77, %v293, 0
  %v4549 = vsel %vm77, %v294, 0
  %v4552 = vsel %vm77, %v295, 0
  %4554 = vmatprep.subr.mxu0 0.0
  %4555 = vmatpush1.xpose.msra.mxu0 %v4543
  %4556 = vmatprep.subr.mxu0 0.0
  %4557 = vmatpush1.xpose.msra.mxu0 %v4546
  %4558 = vmatprep.subr.mxu0 0.0
  %4559 = vmatpush1.xpose.msra.mxu0 %v4549
  %4560 = vmatprep.subr.mxu0 0.0
  %4561 = vmatpush1.xpose.msra.mxu0 %v4552
  %4562 = vmatprep.subr.mxu0 0.0
  %4563 = vmatpush1.xpose.msra.mxu0 0.0
  %4564 = vmatprep.subr.mxu0 0.0
  %4565 = vmatpush1.xpose.msra.mxu0 0.0
  %4566 = vmatprep.subr.mxu0 0.0
  %4567 = vmatpush1.xpose.msra.mxu0 0.0
  %4568 = vmatprep.subr.mxu0 0.0
  %4569 = vmatpush1.xpose.msra.mxu0 0.0
  %4570 = vmatprep.subr.mxu0 0.0
  %4571 = vmatpush1.xpose.msra.mxu0 0.0
  %4572 = vmatprep.subr.mxu0 0.0
  %4573 = vmatpush1.xpose.msra.mxu0 0.0
  %4574 = vmatprep.subr.mxu0 0.0
  %4575 = vmatpush1.xpose.msra.mxu0 0.0
  %4576 = vmatprep.subr.mxu0 0.0
  %4577 = vmatpush1.xpose.msra.mxu0 0.0
  %4578 = vmatprep.subr.mxu0 0.0
  %4579 = vmatpush1.xpose.msra.mxu0 0.0
  %4580 = vmatprep.subr.mxu0 0.0
  %4581 = vmatpush1.xpose.msra.mxu0 0.0
  %4582 = vmatprep.subr.mxu0 0.0
  %4583 = vmatpush1.xpose.msra.mxu0 0.0
  %4584 = vmatprep.subr.mxu0 0.0
  %4585 = vmatpush1.xpose.msra.mxu0 0.0
  %4586 = vmatprep.subr.mxu0 0.0
  %4587 = vmatpush1.xpose.msra.mxu0 0.0
  %4588 = vmatprep.subr.mxu0 0.0
  %4589 = vmatpush1.xpose.msra.mxu0 0.0
  %4590 = vmatprep.subr.mxu0 0.0
  %4591 = vmatpush1.xpose.msra.mxu0 0.0
  %4592 = vmatprep.subr.mxu0 0.0
  %4593 = vmatpush1.xpose.msra.mxu0 0.0
  %4594 = vmatprep.subr.mxu0 0.0
  %4595 = vmatpush1.xpose.msra.mxu0 0.0
  %4596 = vmatprep.subr.mxu0 0.0
  %4597 = vmatpush1.xpose.msra.mxu0 0.0
  %4598 = vmatprep.subr.mxu0 0.0
  %4599 = vmatpush1.xpose.msra.mxu0 0.0
  %4600 = vmatprep.subr.mxu0 0.0
  %4601 = vmatpush1.xpose.msra.mxu0 0.0
  %4602 = vmatprep.subr.mxu0 0.0
  %4603 = vmatpush1.xpose.msra.mxu0 0.0
  %4604 = vmatprep.subr.mxu0 0.0
  %4605 = vmatpush1.xpose.msra.mxu0 0.0
  %4606 = vmatprep.subr.mxu0 0.0
  %4607 = vmatpush1.xpose.msra.mxu0 0.0
  %4608 = vmatprep.subr.mxu0 0.0
  %4609 = vmatpush1.xpose.msra.mxu0 0.0
  %4610 = vmatprep.subr.mxu0 0.0
  %4611 = vmatpush1.xpose.msra.mxu0 0.0
  %4612 = vmatprep.subr.mxu0 0.0
  %4613 = vmatpush1.xpose.msra.mxu0 0.0
  %4614 = vmatprep.subr.mxu0 0.0
  %4615 = vmatpush1.xpose.msra.mxu0 0.0
  %4616 = vmatprep.subr.mxu0 0.0
  %4617 = vmatpush1.xpose.msra.mxu0 0.0
  %4618 = vmatprep.mubr.f32.mxu0 0.0
  %4619 = vmatmul.mubr.f32.gmra.mrb[0].mxu0 %v4540
  %v4620 = vpop.f32.mrb[0].mxu0
  %v4621 = vadd.f32 0.0, %v4620
  %v4622 = vpop.f32.mrb[0].mxu0
  %4623 = vdwg.mxu0
  %v4625 = vsel %vm77, %v3948, 0
  %v4628 = vsel %vm77, %v296, 0
  %v4631 = vsel %vm77, %v297, 0
  %v4634 = vsel %vm77, %v298, 0
  %v4637 = vsel %vm77, %v299, 0
  %4639 = vmatprep.subr.mxu0 0.0
  %4640 = vmatpush1.xpose.msra.mxu0 %v4628
  %4641 = vmatprep.subr.mxu0 0.0
  %4642 = vmatpush1.xpose.msra.mxu0 %v4631
  %4643 = vmatprep.subr.mxu0 0.0
  %4644 = vmatpush1.xpose.msra.mxu0 %v4634
  %4645 = vmatprep.subr.mxu0 0.0
  %4646 = vmatpush1.xpose.msra.mxu0 %v4637
  %4647 = vmatprep.subr.mxu0 0.0
  %4648 = vmatpush1.xpose.msra.mxu0 0.0
  %4649 = vmatprep.subr.mxu0 0.0
  %4650 = vmatpush1.xpose.msra.mxu0 0.0
  %4651 = vmatprep.subr.mxu0 0.0
  %4652 = vmatpush1.xpose.msra.mxu0 0.0
  %4653 = vmatprep.subr.mxu0 0.0
  %4654 = vmatpush1.xpose.msra.mxu0 0.0
  %4655 = vmatprep.subr.mxu0 0.0
  %4656 = vmatpush1.xpose.msra.mxu0 0.0
  %4657 = vmatprep.subr.mxu0 0.0
  %4658 = vmatpush1.xpose.msra.mxu0 0.0
  %4659 = vmatprep.subr.mxu0 0.0
  %4660 = vmatpush1.xpose.msra.mxu0 0.0
  %4661 = vmatprep.subr.mxu0 0.0
  %4662 = vmatpush1.xpose.msra.mxu0 0.0
  %4663 = vmatprep.subr.mxu0 0.0
  %4664 = vmatpush1.xpose.msra.mxu0 0.0
  %4665 = vmatprep.subr.mxu0 0.0
  %4666 = vmatpush1.xpose.msra.mxu0 0.0
  %4667 = vmatprep.subr.mxu0 0.0
  %4668 = vmatpush1.xpose.msra.mxu0 0.0
  %4669 = vmatprep.subr.mxu0 0.0
  %4670 = vmatpush1.xpose.msra.mxu0 0.0
  %4671 = vmatprep.subr.mxu0 0.0
  %4672 = vmatpush1.xpose.msra.mxu0 0.0
  %4673 = vmatprep.subr.mxu0 0.0
  %4674 = vmatpush1.xpose.msra.mxu0 0.0
  %4675 = vmatprep.subr.mxu0 0.0
  %4676 = vmatpush1.xpose.msra.mxu0 0.0
  %4677 = vmatprep.subr.mxu0 0.0
  %4678 = vmatpush1.xpose.msra.mxu0 0.0
  %4679 = vmatprep.subr.mxu0 0.0
  %4680 = vmatpush1.xpose.msra.mxu0 0.0
  %4681 = vmatprep.subr.mxu0 0.0
  %4682 = vmatpush1.xpose.msra.mxu0 0.0
  %4683 = vmatprep.subr.mxu0 0.0
  %4684 = vmatpush1.xpose.msra.mxu0 0.0
  %4685 = vmatprep.subr.mxu0 0.0
  %4686 = vmatpush1.xpose.msra.mxu0 0.0
  %4687 = vmatprep.subr.mxu0 0.0
  %4688 = vmatpush1.xpose.msra.mxu0 0.0
  %4689 = vmatprep.subr.mxu0 0.0
  %4690 = vmatpush1.xpose.msra.mxu0 0.0
  %4691 = vmatprep.subr.mxu0 0.0
  %4692 = vmatpush1.xpose.msra.mxu0 0.0
  %4693 = vmatprep.subr.mxu0 0.0
  %4694 = vmatpush1.xpose.msra.mxu0 0.0
  %4695 = vmatprep.subr.mxu0 0.0
  %4696 = vmatpush1.xpose.msra.mxu0 0.0
  %4697 = vmatprep.subr.mxu0 0.0
  %4698 = vmatpush1.xpose.msra.mxu0 0.0
  %4699 = vmatprep.subr.mxu0 0.0
  %4700 = vmatpush1.xpose.msra.mxu0 0.0
  %4701 = vmatprep.subr.mxu0 0.0
  %4702 = vmatpush1.xpose.msra.mxu0 0.0
  %4703 = vmatprep.mubr.f32.mxu0 0.0
  %4704 = vmatmul.mubr.f32.gmra.mrb[0].mxu0 %v4625
  %v4705 = vpop.f32.mrb[0].mxu0
  %v4706 = vadd.f32 0.0, %v4705
  %v4707 = vpop.f32.mrb[0].mxu0
  %4708 = vdwg.mxu0
  %v4709 = vadd.f32 %v4021, %v4111
  %v4710 = vadd.f32 %v4022, %v4196
  %v4711 = vadd.f32 %v4023, %v4281
  %v4712 = vadd.f32 %v4024, %v4366
  %v4713 = vadd.f32 %v4025, %v4451
  %v4714 = vadd.f32 %v4026, %v4536
  %v4715 = vadd.f32 %v4027, %v4621
  %v4716 = vadd.f32 %v4028, %v4706
  %v4717 = vld [vmem:[%s7] sm:$0xff]
  %v4718 = vld [vmem:[%s7 + $0x8] sm:$0xff]
  %v4719 = vld [vmem:[%s7 + $0x10] sm:$0xff]
  %v4720 = vld [vmem:[%s7 + $0x18] sm:$0xff]
  %v4729 = vcombine.low %v4709, %v4710
  %v4730 = vcombine.low %v4711, %v4712
  %v4731 = vcombine.low %v4713, %v4714
  %v4732 = vcombine.low %v4715, %v4716
  %v4733 = vsel %vm613, %v4729, 0
  %v4735 = vsel %vm613, %v4730, 0
  %v4737 = vsel %vm613, %v4731, 0
  %v4739 = vsel %vm613, %v4732, 0
  %4741 = vmatprep.subr.mxu0 0.0
  %4742 = vmatpush1.msra.mxu0 %v4717
  %4743 = vmatprep.subr.mxu0 0.0
  %4744 = vmatpush1.msra.mxu0 %v4718
  %4745 = vmatprep.subr.mxu0 0.0
  %4746 = vmatpush1.msra.mxu0 %v4719
  %4747 = vmatprep.subr.mxu0 0.0
  %4748 = vmatpush1.msra.mxu0 %v4720
  %4749 = vmatprep.subr.mxu0 0.0
  %4750 = vmatpush1.msra.mxu0 0.0
  %4751 = vmatprep.subr.mxu0 0.0
  %4752 = vmatpush1.msra.mxu0 0.0
  %4753 = vmatprep.subr.mxu0 0.0
  %4754 = vmatpush1.msra.mxu0 0.0
  %4755 = vmatprep.subr.mxu0 0.0
  %4756 = vmatpush1.msra.mxu0 0.0
  %4757 = vmatprep.subr.mxu0 0.0
  %4758 = vmatpush1.msra.mxu0 0.0
  %4759 = vmatprep.subr.mxu0 0.0
  %4760 = vmatpush1.msra.mxu0 0.0
  %4761 = vmatprep.subr.mxu0 0.0
  %4762 = vmatpush1.msra.mxu0 0.0
  %4763 = vmatprep.subr.mxu0 0.0
  %4764 = vmatpush1.msra.mxu0 0.0
  %4765 = vmatprep.subr.mxu0 0.0
  %4766 = vmatpush1.msra.mxu0 0.0
  %4767 = vmatprep.subr.mxu0 0.0
  %4768 = vmatpush1.msra.mxu0 0.0
  %4769 = vmatprep.subr.mxu0 0.0
  %4770 = vmatpush1.msra.mxu0 0.0
  %4771 = vmatprep.subr.mxu0 0.0
  %4772 = vmatpush1.msra.mxu0 0.0
  %4773 = vmatprep.subr.mxu0 0.0
  %4774 = vmatpush1.msra.mxu0 0.0
  %4775 = vmatprep.subr.mxu0 0.0
  %4776 = vmatpush1.msra.mxu0 0.0
  %4777 = vmatprep.subr.mxu0 0.0
  %4778 = vmatpush1.msra.mxu0 0.0
  %4779 = vmatprep.subr.mxu0 0.0
  %4780 = vmatpush1.msra.mxu0 0.0
  %4781 = vmatprep.subr.mxu0 0.0
  %4782 = vmatpush1.msra.mxu0 0.0
  %4783 = vmatprep.subr.mxu0 0.0
  %4784 = vmatpush1.msra.mxu0 0.0
  %4785 = vmatprep.subr.mxu0 0.0
  %4786 = vmatpush1.msra.mxu0 0.0
  %4787 = vmatprep.subr.mxu0 0.0
  %4788 = vmatpush1.msra.mxu0 0.0
  %4789 = vmatprep.subr.mxu0 0.0
  %4790 = vmatpush1.msra.mxu0 0.0
  %4791 = vmatprep.subr.mxu0 0.0
  %4792 = vmatpush1.msra.mxu0 0.0
  %4793 = vmatprep.subr.mxu0 0.0
  %4794 = vmatpush1.msra.mxu0 0.0
  %4795 = vmatprep.subr.mxu0 0.0
  %4796 = vmatpush1.msra.mxu0 0.0
  %4797 = vmatprep.subr.mxu0 0.0
  %4798 = vmatpush1.msra.mxu0 0.0
  %4799 = vmatprep.subr.mxu0 0.0
  %4800 = vmatpush1.msra.mxu0 0.0
  %4801 = vmatprep.subr.mxu0 0.0
  %4802 = vmatpush1.msra.mxu0 0.0
  %4803 = vmatprep.subr.mxu0 0.0
  %4804 = vmatpush1.msra.mxu0 0.0
  %4805 = vmatprep.mubr.f32.mxu0 0.0
  %4806 = vmatmul.mubr.f32.gmra.mrb[0].mxu0 %v4733
  %v4807 = vpop.f32.mrb[0].mxu0
  %v4808 = vadd.f32 0.0, %v4807
  %v4809 = vpop.f32.mrb[0].mxu0
  %4810 = vmatprep.mubr.f32.mxu0 0.0
  %4811 = vmatmul.mubr.f32.gmra.mrb[0].mxu0 %v4735
  %v4812 = vpop.f32.mrb[0].mxu0
  %v4813 = vadd.f32 0.0, %v4812
  %v4814 = vpop.f32.mrb[0].mxu0
  %4815 = vmatprep.mubr.f32.mxu0 0.0
  %4816 = vmatmul.mubr.f32.gmra.mrb[0].mxu0 %v4737
  %v4817 = vpop.f32.mrb[0].mxu0
  %v4818 = vadd.f32 0.0, %v4817
  %v4819 = vpop.f32.mrb[0].mxu0
  %4820 = vmatprep.mubr.f32.mxu0 0.0
  %4821 = vmatmul.mubr.f32.gmra.mrb[0].mxu0 %v4739
  %v4822 = vpop.f32.mrb[0].mxu0
  %v4823 = vadd.f32 0.0, %v4822
  %v4824 = vpop.f32.mrb[0].mxu0
  %4825 = vdwg.mxu0
  %v4830 = vcombine.high %v4808, %v4808
  %v4831 = vcombine.high %v4813, %v4813
  %v4832 = vcombine.high %v4818, %v4818
  %v4833 = vcombine.high %v4823, %v4823
  %v4838 = vmul.f32 %v4808, %v76
  %v4839 = vmul.f32 %v4830, %v76
  %v4840 = vmul.f32 %v4813, %v76
  %v4841 = vmul.f32 %v4831, %v76
  %v4842 = vmul.f32 %v4818, %v76
  %v4843 = vmul.f32 %v4832, %v76
  %v4844 = vmul.f32 %v4823, %v76
  %v4845 = vmul.f32 %v4833, %v76
  %v4846 = vsel %vm3002, %v4838, 0.0
  %v4847 = vrot.slane %v4846, 4
  %v4848 = vadd.f32 %v4846, %v4847
  %v4849 = vrot.slane %v4848, 2
  %v4850 = vadd.f32 %v4848, %v4849
  %v4851 = vrot.slane %v4850, 1
  %v4852 = vadd.f32 %v4850, %v4851
  %v4853 = vsel %vm3002, %v4839, 0.0
  %v4854 = vrot.slane %v4853, 4
  %v4855 = vadd.f32 %v4853, %v4854
  %v4856 = vrot.slane %v4855, 2
  %v4857 = vadd.f32 %v4855, %v4856
  %v4858 = vrot.slane %v4857, 1
  %v4859 = vadd.f32 %v4857, %v4858
  %v4860 = vsel %vm3002, %v4840, 0.0
  %v4861 = vrot.slane %v4860, 4
  %v4862 = vadd.f32 %v4860, %v4861
  %v4863 = vrot.slane %v4862, 2
  %v4864 = vadd.f32 %v4862, %v4863
  %v4865 = vrot.slane %v4864, 1
  %v4866 = vadd.f32 %v4864, %v4865
  %v4867 = vsel %vm3002, %v4841, 0.0
  %v4868 = vrot.slane %v4867, 4
  %v4869 = vadd.f32 %v4867, %v4868
  %v4870 = vrot.slane %v4869, 2
  %v4871 = vadd.f32 %v4869, %v4870
  %v4872 = vrot.slane %v4871, 1
  %v4873 = vadd.f32 %v4871, %v4872
  %v4874 = vsel %vm3002, %v4842, 0.0
  %v4875 = vrot.slane %v4874, 4
  %v4876 = vadd.f32 %v4874, %v4875
  %v4877 = vrot.slane %v4876, 2
  %v4878 = vadd.f32 %v4876, %v4877
  %v4879 = vrot.slane %v4878, 1
  %v4880 = vadd.f32 %v4878, %v4879
  %v4881 = vsel %vm3002, %v4843, 0.0
  %v4882 = vrot.slane %v4881, 4
  %v4883 = vadd.f32 %v4881, %v4882
  %v4884 = vrot.slane %v4883, 2
  %v4885 = vadd.f32 %v4883, %v4884
  %v4886 = vrot.slane %v4885, 1
  %v4887 = vadd.f32 %v4885, %v4886
  %v4888 = vsel %vm3002, %v4844, 0.0
  %v4889 = vrot.slane %v4888, 4
  %v4890 = vadd.f32 %v4888, %v4889
  %v4891 = vrot.slane %v4890, 2
  %v4892 = vadd.f32 %v4890, %v4891
  %v4893 = vrot.slane %v4892, 1
  %v4894 = vadd.f32 %v4892, %v4893
  %v4895 = vsel %vm3002, %v4845, 0.0
  %v4896 = vrot.slane %v4895, 4
  %v4897 = vadd.f32 %v4895, %v4896
  %v4898 = vrot.slane %v4897, 2
  %v4899 = vadd.f32 %v4897, %v4898
  %v4900 = vrot.slane %v4899, 1
  %v4901 = vadd.f32 %v4899, %v4900
  %v4902 = vld [vmem:[%s8] sm:$0x1]
  %4911 = vset.pattern.permute.xlu0 0
  %4912 = vperm.xlu0 %4911, %v3949
  %v4913 = vpop.permute.xlu0 %4912
  %4914 = vset.pattern.permute.xlu0 0
  %4915 = vperm.xlu0 %4914, %v3950
  %v4916 = vpop.permute.xlu0 %4915
  %4917 = vset.pattern.permute.xlu0 0
  %4918 = vperm.xlu0 %4917, %v3951
  %v4919 = vpop.permute.xlu0 %4918
  %4920 = vset.pattern.permute.xlu0 0
  %4921 = vperm.xlu0 %4920, %v3952
  %v4922 = vpop.permute.xlu0 %4921
  %4923 = vset.pattern.permute.xlu0 0
  %4924 = vperm.xlu0 %4923, %v3953
  %v4925 = vpop.permute.xlu0 %4924
  %4926 = vset.pattern.permute.xlu0 0
  %4927 = vperm.xlu0 %4926, %v3954
  %v4928 = vpop.permute.xlu0 %4927
  %4929 = vset.pattern.permute.xlu0 0
  %4930 = vperm.xlu0 %4929, %v3955
  %v4931 = vpop.permute.xlu0 %4930
  %4932 = vset.pattern.permute.xlu0 0
  %4933 = vperm.xlu0 %4932, %v3956
  %v4934 = vpop.permute.xlu0 %4933
  %v4935 = vlaneseq
  %v4936 = vshrl.u32 %v4935, 7
  %v4937 = vsub.s32 %v440, %v4936
  %v4938 = vrot.slane %v4913, %v4937
  %v4939 = vlaneseq
  %v4940 = vshrl.u32 %v4939, 7
  %v4941 = vsub.s32 %v440, %v4940
  %v4942 = vrot.slane %v4916, %v4941
  %v4943 = vlaneseq
  %v4944 = vshrl.u32 %v4943, 7
  %v4945 = vsub.s32 %v440, %v4944
  %v4946 = vrot.slane %v4919, %v4945
  %v4947 = vlaneseq
  %v4948 = vshrl.u32 %v4947, 7
  %v4949 = vsub.s32 %v440, %v4948
  %v4950 = vrot.slane %v4922, %v4949
  %v4951 = vlaneseq
  %v4952 = vshrl.u32 %v4951, 7
  %v4953 = vsub.s32 %v440, %v4952
  %v4954 = vrot.slane %v4925, %v4953
  %v4955 = vlaneseq
  %v4956 = vshrl.u32 %v4955, 7
  %v4957 = vsub.s32 %v440, %v4956
  %v4958 = vrot.slane %v4928, %v4957
  %v4959 = vlaneseq
  %v4960 = vshrl.u32 %v4959, 7
  %v4961 = vsub.s32 %v440, %v4960
  %v4962 = vrot.slane %v4931, %v4961
  %v4963 = vlaneseq
  %v4964 = vshrl.u32 %v4963, 7
  %v4965 = vsub.s32 %v440, %v4964
  %v4966 = vrot.slane %v4934, %v4965
  %v4967 = vsel %vm599, %v4942, %v4938
  %v4968 = vsel %vm601, %v4946, %v4967
  %v4969 = vsel %vm603, %v4950, %v4968
  %v4970 = vsel %vm605, %v4954, %v4969
  %v4971 = vsel %vm607, %v4958, %v4970
  %v4972 = vsel %vm609, %v4962, %v4971
  %v4973 = vsel %vm611, %v4966, %v4972
  %vm4974 = vcmask 31744
  %v4975 = vsel %vm4974, %v4973, 0
  %vm4977 = vcmask 1043456
  %v4979 = vsel %vm4977, %v76, 0
  %4981 = vmatprep.subr.mxu0 0.0
  %4982 = vmatpush1.msra.mxu0 %v4979
  %4983 = vmatprep.subr.mxu0 0.0
  %4984 = vmatpush1.msra.mxu0 0.0
  %4985 = vmatprep.subr.mxu0 0.0
  %4986 = vmatpush1.msra.mxu0 0.0
  %4987 = vmatprep.subr.mxu0 0.0
  %4988 = vmatpush1.msra.mxu0 0.0
  %4989 = vmatprep.subr.mxu0 0.0
  %4990 = vmatpush1.msra.mxu0 0.0
  %4991 = vmatprep.subr.mxu0 0.0
  %4992 = vmatpush1.msra.mxu0 0.0
  %4993 = vmatprep.subr.mxu0 0.0
  %4994 = vmatpush1.msra.mxu0 0.0
  %4995 = vmatprep.subr.mxu0 0.0
  %4996 = vmatpush1.msra.mxu0 0.0
  %4997 = vmatprep.subr.mxu0 0.0
  %4998 = vmatpush1.msra.mxu0 0.0
  %4999 = vmatprep.subr.mxu0 0.0
  %5000 = vmatpush1.msra.mxu0 0.0
  %5001 = vmatprep.subr.mxu0 0.0
  %5002 = vmatpush1.msra.mxu0 0.0
  %5003 = vmatprep.subr.mxu0 0.0
  %5004 = vmatpush1.msra.mxu0 0.0
  %5005 = vmatprep.subr.mxu0 0.0
  %5006 = vmatpush1.msra.mxu0 0.0
  %5007 = vmatprep.subr.mxu0 0.0
  %5008 = vmatpush1.msra.mxu0 0.0
  %5009 = vmatprep.subr.mxu0 0.0
  %5010 = vmatpush1.msra.mxu0 0.0
  %5011 = vmatprep.subr.mxu0 0.0
  %5012 = vmatpush1.msra.mxu0 0.0
  %5013 = vmatprep.subr.mxu0 0.0
  %5014 = vmatpush1.msra.mxu0 0.0
  %5015 = vmatprep.subr.mxu0 0.0
  %5016 = vmatpush1.msra.mxu0 0.0
  %5017 = vmatprep.subr.mxu0 0.0
  %5018 = vmatpush1.msra.mxu0 0.0
  %5019 = vmatprep.subr.mxu0 0.0
  %5020 = vmatpush1.msra.mxu0 0.0
  %5021 = vmatprep.subr.mxu0 0.0
  %5022 = vmatpush1.msra.mxu0 0.0
  %5023 = vmatprep.subr.mxu0 0.0
  %5024 = vmatpush1.msra.mxu0 0.0
  %5025 = vmatprep.subr.mxu0 0.0
  %5026 = vmatpush1.msra.mxu0 0.0
  %5027 = vmatprep.subr.mxu0 0.0
  %5028 = vmatpush1.msra.mxu0 0.0
  %5029 = vmatprep.subr.mxu0 0.0
  %5030 = vmatpush1.msra.mxu0 0.0
  %5031 = vmatprep.subr.mxu0 0.0
  %5032 = vmatpush1.msra.mxu0 0.0
  %5033 = vmatprep.subr.mxu0 0.0
  %5034 = vmatpush1.msra.mxu0 0.0
  %5035 = vmatprep.subr.mxu0 0.0
  %5036 = vmatpush1.msra.mxu0 0.0
  %5037 = vmatprep.subr.mxu0 0.0
  %5038 = vmatpush1.msra.mxu0 0.0
  %5039 = vmatprep.subr.mxu0 0.0
  %5040 = vmatpush1.msra.mxu0 0.0
  %5041 = vmatprep.subr.mxu0 0.0
  %5042 = vmatpush1.msra.mxu0 0.0
  %5043 = vmatprep.subr.mxu0 0.0
  %5044 = vmatpush1.msra.mxu0 0.0
  %5045 = vmatprep.mubr.f32.mxu0 0.0
  %5046 = vmatmul.mubr.f32.gmra.mrb[0].mxu0 %v4975
  %v5047 = vpop.f32.mrb[0].mxu0
  %v5048 = vadd.f32 0.0, %v5047
  %v5049 = vpop.f32.mrb[0].mxu0
  %5050 = vdwg.mxu0
  %v5052 = vlaneseq
  %v5053 = vshrl.u32 %v5052, 7
  %v5054 = vsub.s32 0, %v5053
  %v5055 = vrot.slane %v4902, %v5054
  %v5057 = vmul.f32 %v5055, %v5048
  %v5059 = vrot.slane %v5057, 1
  %v5060 = vrot.slane %v5057, 2
  %v5061 = vrot.slane %v5057, 3
  %v5062 = vrot.slane %v5057, 4
  %v5063 = vrot.slane %v5057, 5
  %v5064 = vrot.slane %v5057, 6
  %v5065 = vrot.slane %v5057, 7
  %v5074 = vadd.f32 %v4852, %v5057
  %v5075 = vadd.f32 %v4859, %v5059
  %v5076 = vadd.f32 %v4866, %v5060
  %v5077 = vadd.f32 %v4873, %v5061
  %v5078 = vadd.f32 %v4880, %v5062
  %v5079 = vadd.f32 %v4887, %v5063
  %v5080 = vadd.f32 %v4894, %v5064
  %v5081 = vadd.f32 %v4901, %v5065
  %v5082 = vld [vmem:[%s9] sm:$0xff]
  %v5083 = vld [vmem:[%s9 + $0x8] sm:$0xff]
  %v5084 = vld [vmem:[%s9 + $0x10] sm:$0xff]
  %v5085 = vld [vmem:[%s9 + $0x18] sm:$0xff]
  %v5086 = vld [vmem:[%s10] sm:$0x1]
  %v5088 = vlaneseq
  %v5089 = vshrl.u32 %v5088, 7
  %v5090 = vsub.s32 0, %v5089
  %v5091 = vrot.slane %v5086, %v5090
  %v5101 = vrot.slane %v5075, 7
  %v5102 = vsel %vm599, %v5101, %v5074
  %v5103 = vrot.slane %v5076, 6
  %v5104 = vsel %vm601, %v5103, %v5102
  %v5105 = vrot.slane %v5077, 5
  %v5106 = vsel %vm603, %v5105, %v5104
  %v5107 = vrot.slane %v5078, 4
  %v5108 = vsel %vm605, %v5107, %v5106
  %v5109 = vrot.slane %v5079, 3
  %v5110 = vsel %vm607, %v5109, %v5108
  %v5111 = vrot.slane %v5080, 2
  %v5112 = vsel %vm609, %v5111, %v5110
  %v5113 = vrot.slane %v5081, 1
  %v5114 = vsel %vm611, %v5113, %v5112
  %v5115 = vsel %vm613, %v5114, 0
  %5117 = vmatprep.subr.mxu0 0.0
  %5118 = vmatpush1.msra.mxu0 %v5082
  %5119 = vmatprep.subr.mxu0 0.0
  %5120 = vmatpush1.msra.mxu0 %v5083
  %5121 = vmatprep.subr.mxu0 0.0
  %5122 = vmatpush1.msra.mxu0 %v5084
  %5123 = vmatprep.subr.mxu0 0.0
  %5124 = vmatpush1.msra.mxu0 %v5085
  %5125 = vmatprep.subr.mxu0 0.0
  %5126 = vmatpush1.msra.mxu0 0.0
  %5127 = vmatprep.subr.mxu0 0.0
  %5128 = vmatpush1.msra.mxu0 0.0
  %5129 = vmatprep.subr.mxu0 0.0
  %5130 = vmatpush1.msra.mxu0 0.0
  %5131 = vmatprep.subr.mxu0 0.0
  %5132 = vmatpush1.msra.mxu0 0.0
  %5133 = vmatprep.subr.mxu0 0.0
  %5134 = vmatpush1.msra.mxu0 0.0
  %5135 = vmatprep.subr.mxu0 0.0
  %5136 = vmatpush1.msra.mxu0 0.0
  %5137 = vmatprep.subr.mxu0 0.0
  %5138 = vmatpush1.msra.mxu0 0.0
  %5139 = vmatprep.subr.mxu0 0.0
  %5140 = vmatpush1.msra.mxu0 0.0
  %5141 = vmatprep.subr.mxu0 0.0
  %5142 = vmatpush1.msra.mxu0 0.0
  %5143 = vmatprep.subr.mxu0 0.0
  %5144 = vmatpush1.msra.mxu0 0.0
  %5145 = vmatprep.subr.mxu0 0.0
  %5146 = vmatpush1.msra.mxu0 0.0
  %5147 = vmatprep.subr.mxu0 0.0
  %5148 = vmatpush1.msra.mxu0 0.0
  %5149 = vmatprep.subr.mxu0 0.0
  %5150 = vmatpush1.msra.mxu0 0.0
  %5151 = vmatprep.subr.mxu0 0.0
  %5152 = vmatpush1.msra.mxu0 0.0
  %5153 = vmatprep.subr.mxu0 0.0
  %5154 = vmatpush1.msra.mxu0 0.0
  %5155 = vmatprep.subr.mxu0 0.0
  %5156 = vmatpush1.msra.mxu0 0.0
  %5157 = vmatprep.subr.mxu0 0.0
  %5158 = vmatpush1.msra.mxu0 0.0
  %5159 = vmatprep.subr.mxu0 0.0
  %5160 = vmatpush1.msra.mxu0 0.0
  %5161 = vmatprep.subr.mxu0 0.0
  %5162 = vmatpush1.msra.mxu0 0.0
  %5163 = vmatprep.subr.mxu0 0.0
  %5164 = vmatpush1.msra.mxu0 0.0
  %5165 = vmatprep.subr.mxu0 0.0
  %5166 = vmatpush1.msra.mxu0 0.0
  %5167 = vmatprep.subr.mxu0 0.0
  %5168 = vmatpush1.msra.mxu0 0.0
  %5169 = vmatprep.subr.mxu0 0.0
  %5170 = vmatpush1.msra.mxu0 0.0
  %5171 = vmatprep.subr.mxu0 0.0
  %5172 = vmatpush1.msra.mxu0 0.0
  %5173 = vmatprep.subr.mxu0 0.0
  %5174 = vmatpush1.msra.mxu0 0.0
  %5175 = vmatprep.subr.mxu0 0.0
  %5176 = vmatpush1.msra.mxu0 0.0
  %5177 = vmatprep.subr.mxu0 0.0
  %5178 = vmatpush1.msra.mxu0 0.0
  %5179 = vmatprep.subr.mxu0 0.0
  %5180 = vmatpush1.msra.mxu0 0.0
  %5181 = vmatprep.mubr.f32.mxu0 0.0
  %5182 = vmatmul.mubr.f32.gmra.mrb[0].mxu0 %v5115
  %v5183 = vpop.f32.mrb[0].mxu0
  %v5184 = vadd.f32 %v5091, %v5183
  %v5185 = vpop.f32.mrb[0].mxu0
  %5186 = vdwg.mxu0
  %5187 = vst [vmem:[%s13] sm:$0xff] %v5184
  // Predicated region
  $region54: #{attention_pool2d.1} parent=0 // pred_check
    _
  $region55: #{attention_pool2d.1} parent=0 // pred_check_branch
    %5189 = sbr.rel (0) target = $region57
  $region56: #{attention_pool2d.1} parent=0 // pred_region
    _
  $region57: #{attention_pool2d.1} parent=0 // pred_fallthru
    _
  // Predicated region
  $region58: #{attention_pool2d.1} parent=0 // pred_check
    _
  $region59: #{attention_pool2d.1} parent=0 // pred_check_branch
    %5191 = sbr.rel (0) target = $region61
  $region60: #{attention_pool2d.1} parent=0 // pred_region
    _
  $region61: #{attention_pool2d.1} parent=0 // pred_fallthru
    _

</llo_original>
